<compile_context>
chip_gen: v7x
topology: tpu7x:2x2x1
jax: 0.10.0
libtpu: 0.0.40
codegen_flags: <defaults>
</compile_context>

<pallas_src>
import numpy as np
import jax
import jax.numpy as jnp
from jax.experimental import pallas as pl
from jax.experimental.pallas import tpu as pltpu

LANE = 128   # lane width / padding quantum for feature dims and node count


# ------------------------------ small helpers ------------------------------ #

def _round_up(x, m):
    return ((x + m - 1) // m) * m


def _pad2d(x, rows, cols, dtype):
    x = jnp.asarray(x)
    return jnp.pad(x, ((0, rows - x.shape[0]), (0, cols - x.shape[1]))).astype(dtype)


def _vmem_spec():
    return pl.BlockSpec(memory_space=pltpu.MemorySpace.VMEM)


# ----------------------------- Pallas kernels ------------------------------ #

def sage_layer_kernel(h_ref, ef_ref, src_ref, dstT_ref, inv_deg_ref,
                      w_msg_ref, b_msg_ref, w_app_ref, b_app_ref,
                      out_ref, acc_ref):
    """One E-GraphSAGE layer; grid axis 0 = edge tiles (reduction)."""
    k = pl.program_id(0)

    @pl.when(k == 0)
    def _init():
        acc_ref[...] = jnp.zeros_like(acc_ref)

    n_pad, dh = h_ref.shape
    te = src_ref.shape[0]

    # Per-tile one-hot gather matrix, built in-register (never touches HBM).
    lane_nodes = jax.lax.broadcasted_iota(jnp.int32, (te, n_pad), 1)
    s_src = jnp.where(src_ref[...] == lane_nodes, 1.0, 0.0).astype(jnp.bfloat16)  # (TE, N)

    # Gather source-node features for this edge tile (MXU, bf16 in / f32 acc).
    h_src = jnp.dot(s_src, h_ref[...],
                    preferred_element_type=jnp.float32).astype(jnp.bfloat16)      # (TE, DH)

    # msg = W_msg([h_src ; e_feat]) + b  -- merged K-padded weight, consumed as
    # two fully-filled K=128 slabs (avoids tiny-K MXU passes of the old split form).
    msg = (jnp.dot(h_src, w_msg_ref[:dh, :], preferred_element_type=jnp.float32)
           + jnp.dot(ef_ref[...], w_msg_ref[dh:, :], preferred_element_type=jnp.float32)
           + b_msg_ref[...])                                                       # (TE, DOUT) f32

    # Scatter-add into per-destination sums: one_hot(dst)^T @ msg.
    sub_nodes = jax.lax.broadcasted_iota(jnp.int32, (n_pad, te), 0)
    s_dst_t = jnp.where(dstT_ref[...] == sub_nodes, 1.0, 0.0).astype(jnp.bfloat16)  # (N, TE)
    acc_ref[...] += jnp.dot(s_dst_t, msg.astype(jnp.bfloat16),
                            preferred_element_type=jnp.float32)

    @pl.when(k == pl.num_programs(0) - 1)
    def _finalize():
        # mean over in-edges: f32 reciprocal-degree scale on the VPU
        h_neigh = (acc_ref[...] * inv_deg_ref[...]).astype(jnp.bfloat16)           # (N, DOUT)
        h_new = (jnp.dot(h_ref[...], w_app_ref[:dh, :], preferred_element_type=jnp.float32)
                 + jnp.dot(h_neigh, w_app_ref[dh:, :], preferred_element_type=jnp.float32)
                 + b_app_ref[...])
        out_ref[...] = jnp.maximum(h_new, 0.0).astype(out_ref.dtype)


def pred_proj_kernel(h_ref, wu_ref, wv_ref, pu_ref, pv_ref):
    """p_u = h @ W_u, p_v = h @ W_v computed once (before the edge gather)."""
    h = h_ref[...]
    pu_ref[...] = jnp.dot(h, wu_ref[...],
                          preferred_element_type=jnp.float32).astype(pu_ref.dtype)
    pv_ref[...] = jnp.dot(h, wv_ref[...],
                          preferred_element_type=jnp.float32).astype(pv_ref.dtype)


def edge_score_kernel(pu_ref, pv_ref, src_ref, dst_ref, b_ref, out_ref):
    """score = gather(p_u, src) + gather(p_v, dst) + b; grid axis 0 = edge tiles."""
    n_pad = pu_ref.shape[0]
    te = src_ref.shape[0]
    lane_nodes = jax.lax.broadcasted_iota(jnp.int32, (te, n_pad), 1)
    s_src = jnp.where(src_ref[...] == lane_nodes, 1.0, 0.0).astype(jnp.bfloat16)
    s_dst = jnp.where(dst_ref[...] == lane_nodes, 1.0, 0.0).astype(jnp.bfloat16)
    out_ref[...] = (jnp.dot(s_src, pu_ref[...], preferred_element_type=jnp.float32)
                    + jnp.dot(s_dst, pv_ref[...], preferred_element_type=jnp.float32)
                    + b_ref[...]).astype(out_ref.dtype)


# ------------------------------- wrappers ---------------------------------- #

def sage_layer(h, ef, src_col, dst_row, inv_deg, w_msg, b_msg, w_app, b_app, te):
    n_pad, dh = h.shape
    e_pad, de = ef.shape
    dout = w_msg.shape[1]
    return pl.pallas_call(
        sage_layer_kernel,
        out_shape=jax.ShapeDtypeStruct((n_pad, dout), jnp.bfloat16),
        grid_spec=pltpu.PrefetchScalarGridSpec(
            num_scalar_prefetch=0,
            grid=(e_pad // te,),
            in_specs=[
                pl.BlockSpec((n_pad, dh), lambda k: (0, 0)),        # node feats (resident)
                pl.BlockSpec((te, de), lambda k: (k, 0)),           # edge feats tile
                pl.BlockSpec((te, 1), lambda k: (k, 0)),            # src ids (column)
                pl.BlockSpec((1, te), lambda k: (0, k)),            # dst ids (row)
                pl.BlockSpec((n_pad, 1), lambda k: (0, 0)),         # 1/max(deg,1), f32
                pl.BlockSpec((dh + de, dout), lambda k: (0, 0)),    # merged W_msg
                pl.BlockSpec((1, dout), lambda k: (0, 0)),          # b_msg
                pl.BlockSpec((dh + dout, dout), lambda k: (0, 0)),  # merged W_apply
                pl.BlockSpec((1, dout), lambda k: (0, 0)),          # b_apply
            ],
            out_specs=pl.BlockSpec((n_pad, dout), lambda k: (0, 0)),
            scratch_shapes=[pltpu.VMEM((n_pad, dout), jnp.float32)],
        ),
        compiler_params=pltpu.CompilerParams(
            dimension_semantics=("arbitrary",),        # reduction over edge tiles
            vmem_limit_bytes=32 * 1024 * 1024,
        ),
    )(h, ef, src_col, dst_row, inv_deg, w_msg, b_msg, w_app, b_app)


def pred_proj(h, wu, wv):
    n_pad, _ = h.shape
    out_p = wu.shape[1]
    return pl.pallas_call(
        pred_proj_kernel,
        out_shape=(jax.ShapeDtypeStruct((n_pad, out_p), jnp.bfloat16),
                   jax.ShapeDtypeStruct((n_pad, out_p), jnp.bfloat16)),
        in_specs=[_vmem_spec(), _vmem_spec(), _vmem_spec()],
        out_specs=(_vmem_spec(), _vmem_spec()),
        compiler_params=pltpu.CompilerParams(vmem_limit_bytes=32 * 1024 * 1024),
    )(h, wu, wv)


def edge_scores(pu, pv, src_col, dst_col, bias, te):
    n_pad, out_p = pu.shape
    e_pad = src_col.shape[0]
    return pl.pallas_call(
        edge_score_kernel,
        out_shape=jax.ShapeDtypeStruct((e_pad, out_p), jnp.float32),
        grid_spec=pltpu.PrefetchScalarGridSpec(
            num_scalar_prefetch=0,
            grid=(e_pad // te,),
            in_specs=[
                pl.BlockSpec((n_pad, out_p), lambda k: (0, 0)),
                pl.BlockSpec((n_pad, out_p), lambda k: (0, 0)),
                pl.BlockSpec((te, 1), lambda k: (k, 0)),
                pl.BlockSpec((te, 1), lambda k: (k, 0)),
                pl.BlockSpec((1, out_p), lambda k: (0, 0)),
            ],
            out_specs=pl.BlockSpec((te, out_p), lambda k: (k, 0)),
        ),
        compiler_params=pltpu.CompilerParams(
            dimension_semantics=("parallel",),          # independent edge tiles
            vmem_limit_bytes=32 * 1024 * 1024,
        ),
    )(pu, pv, src_col, dst_col, bias)


def egraphsage_forward(nfeats3, efeats3, src, dst, num_nodes, packed, te=128):
    (wm1, bm1, wa1, ba1), (wm2, bm2, wa2, ba2), (wu, wv, bp) = packed
    n = num_nodes
    e = src.shape[0]
    n_pad = _round_up(n, LANE)
    e_pad = _round_up(e, te)
    nf_w = _round_up(nfeats3.shape[2], LANE)
    ef_w = _round_up(efeats3.shape[2], LANE)

    # squeeze the size-1 middle axis (PyTorch keeps it; .sum(1) over it is identity)
    nf = _pad2d(nfeats3.reshape(n, -1), n_pad, nf_w, jnp.bfloat16)
    ef = _pad2d(efeats3.reshape(e, -1), e_pad, ef_w, jnp.bfloat16)

    # padded edges get index -1 -> matches no node column -> contributes nothing
    src_col = jnp.full((e_pad, 1), -1, jnp.int32).at[:e, 0].set(src.astype(jnp.int32))
    dst_col = jnp.full((e_pad, 1), -1, jnp.int32).at[:e, 0].set(dst.astype(jnp.int32))
    dst_row = dst_col.reshape(1, e_pad)

    deg = jnp.zeros((n_pad,), jnp.float32).at[dst].add(1.0)
    inv_deg = (1.0 / jnp.maximum(deg, 1.0)).reshape(n_pad, 1)

    h1 = sage_layer(nf, ef, src_col, dst_row, inv_deg, wm1, bm1, wa1, ba1, te)
    # dropout(p) between layers -> identity in eval mode
    h2 = sage_layer(h1, ef, src_col, dst_row, inv_deg, wm2, bm2, wa2, ba2, te)
    pu, pv = pred_proj(h2, wu, wv)
    scores = edge_scores(pu, pv, src_col, dst_col, bp, te)   # (E_pad, 128) lane-dense
    return scores[:e, :2]


# ------------------------- parameter packing / init ------------------------- #

def linear_params(key, fan_in, fan_out):
    """Deterministic init mimicking torch.nn.Linear default (uniform +-1/sqrt(fan_in))."""
    kw, kb = jax.random.split(key)
    bound = 1.0 / np.sqrt(fan_in)
    w = jax.random.uniform(kw, (fan_out, fan_in), jnp.float32, -bound, bound)
    b = jax.random.uniform(kb, (fan_out,), jnp.float32, -bound, bound)
    return w, b


def _merge_split_weight(w, split, k1_pad, k2_pad, out_pad):
    """Torch-layout (out, k1+k2) -> merged zero-padded ((k1_pad+k2_pad), out_pad) bf16."""
    w1 = _pad2d(w[:, :split].T, k1_pad, out_pad, jnp.bfloat16)
    w2 = _pad2d(w[:, split:].T, k2_pad, out_pad, jnp.bfloat16)
    return jnp.concatenate([w1, w2], axis=0)


def pack_params(raw_params, ndim_in, edim, hidden, ndim_out):
    (wm1, bm1, wa1, ba1), (wm2, bm2, wa2, ba2), (wp, bp) = raw_params
    dh1 = _round_up(ndim_in, LANE)
    de = _round_up(edim, LANE)
    d1 = _round_up(hidden, LANE)
    dh2 = d1
    d2 = _round_up(ndim_out, LANE)

    layer1 = (_merge_split_weight(wm1, ndim_in, dh1, de, d1),
              _pad2d(bm1[None, :], 1, d1, jnp.float32),
              _merge_split_weight(wa1, ndim_in, dh1, d1, d1),
              _pad2d(ba1[None, :], 1, d1, jnp.float32))
    layer2 = (_merge_split_weight(wm2, hidden, dh2, de, d2),
              _pad2d(bm2[None, :], 1, d2, jnp.float32),
              _merge_split_weight(wa2, hidden, dh2, d2, d2),
              _pad2d(ba2[None, :], 1, d2, jnp.float32))
    pred = (_pad2d(wp[:, :ndim_out].T, d2, LANE, jnp.bfloat16),
            _pad2d(wp[:, ndim_out:].T, d2, LANE, jnp.bfloat16),
            _pad2d(bp[None, :], 1, LANE, jnp.float32))
    return layer1, layer2, pred


# ------------------------------ pure-JAX ref -------------------------------- #

def reference_forward(nfeats3, efeats3, src, dst, num_nodes, raw_params):
    (wm1, bm1, wa1, ba1), (wm2, bm2, wa2, ba2), (wp, bp) = raw_params
    nf = nfeats3[:, 0, :]
    ef = efeats3[:, 0, :]

    def layer(h, w_msg, b_msg, w_app, b_app):
        m = jnp.concatenate([h[src], ef], axis=1) @ w_msg.T + b_msg
        sums = jnp.zeros((num_nodes, m.shape[1]), jnp.float32).at[dst].add(m)
        deg = jnp.zeros((num_nodes,), jnp.float32).at[dst].add(1.0)
        h_neigh = sums / jnp.maximum(deg, 1.0)[:, None]
        return jax.nn.relu(jnp.concatenate([h, h_neigh], axis=1) @ w_app.T + b_app)

    h = layer(nf, wm1, bm1, wa1, ba1)
    h = layer(h, wm2, bm2, wa2, ba2)
    return jnp.concatenate([h[src], h[dst]], axis=1) @ wp.T + bp


# ---------------------------------- main ------------------------------------ #

if __name__ == "__main__":
    key = jax.random.PRNGKey(0)
    ks = jax.random.split(key, 10)

    N, E = 64, 256                   # nodes, edges (pads to N_pad=128, 2 edge tiles)
    ndim_in, edim, ndim_out = 16, 8, 32
    hidden = 128                     # fixed by SAGE.__init__

    nfeats = jax.random.normal(ks[0], (N, 1, ndim_in), jnp.float32)
    efeats = jax.random.normal(ks[1], (E, 1, edim), jnp.float32)
    src = jax.random.randint(ks[2], (E,), 0, N, dtype=jnp.int32)
    dst = jax.random.randint(ks[3], (E,), 0, N, dtype=jnp.int32)

    # parameters (PyTorch nn.Linear layout: W (out, in), b (out,))
    wm1, bm1 = linear_params(ks[4], ndim_in + edim, hidden)
    wa1, ba1 = linear_params(ks[5], ndim_in + hidden, hidden)
    wm2, bm2 = linear_params(ks[6], hidden + edim, ndim_out)
    wa2, ba2 = linear_params(ks[7], hidden + ndim_out, ndim_out)
    wp, bp = linear_params(ks[8], 2 * ndim_out, 2)

    raw_params = ((wm1, bm1, wa1, ba1), (wm2, bm2, wa2, ba2), (wp, bp))
    packed = pack_params(raw_params, ndim_in, edim, hidden, ndim_out)

    fwd = jax.jit(lambda nf, ef, s, d: egraphsage_forward(nf, ef, s, d, N, packed))
    scores = fwd(nfeats, efeats, src, dst)
    jax.block_until_ready(scores)

    ref = reference_forward(nfeats, efeats, src, dst, N, raw_params)

    assert scores.shape == (E, 2), scores.shape
    err = float(np.max(np.abs(np.asarray(scores, np.float32) - np.asarray(ref))))
    assert np.allclose(np.asarray(scores, np.float32), np.asarray(ref),
                       atol=5e-2, rtol=5e-2), err
    print("KERNEL_OK")
</pallas_src>

<mosaic_0001>
module attributes {stable_mosaic.version = 11 : i64} {
  func.func private @main(%arg0: i32) attributes {dimension_semantics = [#tpu.dimension_semantics<core_parallel>], iteration_bounds = array<i64: 2>, tpu.core_type = #tpu.core_type<sc_scalar_subcore>, window_params = []} {
    return
  }
}

module attributes {stable_mosaic.version = 11 : i64} {
  func.func private @main(%arg0: i32) attributes {dimension_semantics = [#tpu.dimension_semantics<core_parallel>], iteration_bounds = array<i64: 2>, tpu.core_type = #tpu.core_type<sc_scalar_subcore>, window_params = []} {
    return
  }
}

module attributes {stable_mosaic.version = 11 : i64} {
  func.func @pred_proj_kernel(%arg0: memref<128x128xbf16, #tpu.memory_space<vmem>>, %arg1: memref<128x128xbf16, #tpu.memory_space<vmem>>, %arg2: memref<128x128xbf16, #tpu.memory_space<vmem>>, %arg3: memref<128x128xbf16, #tpu.memory_space<vmem>>, %arg4: memref<128x128xbf16, #tpu.memory_space<vmem>>) attributes {dimension_semantics = [], scalar_prefetch = 0 : i64, scratch_operands = 0 : i64, tpu.core_type = #tpu.core_type<tc>} {
    %c0 = arith.constant 0 : index
    %c0_0 = arith.constant 0 : index
    %0 = vector.load %arg0[%c0, %c0_0] : memref<128x128xbf16, #tpu.memory_space<vmem>>, vector<128x128xbf16>
    %c0_1 = arith.constant 0 : index
    %c0_2 = arith.constant 0 : index
    %1 = vector.load %arg1[%c0_1, %c0_2] : memref<128x128xbf16, #tpu.memory_space<vmem>>, vector<128x128xbf16>
    %cst = arith.constant dense<0.000000e+00> : vector<128x128xf32>
    %2 = tpu.matmul %0, %1, %cst {dimension_numbers = #tpu.dot_dimension_numbers<[1], [0], [0], [1], [0, 0, 1, 1], [], []>} : vector<128x128xbf16>, vector<128x128xbf16>, vector<128x128xf32> -> vector<128x128xf32>
    %3 = arith.truncf %2 : vector<128x128xf32> to vector<128x128xbf16>
    %c0_3 = arith.constant 0 : index
    %c0_4 = arith.constant 0 : index
    %4 = vector.load %arg3[%c0_3, %c0_4] : memref<128x128xbf16, #tpu.memory_space<vmem>>, vector<128x128xbf16>
    tpu.vector_store %arg3[%c0_3, %c0_4], %3 {strides = array<i32>} : memref<128x128xbf16, #tpu.memory_space<vmem>>, vector<128x128xbf16>,
    %c0_5 = arith.constant 0 : index
    %c0_6 = arith.constant 0 : index
    %5 = vector.load %arg2[%c0_5, %c0_6] : memref<128x128xbf16, #tpu.memory_space<vmem>>, vector<128x128xbf16>
    %cst_7 = arith.constant dense<0.000000e+00> : vector<128x128xf32>
    %6 = tpu.matmul %0, %5, %cst_7 {dimension_numbers = #tpu.dot_dimension_numbers<[1], [0], [0], [1], [0, 0, 1, 1], [], []>} : vector<128x128xbf16>, vector<128x128xbf16>, vector<128x128xf32> -> vector<128x128xf32>
    %7 = arith.truncf %6 : vector<128x128xf32> to vector<128x128xbf16>
    %c0_8 = arith.constant 0 : index
    %c0_9 = arith.constant 0 : index
    %8 = vector.load %arg4[%c0_8, %c0_9] : memref<128x128xbf16, #tpu.memory_space<vmem>>, vector<128x128xbf16>
    tpu.vector_store %arg4[%c0_8, %c0_9], %7 {strides = array<i32>} : memref<128x128xbf16, #tpu.memory_space<vmem>>, vector<128x128xbf16>,
    return
  }
}

module attributes {stable_mosaic.version = 11 : i64} {
  func.func @sage_layer_kernel(%arg0: i32, %arg1: memref<128x128xbf16, #tpu.memory_space<vmem>>, %arg2: memref<128x128xbf16, #tpu.memory_space<vmem>>, %arg3: memref<128x1xi32, #tpu.memory_space<vmem>>, %arg4: memref<1x128xi32, #tpu.memory_space<vmem>>, %arg5: memref<128x1xf32, #tpu.memory_space<vmem>>, %arg6: memref<256x128xbf16, #tpu.memory_space<vmem>>, %arg7: memref<1x128xf32, #tpu.memory_space<vmem>>, %arg8: memref<256x128xbf16, #tpu.memory_space<vmem>>, %arg9: memref<1x128xf32, #tpu.memory_space<vmem>>, %arg10: memref<128x128xbf16, #tpu.memory_space<vmem>>, %arg11: memref<128x128xf32, #tpu.memory_space<vmem>>) attributes {dimension_semantics = [#tpu.dimension_semantics<arbitrary>], iteration_bounds = array<i64: 2>, scalar_prefetch = 0 : i64, scratch_operands = 1 : i64, tpu.core_type = #tpu.core_type<tc>, window_params = [{pipeline_mode = #tpu.pipeline_mode<synchronous>, transform_indices = @transform_0, window_bounds = array<i64: 128, 128>}, {transform_indices = @transform_1, window_bounds = array<i64: 128, 128>}, {transform_indices = @transform_2, window_bounds = array<i64: 128, 1>}, {transform_indices = @transform_3, window_bounds = array<i64: 1, 128>}, {pipeline_mode = #tpu.pipeline_mode<synchronous>, transform_indices = @transform_4, window_bounds = array<i64: 128, 1>}, {pipeline_mode = #tpu.pipeline_mode<synchronous>, transform_indices = @transform_5, window_bounds = array<i64: 256, 128>}, {pipeline_mode = #tpu.pipeline_mode<synchronous>, transform_indices = @transform_6, window_bounds = array<i64: 1, 128>}, {pipeline_mode = #tpu.pipeline_mode<synchronous>, transform_indices = @transform_7, window_bounds = array<i64: 256, 128>}, {pipeline_mode = #tpu.pipeline_mode<synchronous>, transform_indices = @transform_8, window_bounds = array<i64: 1, 128>}, {pipeline_mode = #tpu.pipeline_mode<synchronous>, transform_indices = @transform_9, window_bounds = array<i64: 128, 128>}]} {
    %c0_i32 = arith.constant 0 : i32
    %0 = arith.cmpi eq, %arg0, %c0_i32 : i32
    %1 = arith.extui %0 : i1 to i32
    %c0_i32_0 = arith.constant 0 : i32
    %2 = arith.cmpi ne, %1, %c0_i32_0 : i32
    scf.if %2 {
      %cst_25 = arith.constant 0.000000e+00 : f32
      %39 = vector.broadcast %cst_25 : f32 to vector<128x128xf32>
      %c0_26 = arith.constant 0 : index
      %c0_27 = arith.constant 0 : index
      %40 = vector.load %arg11[%c0_26, %c0_27] : memref<128x128xf32, #tpu.memory_space<vmem>>, vector<128x128xf32>
      tpu.vector_store %arg11[%c0_26, %c0_27], %39 {strides = array<i32>} : memref<128x128xf32, #tpu.memory_space<vmem>>, vector<128x128xf32>,
    } else {
    }
    %3 = tpu.iota {dimensions = array<i32: 1>} : vector<128x128xi32>
    %c0 = arith.constant 0 : index
    %c0_1 = arith.constant 0 : index
    %4 = vector.load %arg3[%c0, %c0_1] : memref<128x1xi32, #tpu.memory_space<vmem>>, vector<128x1xi32>
    %5 = vector.broadcast %4 : vector<128x1xi32> to vector<128x128xi32>
    %6 = arith.cmpi eq, %5, %3 : vector<128x128xi32>
    %cst = arith.constant 1.000000e+00 : f32
    %cst_2 = arith.constant 0.000000e+00 : f32
    %7 = vector.broadcast %cst : f32 to vector<128x128xf32>
    %8 = vector.broadcast %cst_2 : f32 to vector<128x128xf32>
    %9 = arith.select %6, %7, %8 : vector<128x128xi1>, vector<128x128xf32>
    %10 = arith.truncf %9 : vector<128x128xf32> to vector<128x128xbf16>
    %c0_3 = arith.constant 0 : index
    %c0_4 = arith.constant 0 : index
    %11 = vector.load %arg1[%c0_3, %c0_4] : memref<128x128xbf16, #tpu.memory_space<vmem>>, vector<128x128xbf16>
    %cst_5 = arith.constant dense<0.000000e+00> : vector<128x128xf32>
    %12 = tpu.matmul %10, %11, %cst_5 {dimension_numbers = #tpu.dot_dimension_numbers<[1], [0], [0], [1], [0, 0, 1, 1], [], []>} : vector<128x128xbf16>, vector<128x128xbf16>, vector<128x128xf32> -> vector<128x128xf32>
    %13 = arith.truncf %12 : vector<128x128xf32> to vector<128x128xbf16>
    %c0_6 = arith.constant 0 : index
    %c0_7 = arith.constant 0 : index
    %14 = vector.load %arg6[%c0_6, %c0_7] : memref<256x128xbf16, #tpu.memory_space<vmem>>, vector<128x128xbf16>
    %cst_8 = arith.constant dense<0.000000e+00> : vector<128x128xf32>
    %15 = tpu.matmul %13, %14, %cst_8 {dimension_numbers = #tpu.dot_dimension_numbers<[1], [0], [0], [1], [0, 0, 1, 1], [], []>} : vector<128x128xbf16>, vector<128x128xbf16>, vector<128x128xf32> -> vector<128x128xf32>
    %c0_9 = arith.constant 0 : index
    %c0_10 = arith.constant 0 : index
    %16 = vector.load %arg2[%c0_9, %c0_10] : memref<128x128xbf16, #tpu.memory_space<vmem>>, vector<128x128xbf16>
    %c128 = arith.constant 128 : index
    %c0_11 = arith.constant 0 : index
    %17 = vector.load %arg6[%c128, %c0_11] : memref<256x128xbf16, #tpu.memory_space<vmem>>, vector<128x128xbf16>
    %cst_12 = arith.constant dense<0.000000e+00> : vector<128x128xf32>
    %18 = tpu.matmul %16, %17, %cst_12 {dimension_numbers = #tpu.dot_dimension_numbers<[1], [0], [0], [1], [0, 0, 1, 1], [], []>} : vector<128x128xbf16>, vector<128x128xbf16>, vector<128x128xf32> -> vector<128x128xf32>
    %19 = arith.addf %15, %18 : vector<128x128xf32>
    %c0_13 = arith.constant 0 : index
    %c0_14 = arith.constant 0 : index
    %20 = vector.load %arg7[%c0_13, %c0_14] : memref<1x128xf32, #tpu.memory_space<vmem>>, vector<1x128xf32>
    %21 = vector.broadcast %20 : vector<1x128xf32> to vector<128x128xf32>
    %22 = arith.addf %19, %21 : vector<128x128xf32>
    %23 = tpu.iota {dimensions = array<i32: 0>} : vector<128x128xi32>
    %c0_15 = arith.constant 0 : index
    %c0_16 = arith.constant 0 : index
    %24 = vector.load %arg4[%c0_15, %c0_16] : memref<1x128xi32, #tpu.memory_space<vmem>>, vector<1x128xi32>
    %25 = vector.broadcast %24 : vector<1x128xi32> to vector<128x128xi32>
    %26 = arith.cmpi eq, %25, %23 : vector<128x128xi32>
    %cst_17 = arith.constant 1.000000e+00 : f32
    %cst_18 = arith.constant 0.000000e+00 : f32
    %27 = vector.broadcast %cst_17 : f32 to vector<128x128xf32>
    %28 = vector.broadcast %cst_18 : f32 to vector<128x128xf32>
    %29 = arith.select %26, %27, %28 : vector<128x128xi1>, vector<128x128xf32>
    %30 = arith.truncf %29 : vector<128x128xf32> to vector<128x128xbf16>
    %c0_19 = arith.constant 0 : index
    %c0_20 = arith.constant 0 : index
    %31 = vector.load %arg11[%c0_19, %c0_20] : memref<128x128xf32, #tpu.memory_space<vmem>>, vector<128x128xf32>
    %32 = arith.truncf %22 : vector<128x128xf32> to vector<128x128xbf16>
    %cst_21 = arith.constant dense<0.000000e+00> : vector<128x128xf32>
    %33 = tpu.matmul %30, %32, %cst_21 {dimension_numbers = #tpu.dot_dimension_numbers<[1], [0], [0], [1], [0, 0, 1, 1], [], []>} : vector<128x128xbf16>, vector<128x128xbf16>, vector<128x128xf32> -> vector<128x128xf32>
    %34 = arith.addf %31, %33 : vector<128x128xf32>
    %c0_22 = arith.constant 0 : index
    %c0_23 = arith.constant 0 : index
    %35 = vector.load %arg11[%c0_22, %c0_23] : memref<128x128xf32, #tpu.memory_space<vmem>>, vector<128x128xf32>
    tpu.vector_store %arg11[%c0_22, %c0_23], %34 {strides = array<i32>} : memref<128x128xf32, #tpu.memory_space<vmem>>, vector<128x128xf32>,
    %c1_i32 = arith.constant 1 : i32
    %36 = arith.cmpi eq, %arg0, %c1_i32 : i32
    %37 = arith.extui %36 : i1 to i32
    %c0_i32_24 = arith.constant 0 : i32
    %38 = arith.cmpi ne, %37, %c0_i32_24 : i32
    scf.if %38 {
      %c0_25 = arith.constant 0 : index
      %c0_26 = arith.constant 0 : index
      %39 = vector.load %arg11[%c0_25, %c0_26] : memref<128x128xf32, #tpu.memory_space<vmem>>, vector<128x128xf32>
      %c0_27 = arith.constant 0 : index
      %c0_28 = arith.constant 0 : index
      %40 = vector.load %arg5[%c0_27, %c0_28] : memref<128x1xf32, #tpu.memory_space<vmem>>, vector<128x1xf32>
      %41 = vector.broadcast %40 : vector<128x1xf32> to vector<128x128xf32>
      %42 = arith.mulf %39, %41 : vector<128x128xf32>
      %43 = arith.truncf %42 : vector<128x128xf32> to vector<128x128xbf16>
      %c0_29 = arith.constant 0 : index
      %c0_30 = arith.constant 0 : index
      %44 = vector.load %arg1[%c0_29, %c0_30] : memref<128x128xbf16, #tpu.memory_space<vmem>>, vector<128x128xbf16>
      %c0_31 = arith.constant 0 : index
      %c0_32 = arith.constant 0 : index
      %45 = vector.load %arg8[%c0_31, %c0_32] : memref<256x128xbf16, #tpu.memory_space<vmem>>, vector<128x128xbf16>
      %cst_33 = arith.constant dense<0.000000e+00> : vector<128x128xf32>
      %46 = tpu.matmul %44, %45, %cst_33 {dimension_numbers = #tpu.dot_dimension_numbers<[1], [0], [0], [1], [0, 0, 1, 1], [], []>} : vector<128x128xbf16>, vector<128x128xbf16>, vector<128x128xf32> -> vector<128x128xf32>
      %c128_34 = arith.constant 128 : index
      %c0_35 = arith.constant 0 : index
      %47 = vector.load %arg8[%c128_34, %c0_35] : memref<256x128xbf16, #tpu.memory_space<vmem>>, vector<128x128xbf16>
      %cst_36 = arith.constant dense<0.000000e+00> : vector<128x128xf32>
      %48 = tpu.matmul %43, %47, %cst_36 {dimension_numbers = #tpu.dot_dimension_numbers<[1], [0], [0], [1], [0, 0, 1, 1], [], []>} : vector<128x128xbf16>, vector<128x128xbf16>, vector<128x128xf32> -> vector<128x128xf32>
      %49 = arith.addf %46, %48 : vector<128x128xf32>
      %c0_37 = arith.constant 0 : index
      %c0_38 = arith.constant 0 : index
      %50 = vector.load %arg9[%c0_37, %c0_38] : memref<1x128xf32, #tpu.memory_space<vmem>>, vector<1x128xf32>
      %51 = vector.broadcast %50 : vector<1x128xf32> to vector<128x128xf32>
      %52 = arith.addf %49, %51 : vector<128x128xf32>
      %cst_39 = arith.constant 0.000000e+00 : f32
      %53 = vector.broadcast %cst_39 : f32 to vector<128x128xf32>
      %54 = arith.maximumf %52, %53 : vector<128x128xf32>
      %55 = arith.truncf %54 : vector<128x128xf32> to vector<128x128xbf16>
      %c0_40 = arith.constant 0 : index
      %c0_41 = arith.constant 0 : index
      %56 = vector.load %arg10[%c0_40, %c0_41] : memref<128x128xbf16, #tpu.memory_space<vmem>>, vector<128x128xbf16>
      tpu.vector_store %arg10[%c0_40, %c0_41], %55 {strides = array<i32>} : memref<128x128xbf16, #tpu.memory_space<vmem>>, vector<128x128xbf16>,
    } else {
    }
    return
  }
  func.func @transform_0(%arg0: i32) -> (i32, i32) {
    %c0_i32 = arith.constant 0 : i32
    %c0_i32_0 = arith.constant 0 : i32
    %c0_i32_1 = arith.constant 0 : i32
    return %c0_i32, %c0_i32_0 : i32, i32
  }
  func.func @transform_1(%arg0: i32) -> (i32, i32) {
    %c0_i32 = arith.constant 0 : i32
    %c0_i32_0 = arith.constant 0 : i32
    return %arg0, %c0_i32 : i32, i32
  }
  func.func @transform_2(%arg0: i32) -> (i32, i32) {
    %c0_i32 = arith.constant 0 : i32
    %c0_i32_0 = arith.constant 0 : i32
    return %arg0, %c0_i32 : i32, i32
  }
  func.func @transform_3(%arg0: i32) -> (i32, i32) {
    %c0_i32 = arith.constant 0 : i32
    %c0_i32_0 = arith.constant 0 : i32
    return %c0_i32, %arg0 : i32, i32
  }
  func.func @transform_4(%arg0: i32) -> (i32, i32) {
    %c0_i32 = arith.constant 0 : i32
    %c0_i32_0 = arith.constant 0 : i32
    %c0_i32_1 = arith.constant 0 : i32
    return %c0_i32, %c0_i32_0 : i32, i32
  }
  func.func @transform_5(%arg0: i32) -> (i32, i32) {
    %c0_i32 = arith.constant 0 : i32
    %c0_i32_0 = arith.constant 0 : i32
    %c0_i32_1 = arith.constant 0 : i32
    return %c0_i32, %c0_i32_0 : i32, i32
  }
  func.func @transform_6(%arg0: i32) -> (i32, i32) {
    %c0_i32 = arith.constant 0 : i32
    %c0_i32_0 = arith.constant 0 : i32
    %c0_i32_1 = arith.constant 0 : i32
    return %c0_i32, %c0_i32_0 : i32, i32
  }
  func.func @transform_7(%arg0: i32) -> (i32, i32) {
    %c0_i32 = arith.constant 0 : i32
    %c0_i32_0 = arith.constant 0 : i32
    %c0_i32_1 = arith.constant 0 : i32
    return %c0_i32, %c0_i32_0 : i32, i32
  }
  func.func @transform_8(%arg0: i32) -> (i32, i32) {
    %c0_i32 = arith.constant 0 : i32
    %c0_i32_0 = arith.constant 0 : i32
    %c0_i32_1 = arith.constant 0 : i32
    return %c0_i32, %c0_i32_0 : i32, i32
  }
  func.func @transform_9(%arg0: i32) -> (i32, i32) {
    %c0_i32 = arith.constant 0 : i32
    %c0_i32_0 = arith.constant 0 : i32
    %c0_i32_1 = arith.constant 0 : i32
    return %c0_i32, %c0_i32_0 : i32, i32
  }
}

module attributes {stable_mosaic.version = 11 : i64} {
  func.func @edge_score_kernel(%arg0: i32, %arg1: memref<128x128xbf16, #tpu.memory_space<vmem>>, %arg2: memref<128x128xbf16, #tpu.memory_space<vmem>>, %arg3: memref<128x1xi32, #tpu.memory_space<vmem>>, %arg4: memref<128x1xi32, #tpu.memory_space<vmem>>, %arg5: memref<1x128xf32, #tpu.memory_space<vmem>>, %arg6: memref<128x128xf32, #tpu.memory_space<vmem>>) attributes {dimension_semantics = [#tpu.dimension_semantics<parallel>], iteration_bounds = array<i64: 2>, scalar_prefetch = 0 : i64, scratch_operands = 0 : i64, tpu.core_type = #tpu.core_type<tc>, window_params = [{pipeline_mode = #tpu.pipeline_mode<synchronous>, transform_indices = @transform_0, window_bounds = array<i64: 128, 128>}, {pipeline_mode = #tpu.pipeline_mode<synchronous>, transform_indices = @transform_1, window_bounds = array<i64: 128, 128>}, {transform_indices = @transform_2, window_bounds = array<i64: 128, 1>}, {transform_indices = @transform_3, window_bounds = array<i64: 128, 1>}, {pipeline_mode = #tpu.pipeline_mode<synchronous>, transform_indices = @transform_4, window_bounds = array<i64: 1, 128>}, {transform_indices = @transform_5, window_bounds = array<i64: 128, 128>}]} {
    %0 = tpu.iota {dimensions = array<i32: 1>} : vector<128x128xi32>
    %c0 = arith.constant 0 : index
    %c0_0 = arith.constant 0 : index
    %1 = vector.load %arg3[%c0, %c0_0] : memref<128x1xi32, #tpu.memory_space<vmem>>, vector<128x1xi32>
    %2 = vector.broadcast %1 : vector<128x1xi32> to vector<128x128xi32>
    %3 = arith.cmpi eq, %2, %0 : vector<128x128xi32>
    %cst = arith.constant 1.000000e+00 : f32
    %cst_1 = arith.constant 0.000000e+00 : f32
    %4 = vector.broadcast %cst : f32 to vector<128x128xf32>
    %5 = vector.broadcast %cst_1 : f32 to vector<128x128xf32>
    %6 = arith.select %3, %4, %5 : vector<128x128xi1>, vector<128x128xf32>
    %7 = arith.truncf %6 : vector<128x128xf32> to vector<128x128xbf16>
    %c0_2 = arith.constant 0 : index
    %c0_3 = arith.constant 0 : index
    %8 = vector.load %arg4[%c0_2, %c0_3] : memref<128x1xi32, #tpu.memory_space<vmem>>, vector<128x1xi32>
    %9 = vector.broadcast %8 : vector<128x1xi32> to vector<128x128xi32>
    %10 = arith.cmpi eq, %9, %0 : vector<128x128xi32>
    %cst_4 = arith.constant 1.000000e+00 : f32
    %cst_5 = arith.constant 0.000000e+00 : f32
    %11 = vector.broadcast %cst_4 : f32 to vector<128x128xf32>
    %12 = vector.broadcast %cst_5 : f32 to vector<128x128xf32>
    %13 = arith.select %10, %11, %12 : vector<128x128xi1>, vector<128x128xf32>
    %14 = arith.truncf %13 : vector<128x128xf32> to vector<128x128xbf16>
    %c0_6 = arith.constant 0 : index
    %c0_7 = arith.constant 0 : index
    %15 = vector.load %arg1[%c0_6, %c0_7] : memref<128x128xbf16, #tpu.memory_space<vmem>>, vector<128x128xbf16>
    %cst_8 = arith.constant dense<0.000000e+00> : vector<128x128xf32>
    %16 = tpu.matmul %7, %15, %cst_8 {dimension_numbers = #tpu.dot_dimension_numbers<[1], [0], [0], [1], [0, 0, 1, 1], [], []>} : vector<128x128xbf16>, vector<128x128xbf16>, vector<128x128xf32> -> vector<128x128xf32>
    %c0_9 = arith.constant 0 : index
    %c0_10 = arith.constant 0 : index
    %17 = vector.load %arg2[%c0_9, %c0_10] : memref<128x128xbf16, #tpu.memory_space<vmem>>, vector<128x128xbf16>
    %cst_11 = arith.constant dense<0.000000e+00> : vector<128x128xf32>
    %18 = tpu.matmul %14, %17, %cst_11 {dimension_numbers = #tpu.dot_dimension_numbers<[1], [0], [0], [1], [0, 0, 1, 1], [], []>} : vector<128x128xbf16>, vector<128x128xbf16>, vector<128x128xf32> -> vector<128x128xf32>
    %19 = arith.addf %16, %18 : vector<128x128xf32>
    %c0_12 = arith.constant 0 : index
    %c0_13 = arith.constant 0 : index
    %20 = vector.load %arg5[%c0_12, %c0_13] : memref<1x128xf32, #tpu.memory_space<vmem>>, vector<1x128xf32>
    %21 = vector.broadcast %20 : vector<1x128xf32> to vector<128x128xf32>
    %22 = arith.addf %19, %21 : vector<128x128xf32>
    %c0_14 = arith.constant 0 : index
    %c0_15 = arith.constant 0 : index
    %23 = vector.load %arg6[%c0_14, %c0_15] : memref<128x128xf32, #tpu.memory_space<vmem>>, vector<128x128xf32>
    tpu.vector_store %arg6[%c0_14, %c0_15], %22 {strides = array<i32>} : memref<128x128xf32, #tpu.memory_space<vmem>>, vector<128x128xf32>,
    return
  }
  func.func @transform_0(%arg0: i32) -> (i32, i32) {
    %c0_i32 = arith.constant 0 : i32
    %c0_i32_0 = arith.constant 0 : i32
    %c0_i32_1 = arith.constant 0 : i32
    return %c0_i32, %c0_i32_0 : i32, i32
  }
  func.func @transform_1(%arg0: i32) -> (i32, i32) {
    %c0_i32 = arith.constant 0 : i32
    %c0_i32_0 = arith.constant 0 : i32
    %c0_i32_1 = arith.constant 0 : i32
    return %c0_i32, %c0_i32_0 : i32, i32
  }
  func.func @transform_2(%arg0: i32) -> (i32, i32) {
    %c0_i32 = arith.constant 0 : i32
    %c0_i32_0 = arith.constant 0 : i32
    return %arg0, %c0_i32 : i32, i32
  }
  func.func @transform_3(%arg0: i32) -> (i32, i32) {
    %c0_i32 = arith.constant 0 : i32
    %c0_i32_0 = arith.constant 0 : i32
    return %arg0, %c0_i32 : i32, i32
  }
  func.func @transform_4(%arg0: i32) -> (i32, i32) {
    %c0_i32 = arith.constant 0 : i32
    %c0_i32_0 = arith.constant 0 : i32
    %c0_i32_1 = arith.constant 0 : i32
    return %c0_i32, %c0_i32_0 : i32, i32
  }
  func.func @transform_5(%arg0: i32) -> (i32, i32) {
    %c0_i32 = arith.constant 0 : i32
    %c0_i32_0 = arith.constant 0 : i32
    return %arg0, %c0_i32 : i32, i32
  }
}

</mosaic_0001>

<llo_original>
// kernel: _lambda_.6
$region0: #{_lambda_.6}
  #allocation0 [shape = 'u32[]', space=smem, size = 0x4, offset = 0x4, fixed_abs, tag = 'smem constant byte address 0x4 - core index']
  #allocation1 [shape = 'u32[144,128]{1,0:T(1,128)}', space=vmem, size = 0x12000, scoped, tag = 'internal scratch']
  %s0 = inlined_call_operand.vmem [shape: bf16[128,128], index: 0, kind: input, shape index: {}]
  %s1 = inlined_call_operand.vmem [shape: bf16[128,128], index: 1, kind: input, shape index: {}]
  %s2 = inlined_call_operand.vmem [shape: bf16[128,128], index: 2, kind: input, shape index: {}]
  %s3 = inlined_call_operand.vmem [shape: bf16[128,128], index: 3, kind: output, shape index: {0}]
  %s4 = inlined_call_operand.vmem [shape: bf16[128,128], index: 4, kind: output, shape index: {1}]
  %5 = xla_tuple %s3, %s4
  %s6 = sld [smem:[#allocation0]]
  $region30: #{_lambda_.6} parent=0
    _
  %s8 = ssub.s32 1, %s6
  %s9 = scalar_select 0, %s8, %s6
  // Predicated region
  $region2: #{_lambda_.6} parent=0 // pred_check
    _
  $region3: #{_lambda_.6} parent=0 // pred_check_branch
    %11 = sbr.rel (0) target = $region5
  $region4: #{_lambda_.6} parent=0 // pred_region
    _
  $region5: #{_lambda_.6} parent=0 // pred_fallthru
    _
  // Predicated region
  $region6: #{_lambda_.6} parent=0 // pred_check
    _
  $region7: #{_lambda_.6} parent=0 // pred_check_branch
    %13 = sbr.rel (0) target = $region9
  $region8: #{_lambda_.6} parent=0 // pred_region
    _
  $region9: #{_lambda_.6} parent=0 // pred_fallthru
    _
  // Predicated region
  $region10: #{_lambda_.6} parent=0 // pred_check
    _
  $region11: #{_lambda_.6} parent=0 // pred_check_branch
    %15 = sbr.rel (0) target = $region13
  $region12: #{_lambda_.6} parent=0 // pred_region
    _
  $region13: #{_lambda_.6} parent=0 // pred_fallthru
    _
  %v17 = vld [vmem:[%s0] sm:$0xf]
  %v18 = vld [vmem:[%s0 + $0x4] sm:$0xf]
  %v19 = vld [vmem:[%s0 + $0x8] sm:$0xf]
  %v20 = vld [vmem:[%s0 + $0xc] sm:$0xf]
  %v21 = vld [vmem:[%s0 + $0x10] sm:$0xf]
  %v22 = vld [vmem:[%s0 + $0x14] sm:$0xf]
  %v23 = vld [vmem:[%s0 + $0x18] sm:$0xf]
  %v24 = vld [vmem:[%s0 + $0x1c] sm:$0xf]
  %v25 = vld [vmem:[%s0 + $0x20] sm:$0xf]
  %v26 = vld [vmem:[%s0 + $0x24] sm:$0xf]
  %v27 = vld [vmem:[%s0 + $0x28] sm:$0xf]
  %v28 = vld [vmem:[%s0 + $0x2c] sm:$0xf]
  %v29 = vld [vmem:[%s0 + $0x30] sm:$0xf]
  %v30 = vld [vmem:[%s0 + $0x34] sm:$0xf]
  %v31 = vld [vmem:[%s0 + $0x38] sm:$0xf]
  %v32 = vld [vmem:[%s0 + $0x3c] sm:$0xf]
  %v33 = vld [vmem:[%s1] sm:$0xf]
  %v34 = vld [vmem:[%s1 + $0x4] sm:$0xf]
  %v35 = vld [vmem:[%s1 + $0x8] sm:$0xf]
  %v36 = vld [vmem:[%s1 + $0xc] sm:$0xf]
  %v37 = vld [vmem:[%s1 + $0x10] sm:$0xf]
  %v38 = vld [vmem:[%s1 + $0x14] sm:$0xf]
  %v39 = vld [vmem:[%s1 + $0x18] sm:$0xf]
  %v40 = vld [vmem:[%s1 + $0x1c] sm:$0xf]
  %v41 = vld [vmem:[%s1 + $0x20] sm:$0xf]
  %v42 = vld [vmem:[%s1 + $0x24] sm:$0xf]
  %v43 = vld [vmem:[%s1 + $0x28] sm:$0xf]
  %v44 = vld [vmem:[%s1 + $0x2c] sm:$0xf]
  %v45 = vld [vmem:[%s1 + $0x30] sm:$0xf]
  %v46 = vld [vmem:[%s1 + $0x34] sm:$0xf]
  %v47 = vld [vmem:[%s1 + $0x38] sm:$0xf]
  %v48 = vld [vmem:[%s1 + $0x3c] sm:$0xf]
  %v65 = vunpack.c.l.b16 %v17
  %v66 = vunpack.c.l.b16 %v18
  %v67 = vunpack.c.l.b16 %v19
  %v68 = vunpack.c.l.b16 %v20
  %v69 = vunpack.c.l.b16 %v21
  %v70 = vunpack.c.l.b16 %v22
  %v71 = vunpack.c.l.b16 %v23
  %v72 = vunpack.c.l.b16 %v24
  %v73 = vunpack.c.l.b16 %v25
  %v74 = vunpack.c.l.b16 %v26
  %v75 = vunpack.c.l.b16 %v27
  %v76 = vunpack.c.l.b16 %v28
  %v77 = vunpack.c.l.b16 %v29
  %v78 = vunpack.c.l.b16 %v30
  %v79 = vunpack.c.l.b16 %v31
  %v80 = vunpack.c.l.b16 %v32
  %v81 = vpack.c.b16 %v66, %v65
  %v82 = vpack.c.b16 %v68, %v67
  %v83 = vpack.c.b16 %v70, %v69
  %v84 = vpack.c.b16 %v72, %v71
  %v85 = vpack.c.b16 %v74, %v73
  %v86 = vpack.c.b16 %v76, %v75
  %v87 = vpack.c.b16 %v78, %v77
  %v88 = vpack.c.b16 %v80, %v79
  %v113 = vunpack.c.l.b16 %v33
  %v114 = vunpack.c.l.b16 %v34
  %v115 = vunpack.c.l.b16 %v35
  %v116 = vunpack.c.l.b16 %v36
  %v117 = vunpack.c.l.b16 %v37
  %v118 = vunpack.c.l.b16 %v38
  %v119 = vunpack.c.l.b16 %v39
  %v120 = vunpack.c.l.b16 %v40
  %v121 = vunpack.c.l.b16 %v41
  %v122 = vunpack.c.l.b16 %v42
  %v123 = vunpack.c.l.b16 %v43
  %v124 = vunpack.c.l.b16 %v44
  %v125 = vunpack.c.l.b16 %v45
  %v126 = vunpack.c.l.b16 %v46
  %v127 = vunpack.c.l.b16 %v47
  %v128 = vunpack.c.l.b16 %v48
  %v129 = vpack.c.b16 %v114, %v113
  %v130 = vpack.c.b16 %v116, %v115
  %v131 = vpack.c.b16 %v118, %v117
  %v132 = vpack.c.b16 %v120, %v119
  %v133 = vpack.c.b16 %v122, %v121
  %v134 = vpack.c.b16 %v124, %v123
  %v135 = vpack.c.b16 %v126, %v125
  %v136 = vpack.c.b16 %v128, %v127
  %145 = vmatprep.subr.bf16.mxu0 0
  %146 = vmatpush1.bf16.msra.mxu0 %v129
  %147 = vmatprep.subr.bf16.mxu0 0
  %148 = vmatpush1.bf16.msra.mxu0 %v130
  %149 = vmatprep.subr.bf16.mxu0 0
  %150 = vmatpush1.bf16.msra.mxu0 %v131
  %151 = vmatprep.subr.bf16.mxu0 0
  %152 = vmatpush1.bf16.msra.mxu0 %v132
  %153 = vmatprep.subr.bf16.mxu0 0
  %154 = vmatpush1.bf16.msra.mxu0 %v133
  %155 = vmatprep.subr.bf16.mxu0 0
  %156 = vmatpush1.bf16.msra.mxu0 %v134
  %157 = vmatprep.subr.bf16.mxu0 0
  %158 = vmatpush1.bf16.msra.mxu0 %v135
  %159 = vmatprep.subr.bf16.mxu0 0
  %160 = vmatpush1.bf16.msra.mxu0 %v136
  %161 = vmatprep.subr.bf16.mxu0 0
  %162 = vmatpush1.bf16.msra.mxu0 0
  %163 = vmatprep.subr.bf16.mxu0 0
  %164 = vmatpush1.bf16.msra.mxu0 0
  %165 = vmatprep.subr.bf16.mxu0 0
  %166 = vmatpush1.bf16.msra.mxu0 0
  %167 = vmatprep.subr.bf16.mxu0 0
  %168 = vmatpush1.bf16.msra.mxu0 0
  %169 = vmatprep.subr.bf16.mxu0 0
  %170 = vmatpush1.bf16.msra.mxu0 0
  %171 = vmatprep.subr.bf16.mxu0 0
  %172 = vmatpush1.bf16.msra.mxu0 0
  %173 = vmatprep.subr.bf16.mxu0 0
  %174 = vmatpush1.bf16.msra.mxu0 0
  %175 = vmatprep.subr.bf16.mxu0 0
  %176 = vmatpush1.bf16.msra.mxu0 0
  %177 = vmatprep.mubr.bf16.mxu0 0
  %178 = vmatmul.mubr.bf16.gmra.mrb[0].mxu0 %v81
  %v179 = vpop.f32.mrb[0].mxu0
  %v180 = vadd.f32 0.0, %v179
  %v181 = vpop.f32.mrb[0].mxu0
  %v182 = vpop.f32.mrb[0].mxu0
  %v183 = vadd.f32 0.0, %v182
  %v184 = vpop.f32.mrb[0].mxu0
  %185 = vmatprep.mubr.bf16.mxu0 0
  %186 = vmatmul.mubr.bf16.gmra.mrb[0].mxu0 %v82
  %v187 = vpop.f32.mrb[0].mxu0
  %v188 = vadd.f32 0.0, %v187
  %v189 = vpop.f32.mrb[0].mxu0
  %v190 = vpop.f32.mrb[0].mxu0
  %v191 = vadd.f32 0.0, %v190
  %v192 = vpop.f32.mrb[0].mxu0
  %193 = vmatprep.mubr.bf16.mxu0 0
  %194 = vmatmul.mubr.bf16.gmra.mrb[0].mxu0 %v83
  %v195 = vpop.f32.mrb[0].mxu0
  %v196 = vadd.f32 0.0, %v195
  %v197 = vpop.f32.mrb[0].mxu0
  %v198 = vpop.f32.mrb[0].mxu0
  %v199 = vadd.f32 0.0, %v198
  %v200 = vpop.f32.mrb[0].mxu0
  %201 = vmatprep.mubr.bf16.mxu0 0
  %202 = vmatmul.mubr.bf16.gmra.mrb[0].mxu0 %v84
  %v203 = vpop.f32.mrb[0].mxu0
  %v204 = vadd.f32 0.0, %v203
  %v205 = vpop.f32.mrb[0].mxu0
  %v206 = vpop.f32.mrb[0].mxu0
  %v207 = vadd.f32 0.0, %v206
  %v208 = vpop.f32.mrb[0].mxu0
  %209 = vmatprep.mubr.bf16.mxu0 0
  %210 = vmatmul.mubr.bf16.gmra.mrb[0].mxu0 %v85
  %v211 = vpop.f32.mrb[0].mxu0
  %v212 = vadd.f32 0.0, %v211
  %v213 = vpop.f32.mrb[0].mxu0
  %v214 = vpop.f32.mrb[0].mxu0
  %v215 = vadd.f32 0.0, %v214
  %v216 = vpop.f32.mrb[0].mxu0
  %217 = vmatprep.mubr.bf16.mxu0 0
  %218 = vmatmul.mubr.bf16.gmra.mrb[0].mxu0 %v86
  %v219 = vpop.f32.mrb[0].mxu0
  %v220 = vadd.f32 0.0, %v219
  %v221 = vpop.f32.mrb[0].mxu0
  %v222 = vpop.f32.mrb[0].mxu0
  %v223 = vadd.f32 0.0, %v222
  %v224 = vpop.f32.mrb[0].mxu0
  %225 = vmatprep.mubr.bf16.mxu0 0
  %226 = vmatmul.mubr.bf16.gmra.mrb[0].mxu0 %v87
  %v227 = vpop.f32.mrb[0].mxu0
  %v228 = vadd.f32 0.0, %v227
  %v229 = vpop.f32.mrb[0].mxu0
  %v230 = vpop.f32.mrb[0].mxu0
  %v231 = vadd.f32 0.0, %v230
  %v232 = vpop.f32.mrb[0].mxu0
  %233 = vmatprep.mubr.bf16.mxu0 0
  %234 = vmatmul.mubr.bf16.gmra.mrb[0].mxu0 %v88
  %v235 = vpop.f32.mrb[0].mxu0
  %v236 = vadd.f32 0.0, %v235
  %v237 = vpop.f32.mrb[0].mxu0
  %v238 = vpop.f32.mrb[0].mxu0
  %v239 = vadd.f32 0.0, %v238
  %v240 = vpop.f32.mrb[0].mxu0
  %241 = vdwg.mxu0
  %v242 = vpack.c.bf16 %v183, %v180
  %v243 = vpack.c.bf16 %v191, %v188
  %v244 = vpack.c.bf16 %v199, %v196
  %v245 = vpack.c.bf16 %v207, %v204
  %v246 = vpack.c.bf16 %v215, %v212
  %v247 = vpack.c.bf16 %v223, %v220
  %v248 = vpack.c.bf16 %v231, %v228
  %v249 = vpack.c.bf16 %v239, %v236
  %v258 = vunpack.c.l.b16 %v242
  %v259 = vunpack.c.h.b16 %v242
  %v260 = vunpack.c.l.b16 %v243
  %v261 = vunpack.c.h.b16 %v243
  %v262 = vunpack.c.l.b16 %v244
  %v263 = vunpack.c.h.b16 %v244
  %v264 = vunpack.c.l.b16 %v245
  %v265 = vunpack.c.h.b16 %v245
  %v266 = vunpack.c.l.b16 %v246
  %v267 = vunpack.c.h.b16 %v246
  %v268 = vunpack.c.l.b16 %v247
  %v269 = vunpack.c.h.b16 %v247
  %v270 = vunpack.c.l.b16 %v248
  %v271 = vunpack.c.h.b16 %v248
  %v272 = vunpack.c.l.b16 %v249
  %v273 = vunpack.c.h.b16 %v249
  %v274 = vpack.c.b16 %v258, %v258
  %v275 = vpack.c.b16 %v259, %v259
  %v276 = vpack.c.b16 %v260, %v260
  %v277 = vpack.c.b16 %v261, %v261
  %v278 = vpack.c.b16 %v262, %v262
  %v279 = vpack.c.b16 %v263, %v263
  %v280 = vpack.c.b16 %v264, %v264
  %v281 = vpack.c.b16 %v265, %v265
  %v282 = vpack.c.b16 %v266, %v266
  %v283 = vpack.c.b16 %v267, %v267
  %v284 = vpack.c.b16 %v268, %v268
  %v285 = vpack.c.b16 %v269, %v269
  %v286 = vpack.c.b16 %v270, %v270
  %v287 = vpack.c.b16 %v271, %v271
  %v288 = vpack.c.b16 %v272, %v272
  %v289 = vpack.c.b16 %v273, %v273
  %306 = vst [vmem:[%s3] sm:$0xf] %v274
  %307 = vst [vmem:[%s3 + $0x4] sm:$0xf] %v275
  %308 = vst [vmem:[%s3 + $0x8] sm:$0xf] %v276
  %309 = vst [vmem:[%s3 + $0xc] sm:$0xf] %v277
  %310 = vst [vmem:[%s3 + $0x10] sm:$0xf] %v278
  %311 = vst [vmem:[%s3 + $0x14] sm:$0xf] %v279
  %312 = vst [vmem:[%s3 + $0x18] sm:$0xf] %v280
  %313 = vst [vmem:[%s3 + $0x1c] sm:$0xf] %v281
  %314 = vst [vmem:[%s3 + $0x20] sm:$0xf] %v282
  %315 = vst [vmem:[%s3 + $0x24] sm:$0xf] %v283
  %316 = vst [vmem:[%s3 + $0x28] sm:$0xf] %v284
  %317 = vst [vmem:[%s3 + $0x2c] sm:$0xf] %v285
  %318 = vst [vmem:[%s3 + $0x30] sm:$0xf] %v286
  %319 = vst [vmem:[%s3 + $0x34] sm:$0xf] %v287
  %320 = vst [vmem:[%s3 + $0x38] sm:$0xf] %v288
  %321 = vst [vmem:[%s3 + $0x3c] sm:$0xf] %v289
  %v322 = vld [vmem:[%s2] sm:$0xf]
  %v323 = vld [vmem:[%s2 + $0x4] sm:$0xf]
  %v324 = vld [vmem:[%s2 + $0x8] sm:$0xf]
  %v325 = vld [vmem:[%s2 + $0xc] sm:$0xf]
  %v326 = vld [vmem:[%s2 + $0x10] sm:$0xf]
  %v327 = vld [vmem:[%s2 + $0x14] sm:$0xf]
  %v328 = vld [vmem:[%s2 + $0x18] sm:$0xf]
  %v329 = vld [vmem:[%s2 + $0x1c] sm:$0xf]
  %v330 = vld [vmem:[%s2 + $0x20] sm:$0xf]
  %v331 = vld [vmem:[%s2 + $0x24] sm:$0xf]
  %v332 = vld [vmem:[%s2 + $0x28] sm:$0xf]
  %v333 = vld [vmem:[%s2 + $0x2c] sm:$0xf]
  %v334 = vld [vmem:[%s2 + $0x30] sm:$0xf]
  %v335 = vld [vmem:[%s2 + $0x34] sm:$0xf]
  %v336 = vld [vmem:[%s2 + $0x38] sm:$0xf]
  %v337 = vld [vmem:[%s2 + $0x3c] sm:$0xf]
  %v354 = vunpack.c.l.b16 %v322
  %v355 = vunpack.c.l.b16 %v323
  %v356 = vunpack.c.l.b16 %v324
  %v357 = vunpack.c.l.b16 %v325
  %v358 = vunpack.c.l.b16 %v326
  %v359 = vunpack.c.l.b16 %v327
  %v360 = vunpack.c.l.b16 %v328
  %v361 = vunpack.c.l.b16 %v329
  %v362 = vunpack.c.l.b16 %v330
  %v363 = vunpack.c.l.b16 %v331
  %v364 = vunpack.c.l.b16 %v332
  %v365 = vunpack.c.l.b16 %v333
  %v366 = vunpack.c.l.b16 %v334
  %v367 = vunpack.c.l.b16 %v335
  %v368 = vunpack.c.l.b16 %v336
  %v369 = vunpack.c.l.b16 %v337
  %v370 = vpack.c.b16 %v355, %v354
  %v371 = vpack.c.b16 %v357, %v356
  %v372 = vpack.c.b16 %v359, %v358
  %v373 = vpack.c.b16 %v361, %v360
  %v374 = vpack.c.b16 %v363, %v362
  %v375 = vpack.c.b16 %v365, %v364
  %v376 = vpack.c.b16 %v367, %v366
  %v377 = vpack.c.b16 %v369, %v368
  %386 = vmatprep.subr.bf16.mxu0 0
  %387 = vmatpush1.bf16.msra.mxu0 %v370
  %388 = vmatprep.subr.bf16.mxu0 0
  %389 = vmatpush1.bf16.msra.mxu0 %v371
  %390 = vmatprep.subr.bf16.mxu0 0
  %391 = vmatpush1.bf16.msra.mxu0 %v372
  %392 = vmatprep.subr.bf16.mxu0 0
  %393 = vmatpush1.bf16.msra.mxu0 %v373
  %394 = vmatprep.subr.bf16.mxu0 0
  %395 = vmatpush1.bf16.msra.mxu0 %v374
  %396 = vmatprep.subr.bf16.mxu0 0
  %397 = vmatpush1.bf16.msra.mxu0 %v375
  %398 = vmatprep.subr.bf16.mxu0 0
  %399 = vmatpush1.bf16.msra.mxu0 %v376
  %400 = vmatprep.subr.bf16.mxu0 0
  %401 = vmatpush1.bf16.msra.mxu0 %v377
  %402 = vmatprep.subr.bf16.mxu0 0
  %403 = vmatpush1.bf16.msra.mxu0 0
  %404 = vmatprep.subr.bf16.mxu0 0
  %405 = vmatpush1.bf16.msra.mxu0 0
  %406 = vmatprep.subr.bf16.mxu0 0
  %407 = vmatpush1.bf16.msra.mxu0 0
  %408 = vmatprep.subr.bf16.mxu0 0
  %409 = vmatpush1.bf16.msra.mxu0 0
  %410 = vmatprep.subr.bf16.mxu0 0
  %411 = vmatpush1.bf16.msra.mxu0 0
  %412 = vmatprep.subr.bf16.mxu0 0
  %413 = vmatpush1.bf16.msra.mxu0 0
  %414 = vmatprep.subr.bf16.mxu0 0
  %415 = vmatpush1.bf16.msra.mxu0 0
  %416 = vmatprep.subr.bf16.mxu0 0
  %417 = vmatpush1.bf16.msra.mxu0 0
  %418 = vmatprep.mubr.bf16.mxu0 0
  %419 = vmatmul.mubr.bf16.gmra.mrb[0].mxu0 %v81
  %v420 = vpop.f32.mrb[0].mxu0
  %v421 = vadd.f32 0.0, %v420
  %v422 = vpop.f32.mrb[0].mxu0
  %v423 = vpop.f32.mrb[0].mxu0
  %v424 = vadd.f32 0.0, %v423
  %v425 = vpop.f32.mrb[0].mxu0
  %426 = vmatprep.mubr.bf16.mxu0 0
  %427 = vmatmul.mubr.bf16.gmra.mrb[0].mxu0 %v82
  %v428 = vpop.f32.mrb[0].mxu0
  %v429 = vadd.f32 0.0, %v428
  %v430 = vpop.f32.mrb[0].mxu0
  %v431 = vpop.f32.mrb[0].mxu0
  %v432 = vadd.f32 0.0, %v431
  %v433 = vpop.f32.mrb[0].mxu0
  %434 = vmatprep.mubr.bf16.mxu0 0
  %435 = vmatmul.mubr.bf16.gmra.mrb[0].mxu0 %v83
  %v436 = vpop.f32.mrb[0].mxu0
  %v437 = vadd.f32 0.0, %v436
  %v438 = vpop.f32.mrb[0].mxu0
  %v439 = vpop.f32.mrb[0].mxu0
  %v440 = vadd.f32 0.0, %v439
  %v441 = vpop.f32.mrb[0].mxu0
  %442 = vmatprep.mubr.bf16.mxu0 0
  %443 = vmatmul.mubr.bf16.gmra.mrb[0].mxu0 %v84
  %v444 = vpop.f32.mrb[0].mxu0
  %v445 = vadd.f32 0.0, %v444
  %v446 = vpop.f32.mrb[0].mxu0
  %v447 = vpop.f32.mrb[0].mxu0
  %v448 = vadd.f32 0.0, %v447
  %v449 = vpop.f32.mrb[0].mxu0
  %450 = vmatprep.mubr.bf16.mxu0 0
  %451 = vmatmul.mubr.bf16.gmra.mrb[0].mxu0 %v85
  %v452 = vpop.f32.mrb[0].mxu0
  %v453 = vadd.f32 0.0, %v452
  %v454 = vpop.f32.mrb[0].mxu0
  %v455 = vpop.f32.mrb[0].mxu0
  %v456 = vadd.f32 0.0, %v455
  %v457 = vpop.f32.mrb[0].mxu0
  %458 = vmatprep.mubr.bf16.mxu0 0
  %459 = vmatmul.mubr.bf16.gmra.mrb[0].mxu0 %v86
  %v460 = vpop.f32.mrb[0].mxu0
  %v461 = vadd.f32 0.0, %v460
  %v462 = vpop.f32.mrb[0].mxu0
  %v463 = vpop.f32.mrb[0].mxu0
  %v464 = vadd.f32 0.0, %v463
  %v465 = vpop.f32.mrb[0].mxu0
  %466 = vmatprep.mubr.bf16.mxu0 0
  %467 = vmatmul.mubr.bf16.gmra.mrb[0].mxu0 %v87
  %v468 = vpop.f32.mrb[0].mxu0
  %v469 = vadd.f32 0.0, %v468
  %v470 = vpop.f32.mrb[0].mxu0
  %v471 = vpop.f32.mrb[0].mxu0
  %v472 = vadd.f32 0.0, %v471
  %v473 = vpop.f32.mrb[0].mxu0
  %474 = vmatprep.mubr.bf16.mxu0 0
  %475 = vmatmul.mubr.bf16.gmra.mrb[0].mxu0 %v88
  %v476 = vpop.f32.mrb[0].mxu0
  %v477 = vadd.f32 0.0, %v476
  %v478 = vpop.f32.mrb[0].mxu0
  %v479 = vpop.f32.mrb[0].mxu0
  %v480 = vadd.f32 0.0, %v479
  %v481 = vpop.f32.mrb[0].mxu0
  %482 = vdwg.mxu0
  %v483 = vpack.c.bf16 %v424, %v421
  %v484 = vpack.c.bf16 %v432, %v429
  %v485 = vpack.c.bf16 %v440, %v437
  %v486 = vpack.c.bf16 %v448, %v445
  %v487 = vpack.c.bf16 %v456, %v453
  %v488 = vpack.c.bf16 %v464, %v461
  %v489 = vpack.c.bf16 %v472, %v469
  %v490 = vpack.c.bf16 %v480, %v477
  %v499 = vunpack.c.l.b16 %v483
  %v500 = vunpack.c.h.b16 %v483
  %v501 = vunpack.c.l.b16 %v484
  %v502 = vunpack.c.h.b16 %v484
  %v503 = vunpack.c.l.b16 %v485
  %v504 = vunpack.c.h.b16 %v485
  %v505 = vunpack.c.l.b16 %v486
  %v506 = vunpack.c.h.b16 %v486
  %v507 = vunpack.c.l.b16 %v487
  %v508 = vunpack.c.h.b16 %v487
  %v509 = vunpack.c.l.b16 %v488
  %v510 = vunpack.c.h.b16 %v488
  %v511 = vunpack.c.l.b16 %v489
  %v512 = vunpack.c.h.b16 %v489
  %v513 = vunpack.c.l.b16 %v490
  %v514 = vunpack.c.h.b16 %v490
  %v515 = vpack.c.b16 %v499, %v499
  %v516 = vpack.c.b16 %v500, %v500
  %v517 = vpack.c.b16 %v501, %v501
  %v518 = vpack.c.b16 %v502, %v502
  %v519 = vpack.c.b16 %v503, %v503
  %v520 = vpack.c.b16 %v504, %v504
  %v521 = vpack.c.b16 %v505, %v505
  %v522 = vpack.c.b16 %v506, %v506
  %v523 = vpack.c.b16 %v507, %v507
  %v524 = vpack.c.b16 %v508, %v508
  %v525 = vpack.c.b16 %v509, %v509
  %v526 = vpack.c.b16 %v510, %v510
  %v527 = vpack.c.b16 %v511, %v511
  %v528 = vpack.c.b16 %v512, %v512
  %v529 = vpack.c.b16 %v513, %v513
  %v530 = vpack.c.b16 %v514, %v514
  %547 = vst [vmem:[%s4] sm:$0xf] %v515
  %548 = vst [vmem:[%s4 + $0x4] sm:$0xf] %v516
  %549 = vst [vmem:[%s4 + $0x8] sm:$0xf] %v517
  %550 = vst [vmem:[%s4 + $0xc] sm:$0xf] %v518
  %551 = vst [vmem:[%s4 + $0x10] sm:$0xf] %v519
  %552 = vst [vmem:[%s4 + $0x14] sm:$0xf] %v520
  %553 = vst [vmem:[%s4 + $0x18] sm:$0xf] %v521
  %554 = vst [vmem:[%s4 + $0x1c] sm:$0xf] %v522
  %555 = vst [vmem:[%s4 + $0x20] sm:$0xf] %v523
  %556 = vst [vmem:[%s4 + $0x24] sm:$0xf] %v524
  %557 = vst [vmem:[%s4 + $0x28] sm:$0xf] %v525
  %558 = vst [vmem:[%s4 + $0x2c] sm:$0xf] %v526
  %559 = vst [vmem:[%s4 + $0x30] sm:$0xf] %v527
  %560 = vst [vmem:[%s4 + $0x34] sm:$0xf] %v528
  %561 = vst [vmem:[%s4 + $0x38] sm:$0xf] %v529
  %562 = vst [vmem:[%s4 + $0x3c] sm:$0xf] %v530
  // Predicated region
  $region14: #{_lambda_.6} parent=0 // pred_check
    _
  $region15: #{_lambda_.6} parent=0 // pred_check_branch
    %564 = sbr.rel (0) target = $region17
  $region16: #{_lambda_.6} parent=0 // pred_region
    _
  $region17: #{_lambda_.6} parent=0 // pred_fallthru
    _
  // Predicated region
  $region18: #{_lambda_.6} parent=0 // pred_check
    _
  $region19: #{_lambda_.6} parent=0 // pred_check_branch
    %566 = sbr.rel (0) target = $region21
  $region20: #{_lambda_.6} parent=0 // pred_region
    _
  $region21: #{_lambda_.6} parent=0 // pred_fallthru
    _
  // Predicated region
  $region22: #{_lambda_.6} parent=0 // pred_check
    _
  $region23: #{_lambda_.6} parent=0 // pred_check_branch
    %568 = sbr.rel (0) target = $region25
  $region24: #{_lambda_.6} parent=0 // pred_region
    _
  $region25: #{_lambda_.6} parent=0 // pred_fallthru
    _
  // Predicated region
  $region26: #{_lambda_.6} parent=0 // pred_check
    _
  $region27: #{_lambda_.6} parent=0 // pred_check_branch
    %570 = sbr.rel (0) target = $region29
  $region28: #{_lambda_.6} parent=0 // pred_region
    _
  $region29: #{_lambda_.6} parent=0 // pred_fallthru
    _

// kernel: _lambda_.7
$region0: #{_lambda_.7}
  #allocation0 [shape = 'u32[]', space=smem, size = 0x4, offset = 0x4, fixed_abs, tag = 'smem constant byte address 0x4 - core index']
  #allocation1 [shape = 'u32[144,128]{1,0:T(1,128)}', space=vmem, size = 0x12000, scoped, tag = 'internal scratch']
  %s0 = inlined_call_operand.vmem [shape: bf16[128,128], index: 0, kind: input, shape index: {}]
  %s1 = inlined_call_operand.vmem [shape: bf16[128,128], index: 1, kind: input, shape index: {}]
  %s2 = inlined_call_operand.vmem [shape: s32[256,1], index: 2, kind: input, shape index: {}]
  %s3 = inlined_call_operand.vmem [shape: s32[256,1], index: 3, kind: input, shape index: {}]
  %s4 = inlined_call_operand.vmem [shape: f32[1,128], index: 4, kind: input, shape index: {}]
  %s5 = inlined_call_operand.vmem [shape: f32[256,128], index: 5, kind: output, shape index: {}]
  %s6 = sld [smem:[#allocation0]]
  $region53: #{_lambda_.7} parent=0
    _
  %s8 = ssub.s32 1, %s6
  %s9 = scalar_select 0, %s8, %s6
  loop: start=0, step=1, limit=4
  $region2: #{_lambda_.7} parent=0 // loop_pre_header
    _
  $region3: #{_lambda_.7} parent=0 // loop_header
    %s11 = sphi 0, %s15
    %p12 = scmp.ge.s32.totalorder %s11, 4
    %s19 = sphi 0, %s19
    %s21 = sphi 0, %s19
    %s22 = sphi 0, %s21
    %s36 = sphi 0, %s22
    %s40 = sphi 0, %s40
    %s42 = sphi 0, %s40
    %s43 = sphi 0, %s42
    %s57 = sphi 0, %s43
    %s63 = sphi 0, %s65
    %s66 = sphi 0, %s63
    %s67 = sphi 0, %s66
    %s83 = sphi 0, %s67
    %s89 = sphi 0, %s91
    %s92 = sphi 0, %s89
    %s93 = sphi 0, %s92
    %s109 = sphi 0, %s93
    %s113 = sphi 0, %s113
    %s115 = sphi 0, %s113
    %s116 = sphi 0, %s115
    %s130 = sphi 0, %s116
    %s136 = sphi 0, %s138
    %s139 = sphi 0, %s136
    %s140 = sphi 0, %s139
    %s156 = sphi 0, %s140
  $region4: #{_lambda_.7} parent=0 // loop_header_branch
    %14 = sbr.rel (%p12) target = $region8
  $region5: #{_lambda_.7} parent=0 // loop_body
    %s16 = ssub.s32 %s11, 1
    %s17 = ssub.s32 %s11, 2
    %s18 = sadd.s32 %s11, 1
    %s20 = sadd.s32 %s19, 1
    %p23 = scmp.eq.s32.totalorder %s11, 1
    %p24 = scmp.ne.s32.totalorder %s19, %s21
    %p25 = scmp.eq.s32.totalorder %s11, 0
    %p26 = por %p24, %p25
    %p27 = scmp.ne.s32.totalorder %s19, %s21
    %p28 = scmp.eq.s32.totalorder %s16, 1
    %p29 = por %p27, %p28
    %p30 = scmp.ne.s32.totalorder %s21, %s22
    %p31 = scmp.eq.s32.totalorder %s16, 0
    %p32 = por %p30, %p31
    %p33 = scmp.ne.s32.totalorder %s21, %s22
    %p34 = scmp.eq.s32.totalorder %s17, 1
    %p35 = por %p33, %p34
    %p37 = scmp.ne.s32.totalorder %s22, %s36
    %p38 = scmp.eq.s32.totalorder %s17, 0
    %p39 = por %p37, %p38
    %s41 = sadd.s32 %s40, 1
    %p44 = scmp.eq.s32.totalorder %s11, 1
    %p45 = scmp.ne.s32.totalorder %s40, %s42
    %p46 = scmp.eq.s32.totalorder %s11, 0
    %p47 = por %p45, %p46
    %p48 = scmp.ne.s32.totalorder %s40, %s42
    %p49 = scmp.eq.s32.totalorder %s16, 1
    %p50 = por %p48, %p49
    %p51 = scmp.ne.s32.totalorder %s42, %s43
    %p52 = scmp.eq.s32.totalorder %s16, 0
    %p53 = por %p51, %p52
    %p54 = scmp.ne.s32.totalorder %s42, %s43
    %p55 = scmp.eq.s32.totalorder %s17, 1
    %p56 = por %p54, %p55
    %p58 = scmp.ne.s32.totalorder %s43, %s57
    %p59 = scmp.eq.s32.totalorder %s17, 0
    %p60 = por %p58, %p59
    %s61 = ssub.s32 %s11, %s18
    %p62 = scmp.eq.s32.totalorder %s61, 0
    %s64 = sadd.s32 %s63, 1
    %s65 = scalar_select %p62, %s63, %s64
    %p68 = pneg %p62
    %p69 = scmp.eq.s32.totalorder %s11, 1
    %p70 = por %p68, %p69
    %p71 = scmp.ne.s32.totalorder %s63, %s66
    %p72 = scmp.eq.s32.totalorder %s11, 0
    %p73 = por %p71, %p72
    %p74 = scmp.ne.s32.totalorder %s63, %s66
    %p75 = scmp.eq.s32.totalorder %s16, 1
    %p76 = por %p74, %p75
    %p77 = scmp.ne.s32.totalorder %s66, %s67
    %p78 = scmp.eq.s32.totalorder %s16, 0
    %p79 = por %p77, %p78
    %p80 = scmp.ne.s32.totalorder %s66, %s67
    %p81 = scmp.eq.s32.totalorder %s17, 1
    %p82 = por %p80, %p81
    %p84 = scmp.ne.s32.totalorder %s67, %s83
    %p85 = scmp.eq.s32.totalorder %s17, 0
    %p86 = por %p84, %p85
    %s87 = ssub.s32 %s11, %s18
    %p88 = scmp.eq.s32.totalorder %s87, 0
    %s90 = sadd.s32 %s89, 1
    %s91 = scalar_select %p88, %s89, %s90
    %p94 = pneg %p88
    %p95 = scmp.eq.s32.totalorder %s11, 1
    %p96 = por %p94, %p95
    %p97 = scmp.ne.s32.totalorder %s89, %s92
    %p98 = scmp.eq.s32.totalorder %s11, 0
    %p99 = por %p97, %p98
    %p100 = scmp.ne.s32.totalorder %s89, %s92
    %p101 = scmp.eq.s32.totalorder %s16, 1
    %p102 = por %p100, %p101
    %p103 = scmp.ne.s32.totalorder %s92, %s93
    %p104 = scmp.eq.s32.totalorder %s16, 0
    %p105 = por %p103, %p104
    %p106 = scmp.ne.s32.totalorder %s92, %s93
    %p107 = scmp.eq.s32.totalorder %s17, 1
    %p108 = por %p106, %p107
    %p110 = scmp.ne.s32.totalorder %s93, %s109
    %p111 = scmp.eq.s32.totalorder %s17, 0
    %p112 = por %p110, %p111
    %s114 = sadd.s32 %s113, 1
    %p117 = scmp.eq.s32.totalorder %s11, 1
    %p118 = scmp.ne.s32.totalorder %s113, %s115
    %p119 = scmp.eq.s32.totalorder %s11, 0
    %p120 = por %p118, %p119
    %p121 = scmp.ne.s32.totalorder %s113, %s115
    %p122 = scmp.eq.s32.totalorder %s16, 1
    %p123 = por %p121, %p122
    %p124 = scmp.ne.s32.totalorder %s115, %s116
    %p125 = scmp.eq.s32.totalorder %s16, 0
    %p126 = por %p124, %p125
    %p127 = scmp.ne.s32.totalorder %s115, %s116
    %p128 = scmp.eq.s32.totalorder %s17, 1
    %p129 = por %p127, %p128
    %p131 = scmp.ne.s32.totalorder %s116, %s130
    %p132 = scmp.eq.s32.totalorder %s17, 0
    %p133 = por %p131, %p132
    %s134 = ssub.s32 %s11, %s18
    %p135 = scmp.eq.s32.totalorder %s134, 0
    %s137 = sadd.s32 %s136, 1
    %s138 = scalar_select %p135, %s136, %s137
    %p141 = pneg %p135
    %p142 = scmp.eq.s32.totalorder %s11, 1
    %p143 = por %p141, %p142
    %p144 = scmp.ne.s32.totalorder %s136, %s139
    %p145 = scmp.eq.s32.totalorder %s11, 0
    %p146 = por %p144, %p145
    %p147 = scmp.ne.s32.totalorder %s136, %s139
    %p148 = scmp.eq.s32.totalorder %s16, 1
    %p149 = por %p147, %p148
    %p150 = scmp.ne.s32.totalorder %s139, %s140
    %p151 = scmp.eq.s32.totalorder %s16, 0
    %p152 = por %p150, %p151
    %p153 = scmp.ne.s32.totalorder %s139, %s140
    %p154 = scmp.eq.s32.totalorder %s17, 1
    %p155 = por %p153, %p154
    %p157 = scmp.ne.s32.totalorder %s140, %s156
    %p158 = scmp.eq.s32.totalorder %s17, 0
    %p159 = por %p157, %p158
    %p160 = scmp.le.s32.totalorder 1, %s11
    %p161 = scmp.lt.s32.totalorder %s11, 3
    %p162 = pnand %p160, %p161
    %p163 = pneg %p162
    // Predicated region
    $region9: #{_lambda_.7} parent=5 // pred_check
      _
    $region10: #{_lambda_.7} parent=5 // pred_check_branch
      %165 = sbr.rel (%p162) target = $region12
    $region11: #{_lambda_.7} parent=5 // pred_region
      %s166 = ssub.s32 %s11, 1
      // Predicated region
      $region13: #{_lambda_.7} parent=11 // pred_check
        %p167 = pneg %p32
      $region14: #{_lambda_.7} parent=11 // pred_check_branch
        %169 = sbr.rel (%p167) target = $region16
      $region15: #{_lambda_.7} parent=11 // pred_region
        _
      $region16: #{_lambda_.7} parent=11 // pred_fallthru
        _
      // Predicated region
      $region17: #{_lambda_.7} parent=11 // pred_check
        %p170 = pneg %p53
      $region18: #{_lambda_.7} parent=11 // pred_check_branch
        %172 = sbr.rel (%p170) target = $region20
      $region19: #{_lambda_.7} parent=11 // pred_region
        _
      $region20: #{_lambda_.7} parent=11 // pred_fallthru
        _
      // Predicated region
      $region21: #{_lambda_.7} parent=11 // pred_check
        %p173 = pneg %p126
      $region22: #{_lambda_.7} parent=11 // pred_check_branch
        %175 = sbr.rel (%p173) target = $region24
      $region23: #{_lambda_.7} parent=11 // pred_region
        _
      $region24: #{_lambda_.7} parent=11 // pred_fallthru
        _
    $region12: #{_lambda_.7} parent=5 // pred_fallthru
      _
    %p176 = scmp.lt.s32.totalorder %s11, 2
    // Predicated region
    $region25: #{_lambda_.7} parent=5 // pred_check
      %p177 = pneg %p176
    $region26: #{_lambda_.7} parent=5 // pred_check_branch
      %179 = sbr.rel (%p177) target = $region28
    $region27: #{_lambda_.7} parent=5 // pred_region
      // Predicated region
      $region29: #{_lambda_.7} parent=27 // pred_check
        %p180 = pneg %p73
      $region30: #{_lambda_.7} parent=27 // pred_check_branch
        %182 = sbr.rel (%p180) target = $region32
      $region31: #{_lambda_.7} parent=27 // pred_region
        %s183 = smul.u32 16, %s11
        %p184 = scmp.lt.s32.totalorder %s183, 31
        %s185 = scalar_select %p184, %s183, 31
        %s186 = smul.addr %s185, 8
        %s187 = scalar_lea.vmem %s2, %s186
        %s188 = smul.u32 16, %s11
      $region32: #{_lambda_.7} parent=27 // pred_fallthru
        _
      // Predicated region
      $region33: #{_lambda_.7} parent=27 // pred_check
        %p189 = pneg %p99
      $region34: #{_lambda_.7} parent=27 // pred_check_branch
        %191 = sbr.rel (%p189) target = $region36
      $region35: #{_lambda_.7} parent=27 // pred_region
        %s192 = smul.u32 16, %s11
        %p193 = scmp.lt.s32.totalorder %s192, 31
        %s194 = scalar_select %p193, %s192, 31
        %s195 = smul.addr %s194, 8
        %s196 = scalar_lea.vmem %s3, %s195
        %s197 = smul.u32 16, %s11
      $region36: #{_lambda_.7} parent=27 // pred_fallthru
        _
    $region28: #{_lambda_.7} parent=5 // pred_fallthru
      _
    %p198 = scmp.le.s32.totalorder 1, %s11
    %p199 = scmp.lt.s32.totalorder %s11, 3
    %p200 = pnand %p198, %p199
    %p201 = pneg %p200
    // Predicated region
    $region37: #{_lambda_.7} parent=5 // pred_check
      _
    $region38: #{_lambda_.7} parent=5 // pred_check_branch
      %203 = sbr.rel (%p200) target = $region40
    $region39: #{_lambda_.7} parent=5 // pred_region
      %s204 = ssub.s32 %s11, 1
      %p205 = pneg %p32
      %p206 = pneg %p29
      %p207 = pneg %p53
      %p208 = pneg %p50
      %s209 = smul.u32 16, %s16
      %p210 = scmp.lt.s32.totalorder %s209, 31
      %s211 = scalar_select %p210, %s209, 31
      %s212 = smul.addr %s211, 8
      %s213 = scalar_lea.vmem %s2, %s212
      %p214 = pneg %p79
      %p215 = pneg %p76
      %s216 = smul.u32 16, %s16
      %p217 = scmp.lt.s32.totalorder %s216, 31
      %s218 = scalar_select %p217, %s216, 31
      %s219 = smul.addr %s218, 8
      %s220 = scalar_lea.vmem %s3, %s219
      %p221 = pneg %p105
      %p222 = pneg %p102
      %p223 = pneg %p126
      %p224 = pneg %p123
      %p225 = pneg %p152
      %p226 = pneg %p149
      %s227 = smul.u32 16, %s16
      %p228 = scmp.lt.s32.totalorder %s227, 31
      %s229 = scalar_select %p228, %s227, 31
      %s230 = smul.addr %s229, 8
      %s231 = scalar_lea.vmem %s5, %s230
      %s232 = smul.u32 16, %s16
      %p233 = scmp.lt.s32.totalorder %s232, 31
      %s234 = scalar_select %p233, %s232, 31
      %s235 = smul.addr %s234, 8
      %s236 = scalar_lea.vmem %s2, %s235
      %s237 = smul.u32 16, %s16
      %s238 = smul.u32 16, %s16
      %p239 = scmp.lt.s32.totalorder %s238, 31
      %s240 = scalar_select %p239, %s238, 31
      %s241 = smul.addr %s240, 8
      %s242 = scalar_lea.vmem %s3, %s241
      %s243 = smul.u32 16, %s16
      %s244 = smul.u32 16, %s16
      %p245 = scmp.lt.s32.totalorder %s244, 31
      %s246 = scalar_select %p245, %s244, 31
      %s247 = smul.addr %s246, 8
      %s248 = scalar_lea.vmem %s5, %s247
      %s249 = smul.u32 16, %s16
      %v251 = vlaneseq
      %v252 = vand.u32 %v251, 127
      %v253 = vld [vmem:[%s236] sm:$0xff]
      %v254 = vld [vmem:[%s236 + $0x8] sm:$0xff]
      %v255 = vld [vmem:[%s236 + $0x10] sm:$0xff]
      %v256 = vld [vmem:[%s236 + $0x18] sm:$0xff]
      %v257 = vld [vmem:[%s236 + $0x20] sm:$0xff]
      %v258 = vld [vmem:[%s236 + $0x28] sm:$0xff]
      %v259 = vld [vmem:[%s236 + $0x30] sm:$0xff]
      %v260 = vld [vmem:[%s236 + $0x38] sm:$0xff]
      %v261 = vld [vmem:[%s236 + $0x40] sm:$0xff]
      %v262 = vld [vmem:[%s236 + $0x48] sm:$0xff]
      %v263 = vld [vmem:[%s236 + $0x50] sm:$0xff]
      %v264 = vld [vmem:[%s236 + $0x58] sm:$0xff]
      %v265 = vld [vmem:[%s236 + $0x60] sm:$0xff]
      %v266 = vld [vmem:[%s236 + $0x68] sm:$0xff]
      %v267 = vld [vmem:[%s236 + $0x70] sm:$0xff]
      %v268 = vld [vmem:[%s236 + $0x78] sm:$0xff]
      %269 = vset.pattern.permute.xlu0 0
      %270 = vperm.xlu0 %269, %v253
      %v271 = vpop.permute.xlu0 %270
      %272 = vset.pattern.permute.xlu0 0
      %273 = vperm.xlu0 %272, %v254
      %v274 = vpop.permute.xlu0 %273
      %275 = vset.pattern.permute.xlu0 0
      %276 = vperm.xlu0 %275, %v255
      %v277 = vpop.permute.xlu0 %276
      %278 = vset.pattern.permute.xlu0 0
      %279 = vperm.xlu0 %278, %v256
      %v280 = vpop.permute.xlu0 %279
      %281 = vset.pattern.permute.xlu0 0
      %282 = vperm.xlu0 %281, %v257
      %v283 = vpop.permute.xlu0 %282
      %284 = vset.pattern.permute.xlu0 0
      %285 = vperm.xlu0 %284, %v258
      %v286 = vpop.permute.xlu0 %285
      %287 = vset.pattern.permute.xlu0 0
      %288 = vperm.xlu0 %287, %v259
      %v289 = vpop.permute.xlu0 %288
      %290 = vset.pattern.permute.xlu0 0
      %291 = vperm.xlu0 %290, %v260
      %v292 = vpop.permute.xlu0 %291
      %293 = vset.pattern.permute.xlu0 0
      %294 = vperm.xlu0 %293, %v261
      %v295 = vpop.permute.xlu0 %294
      %296 = vset.pattern.permute.xlu0 0
      %297 = vperm.xlu0 %296, %v262
      %v298 = vpop.permute.xlu0 %297
      %299 = vset.pattern.permute.xlu0 0
      %300 = vperm.xlu0 %299, %v263
      %v301 = vpop.permute.xlu0 %300
      %302 = vset.pattern.permute.xlu0 0
      %303 = vperm.xlu0 %302, %v264
      %v304 = vpop.permute.xlu0 %303
      %305 = vset.pattern.permute.xlu0 0
      %306 = vperm.xlu0 %305, %v265
      %v307 = vpop.permute.xlu0 %306
      %308 = vset.pattern.permute.xlu0 0
      %309 = vperm.xlu0 %308, %v266
      %v310 = vpop.permute.xlu0 %309
      %311 = vset.pattern.permute.xlu0 0
      %312 = vperm.xlu0 %311, %v267
      %v313 = vpop.permute.xlu0 %312
      %314 = vset.pattern.permute.xlu0 0
      %315 = vperm.xlu0 %314, %v268
      %v316 = vpop.permute.xlu0 %315
      %vm317 = vcmp.eq.s32.totalorder %v271, %v252
      %vm318 = vcmp.eq.s32.totalorder %v274, %v252
      %vm319 = vcmp.eq.s32.totalorder %v277, %v252
      %vm320 = vcmp.eq.s32.totalorder %v280, %v252
      %vm321 = vcmp.eq.s32.totalorder %v283, %v252
      %vm322 = vcmp.eq.s32.totalorder %v286, %v252
      %vm323 = vcmp.eq.s32.totalorder %v289, %v252
      %vm324 = vcmp.eq.s32.totalorder %v292, %v252
      %vm325 = vcmp.eq.s32.totalorder %v295, %v252
      %vm326 = vcmp.eq.s32.totalorder %v298, %v252
      %vm327 = vcmp.eq.s32.totalorder %v301, %v252
      %vm328 = vcmp.eq.s32.totalorder %v304, %v252
      %vm329 = vcmp.eq.s32.totalorder %v307, %v252
      %vm330 = vcmp.eq.s32.totalorder %v310, %v252
      %vm331 = vcmp.eq.s32.totalorder %v313, %v252
      %vm332 = vcmp.eq.s32.totalorder %v316, %v252
      %v333 = vsel %vm317, 1.0, 0.0
      %v334 = vsel %vm318, 1.0, 0.0
      %v335 = vsel %vm319, 1.0, 0.0
      %v336 = vsel %vm320, 1.0, 0.0
      %v337 = vsel %vm321, 1.0, 0.0
      %v338 = vsel %vm322, 1.0, 0.0
      %v339 = vsel %vm323, 1.0, 0.0
      %v340 = vsel %vm324, 1.0, 0.0
      %v341 = vsel %vm325, 1.0, 0.0
      %v342 = vsel %vm326, 1.0, 0.0
      %v343 = vsel %vm327, 1.0, 0.0
      %v344 = vsel %vm328, 1.0, 0.0
      %v345 = vsel %vm329, 1.0, 0.0
      %v346 = vsel %vm330, 1.0, 0.0
      %v347 = vsel %vm331, 1.0, 0.0
      %v348 = vsel %vm332, 1.0, 0.0
      %v349 = vpack.c.bf16 %v334, %v333
      %v350 = vpack.c.bf16 %v336, %v335
      %v351 = vpack.c.bf16 %v338, %v337
      %v352 = vpack.c.bf16 %v340, %v339
      %v353 = vpack.c.bf16 %v342, %v341
      %v354 = vpack.c.bf16 %v344, %v343
      %v355 = vpack.c.bf16 %v346, %v345
      %v356 = vpack.c.bf16 %v348, %v347
      %v357 = vld [vmem:[%s242] sm:$0xff]
      %v358 = vld [vmem:[%s242 + $0x8] sm:$0xff]
      %v359 = vld [vmem:[%s242 + $0x10] sm:$0xff]
      %v360 = vld [vmem:[%s242 + $0x18] sm:$0xff]
      %v361 = vld [vmem:[%s242 + $0x20] sm:$0xff]
      %v362 = vld [vmem:[%s242 + $0x28] sm:$0xff]
      %v363 = vld [vmem:[%s242 + $0x30] sm:$0xff]
      %v364 = vld [vmem:[%s242 + $0x38] sm:$0xff]
      %v365 = vld [vmem:[%s242 + $0x40] sm:$0xff]
      %v366 = vld [vmem:[%s242 + $0x48] sm:$0xff]
      %v367 = vld [vmem:[%s242 + $0x50] sm:$0xff]
      %v368 = vld [vmem:[%s242 + $0x58] sm:$0xff]
      %v369 = vld [vmem:[%s242 + $0x60] sm:$0xff]
      %v370 = vld [vmem:[%s242 + $0x68] sm:$0xff]
      %v371 = vld [vmem:[%s242 + $0x70] sm:$0xff]
      %v372 = vld [vmem:[%s242 + $0x78] sm:$0xff]
      %373 = vset.pattern.permute.xlu0 0
      %374 = vperm.xlu0 %373, %v357
      %v375 = vpop.permute.xlu0 %374
      %376 = vset.pattern.permute.xlu0 0
      %377 = vperm.xlu0 %376, %v358
      %v378 = vpop.permute.xlu0 %377
      %379 = vset.pattern.permute.xlu0 0
      %380 = vperm.xlu0 %379, %v359
      %v381 = vpop.permute.xlu0 %380
      %382 = vset.pattern.permute.xlu0 0
      %383 = vperm.xlu0 %382, %v360
      %v384 = vpop.permute.xlu0 %383
      %385 = vset.pattern.permute.xlu0 0
      %386 = vperm.xlu0 %385, %v361
      %v387 = vpop.permute.xlu0 %386
      %388 = vset.pattern.permute.xlu0 0
      %389 = vperm.xlu0 %388, %v362
      %v390 = vpop.permute.xlu0 %389
      %391 = vset.pattern.permute.xlu0 0
      %392 = vperm.xlu0 %391, %v363
      %v393 = vpop.permute.xlu0 %392
      %394 = vset.pattern.permute.xlu0 0
      %395 = vperm.xlu0 %394, %v364
      %v396 = vpop.permute.xlu0 %395
      %397 = vset.pattern.permute.xlu0 0
      %398 = vperm.xlu0 %397, %v365
      %v399 = vpop.permute.xlu0 %398
      %400 = vset.pattern.permute.xlu0 0
      %401 = vperm.xlu0 %400, %v366
      %v402 = vpop.permute.xlu0 %401
      %403 = vset.pattern.permute.xlu0 0
      %404 = vperm.xlu0 %403, %v367
      %v405 = vpop.permute.xlu0 %404
      %406 = vset.pattern.permute.xlu0 0
      %407 = vperm.xlu0 %406, %v368
      %v408 = vpop.permute.xlu0 %407
      %409 = vset.pattern.permute.xlu0 0
      %410 = vperm.xlu0 %409, %v369
      %v411 = vpop.permute.xlu0 %410
      %412 = vset.pattern.permute.xlu0 0
      %413 = vperm.xlu0 %412, %v370
      %v414 = vpop.permute.xlu0 %413
      %415 = vset.pattern.permute.xlu0 0
      %416 = vperm.xlu0 %415, %v371
      %v417 = vpop.permute.xlu0 %416
      %418 = vset.pattern.permute.xlu0 0
      %419 = vperm.xlu0 %418, %v372
      %v420 = vpop.permute.xlu0 %419
      %vm421 = vcmp.eq.s32.totalorder %v375, %v252
      %vm422 = vcmp.eq.s32.totalorder %v378, %v252
      %vm423 = vcmp.eq.s32.totalorder %v381, %v252
      %vm424 = vcmp.eq.s32.totalorder %v384, %v252
      %vm425 = vcmp.eq.s32.totalorder %v387, %v252
      %vm426 = vcmp.eq.s32.totalorder %v390, %v252
      %vm427 = vcmp.eq.s32.totalorder %v393, %v252
      %vm428 = vcmp.eq.s32.totalorder %v396, %v252
      %vm429 = vcmp.eq.s32.totalorder %v399, %v252
      %vm430 = vcmp.eq.s32.totalorder %v402, %v252
      %vm431 = vcmp.eq.s32.totalorder %v405, %v252
      %vm432 = vcmp.eq.s32.totalorder %v408, %v252
      %vm433 = vcmp.eq.s32.totalorder %v411, %v252
      %vm434 = vcmp.eq.s32.totalorder %v414, %v252
      %vm435 = vcmp.eq.s32.totalorder %v417, %v252
      %vm436 = vcmp.eq.s32.totalorder %v420, %v252
      %v437 = vsel %vm421, 1.0, 0.0
      %v438 = vsel %vm422, 1.0, 0.0
      %v439 = vsel %vm423, 1.0, 0.0
      %v440 = vsel %vm424, 1.0, 0.0
      %v441 = vsel %vm425, 1.0, 0.0
      %v442 = vsel %vm426, 1.0, 0.0
      %v443 = vsel %vm427, 1.0, 0.0
      %v444 = vsel %vm428, 1.0, 0.0
      %v445 = vsel %vm429, 1.0, 0.0
      %v446 = vsel %vm430, 1.0, 0.0
      %v447 = vsel %vm431, 1.0, 0.0
      %v448 = vsel %vm432, 1.0, 0.0
      %v449 = vsel %vm433, 1.0, 0.0
      %v450 = vsel %vm434, 1.0, 0.0
      %v451 = vsel %vm435, 1.0, 0.0
      %v452 = vsel %vm436, 1.0, 0.0
      %v453 = vpack.c.bf16 %v438, %v437
      %v454 = vpack.c.bf16 %v440, %v439
      %v455 = vpack.c.bf16 %v442, %v441
      %v456 = vpack.c.bf16 %v444, %v443
      %v457 = vpack.c.bf16 %v446, %v445
      %v458 = vpack.c.bf16 %v448, %v447
      %v459 = vpack.c.bf16 %v450, %v449
      %v460 = vpack.c.bf16 %v452, %v451
      %v461 = vld [vmem:[%s0] sm:$0xf]
      %v462 = vld [vmem:[%s0 + $0x4] sm:$0xf]
      %v463 = vld [vmem:[%s0 + $0x8] sm:$0xf]
      %v464 = vld [vmem:[%s0 + $0xc] sm:$0xf]
      %v465 = vld [vmem:[%s0 + $0x10] sm:$0xf]
      %v466 = vld [vmem:[%s0 + $0x14] sm:$0xf]
      %v467 = vld [vmem:[%s0 + $0x18] sm:$0xf]
      %v468 = vld [vmem:[%s0 + $0x1c] sm:$0xf]
      %v469 = vld [vmem:[%s0 + $0x20] sm:$0xf]
      %v470 = vld [vmem:[%s0 + $0x24] sm:$0xf]
      %v471 = vld [vmem:[%s0 + $0x28] sm:$0xf]
      %v472 = vld [vmem:[%s0 + $0x2c] sm:$0xf]
      %v473 = vld [vmem:[%s0 + $0x30] sm:$0xf]
      %v474 = vld [vmem:[%s0 + $0x34] sm:$0xf]
      %v475 = vld [vmem:[%s0 + $0x38] sm:$0xf]
      %v476 = vld [vmem:[%s0 + $0x3c] sm:$0xf]
      %v477 = vld [vmem:[%s1] sm:$0xf]
      %v478 = vld [vmem:[%s1 + $0x4] sm:$0xf]
      %v479 = vld [vmem:[%s1 + $0x8] sm:$0xf]
      %v480 = vld [vmem:[%s1 + $0xc] sm:$0xf]
      %v481 = vld [vmem:[%s1 + $0x10] sm:$0xf]
      %v482 = vld [vmem:[%s1 + $0x14] sm:$0xf]
      %v483 = vld [vmem:[%s1 + $0x18] sm:$0xf]
      %v484 = vld [vmem:[%s1 + $0x1c] sm:$0xf]
      %v485 = vld [vmem:[%s1 + $0x20] sm:$0xf]
      %v486 = vld [vmem:[%s1 + $0x24] sm:$0xf]
      %v487 = vld [vmem:[%s1 + $0x28] sm:$0xf]
      %v488 = vld [vmem:[%s1 + $0x2c] sm:$0xf]
      %v489 = vld [vmem:[%s1 + $0x30] sm:$0xf]
      %v490 = vld [vmem:[%s1 + $0x34] sm:$0xf]
      %v491 = vld [vmem:[%s1 + $0x38] sm:$0xf]
      %v492 = vld [vmem:[%s1 + $0x3c] sm:$0xf]
      %v509 = vunpack.c.l.b16 %v477
      %v510 = vunpack.c.l.b16 %v478
      %v511 = vunpack.c.l.b16 %v479
      %v512 = vunpack.c.l.b16 %v480
      %v513 = vunpack.c.l.b16 %v481
      %v514 = vunpack.c.l.b16 %v482
      %v515 = vunpack.c.l.b16 %v483
      %v516 = vunpack.c.l.b16 %v484
      %v517 = vunpack.c.l.b16 %v485
      %v518 = vunpack.c.l.b16 %v486
      %v519 = vunpack.c.l.b16 %v487
      %v520 = vunpack.c.l.b16 %v488
      %v521 = vunpack.c.l.b16 %v489
      %v522 = vunpack.c.l.b16 %v490
      %v523 = vunpack.c.l.b16 %v491
      %v524 = vunpack.c.l.b16 %v492
      %v525 = vpack.c.b16 %v510, %v509
      %v526 = vpack.c.b16 %v512, %v511
      %v527 = vpack.c.b16 %v514, %v513
      %v528 = vpack.c.b16 %v516, %v515
      %v529 = vpack.c.b16 %v518, %v517
      %v530 = vpack.c.b16 %v520, %v519
      %v531 = vpack.c.b16 %v522, %v521
      %v532 = vpack.c.b16 %v524, %v523
      %541 = vmatprep.subr.bf16.mxu0 0
      %542 = vmatpush1.bf16.msra.mxu0 %v525
      %543 = vmatprep.subr.bf16.mxu0 0
      %544 = vmatpush1.bf16.msra.mxu0 %v526
      %545 = vmatprep.subr.bf16.mxu0 0
      %546 = vmatpush1.bf16.msra.mxu0 %v527
      %547 = vmatprep.subr.bf16.mxu0 0
      %548 = vmatpush1.bf16.msra.mxu0 %v528
      %549 = vmatprep.subr.bf16.mxu0 0
      %550 = vmatpush1.bf16.msra.mxu0 %v529
      %551 = vmatprep.subr.bf16.mxu0 0
      %552 = vmatpush1.bf16.msra.mxu0 %v530
      %553 = vmatprep.subr.bf16.mxu0 0
      %554 = vmatpush1.bf16.msra.mxu0 %v531
      %555 = vmatprep.subr.bf16.mxu0 0
      %556 = vmatpush1.bf16.msra.mxu0 %v532
      %557 = vmatprep.subr.bf16.mxu0 0
      %558 = vmatpush1.bf16.msra.mxu0 0
      %559 = vmatprep.subr.bf16.mxu0 0
      %560 = vmatpush1.bf16.msra.mxu0 0
      %561 = vmatprep.subr.bf16.mxu0 0
      %562 = vmatpush1.bf16.msra.mxu0 0
      %563 = vmatprep.subr.bf16.mxu0 0
      %564 = vmatpush1.bf16.msra.mxu0 0
      %565 = vmatprep.subr.bf16.mxu0 0
      %566 = vmatpush1.bf16.msra.mxu0 0
      %567 = vmatprep.subr.bf16.mxu0 0
      %568 = vmatpush1.bf16.msra.mxu0 0
      %569 = vmatprep.subr.bf16.mxu0 0
      %570 = vmatpush1.bf16.msra.mxu0 0
      %571 = vmatprep.subr.bf16.mxu0 0
      %572 = vmatpush1.bf16.msra.mxu0 0
      %573 = vmatprep.mubr.bf16.mxu0 0
      %574 = vmatmul.mubr.bf16.gmra.mrb[0].mxu0 %v453
      %v575 = vpop.f32.mrb[0].mxu0
      %v576 = vadd.f32 0.0, %v575
      %v577 = vpop.f32.mrb[0].mxu0
      %v578 = vpop.f32.mrb[0].mxu0
      %v579 = vadd.f32 0.0, %v578
      %v580 = vpop.f32.mrb[0].mxu0
      %581 = vmatprep.mubr.bf16.mxu0 0
      %582 = vmatmul.mubr.bf16.gmra.mrb[0].mxu0 %v454
      %v583 = vpop.f32.mrb[0].mxu0
      %v584 = vadd.f32 0.0, %v583
      %v585 = vpop.f32.mrb[0].mxu0
      %v586 = vpop.f32.mrb[0].mxu0
      %v587 = vadd.f32 0.0, %v586
      %v588 = vpop.f32.mrb[0].mxu0
      %589 = vmatprep.mubr.bf16.mxu0 0
      %590 = vmatmul.mubr.bf16.gmra.mrb[0].mxu0 %v455
      %v591 = vpop.f32.mrb[0].mxu0
      %v592 = vadd.f32 0.0, %v591
      %v593 = vpop.f32.mrb[0].mxu0
      %v594 = vpop.f32.mrb[0].mxu0
      %v595 = vadd.f32 0.0, %v594
      %v596 = vpop.f32.mrb[0].mxu0
      %597 = vmatprep.mubr.bf16.mxu0 0
      %598 = vmatmul.mubr.bf16.gmra.mrb[0].mxu0 %v456
      %v599 = vpop.f32.mrb[0].mxu0
      %v600 = vadd.f32 0.0, %v599
      %v601 = vpop.f32.mrb[0].mxu0
      %v602 = vpop.f32.mrb[0].mxu0
      %v603 = vadd.f32 0.0, %v602
      %v604 = vpop.f32.mrb[0].mxu0
      %605 = vmatprep.mubr.bf16.mxu0 0
      %606 = vmatmul.mubr.bf16.gmra.mrb[0].mxu0 %v457
      %v607 = vpop.f32.mrb[0].mxu0
      %v608 = vadd.f32 0.0, %v607
      %v609 = vpop.f32.mrb[0].mxu0
      %v610 = vpop.f32.mrb[0].mxu0
      %v611 = vadd.f32 0.0, %v610
      %v612 = vpop.f32.mrb[0].mxu0
      %613 = vmatprep.mubr.bf16.mxu0 0
      %614 = vmatmul.mubr.bf16.gmra.mrb[0].mxu0 %v458
      %v615 = vpop.f32.mrb[0].mxu0
      %v616 = vadd.f32 0.0, %v615
      %v617 = vpop.f32.mrb[0].mxu0
      %v618 = vpop.f32.mrb[0].mxu0
      %v619 = vadd.f32 0.0, %v618
      %v620 = vpop.f32.mrb[0].mxu0
      %621 = vmatprep.mubr.bf16.mxu0 0
      %622 = vmatmul.mubr.bf16.gmra.mrb[0].mxu0 %v459
      %v623 = vpop.f32.mrb[0].mxu0
      %v624 = vadd.f32 0.0, %v623
      %v625 = vpop.f32.mrb[0].mxu0
      %v626 = vpop.f32.mrb[0].mxu0
      %v627 = vadd.f32 0.0, %v626
      %v628 = vpop.f32.mrb[0].mxu0
      %629 = vmatprep.mubr.bf16.mxu0 0
      %630 = vmatmul.mubr.bf16.gmra.mrb[0].mxu0 %v460
      %v631 = vpop.f32.mrb[0].mxu0
      %v632 = vadd.f32 0.0, %v631
      %v633 = vpop.f32.mrb[0].mxu0
      %v634 = vpop.f32.mrb[0].mxu0
      %v635 = vadd.f32 0.0, %v634
      %v636 = vpop.f32.mrb[0].mxu0
      %637 = vdwg.mxu0
      %v654 = vunpack.c.l.b16 %v461
      %v655 = vunpack.c.l.b16 %v462
      %v656 = vunpack.c.l.b16 %v463
      %v657 = vunpack.c.l.b16 %v464
      %v658 = vunpack.c.l.b16 %v465
      %v659 = vunpack.c.l.b16 %v466
      %v660 = vunpack.c.l.b16 %v467
      %v661 = vunpack.c.l.b16 %v468
      %v662 = vunpack.c.l.b16 %v469
      %v663 = vunpack.c.l.b16 %v470
      %v664 = vunpack.c.l.b16 %v471
      %v665 = vunpack.c.l.b16 %v472
      %v666 = vunpack.c.l.b16 %v473
      %v667 = vunpack.c.l.b16 %v474
      %v668 = vunpack.c.l.b16 %v475
      %v669 = vunpack.c.l.b16 %v476
      %v670 = vpack.c.b16 %v655, %v654
      %v671 = vpack.c.b16 %v657, %v656
      %v672 = vpack.c.b16 %v659, %v658
      %v673 = vpack.c.b16 %v661, %v660
      %v674 = vpack.c.b16 %v663, %v662
      %v675 = vpack.c.b16 %v665, %v664
      %v676 = vpack.c.b16 %v667, %v666
      %v677 = vpack.c.b16 %v669, %v668
      %686 = vmatprep.subr.bf16.mxu0 0
      %687 = vmatpush1.bf16.msra.mxu0 %v670
      %688 = vmatprep.subr.bf16.mxu0 0
      %689 = vmatpush1.bf16.msra.mxu0 %v671
      %690 = vmatprep.subr.bf16.mxu0 0
      %691 = vmatpush1.bf16.msra.mxu0 %v672
      %692 = vmatprep.subr.bf16.mxu0 0
      %693 = vmatpush1.bf16.msra.mxu0 %v673
      %694 = vmatprep.subr.bf16.mxu0 0
      %695 = vmatpush1.bf16.msra.mxu0 %v674
      %696 = vmatprep.subr.bf16.mxu0 0
      %697 = vmatpush1.bf16.msra.mxu0 %v675
      %698 = vmatprep.subr.bf16.mxu0 0
      %699 = vmatpush1.bf16.msra.mxu0 %v676
      %700 = vmatprep.subr.bf16.mxu0 0
      %701 = vmatpush1.bf16.msra.mxu0 %v677
      %702 = vmatprep.subr.bf16.mxu0 0
      %703 = vmatpush1.bf16.msra.mxu0 0
      %704 = vmatprep.subr.bf16.mxu0 0
      %705 = vmatpush1.bf16.msra.mxu0 0
      %706 = vmatprep.subr.bf16.mxu0 0
      %707 = vmatpush1.bf16.msra.mxu0 0
      %708 = vmatprep.subr.bf16.mxu0 0
      %709 = vmatpush1.bf16.msra.mxu0 0
      %710 = vmatprep.subr.bf16.mxu0 0
      %711 = vmatpush1.bf16.msra.mxu0 0
      %712 = vmatprep.subr.bf16.mxu0 0
      %713 = vmatpush1.bf16.msra.mxu0 0
      %714 = vmatprep.subr.bf16.mxu0 0
      %715 = vmatpush1.bf16.msra.mxu0 0
      %716 = vmatprep.subr.bf16.mxu0 0
      %717 = vmatpush1.bf16.msra.mxu0 0
      %718 = vmatprep.mubr.bf16.mxu0 0
      %719 = vmatmul.mubr.bf16.gmra.mrb[0].mxu0 %v349
      %v720 = vpop.f32.mrb[0].mxu0
      %v721 = vadd.f32 %v576, %v720
      %v722 = vpop.f32.mrb[0].mxu0
      %v723 = vpop.f32.mrb[0].mxu0
      %v724 = vadd.f32 %v579, %v723
      %v725 = vpop.f32.mrb[0].mxu0
      %726 = vmatprep.mubr.bf16.mxu0 0
      %727 = vmatmul.mubr.bf16.gmra.mrb[0].mxu0 %v350
      %v728 = vpop.f32.mrb[0].mxu0
      %v729 = vadd.f32 %v584, %v728
      %v730 = vpop.f32.mrb[0].mxu0
      %v731 = vpop.f32.mrb[0].mxu0
      %v732 = vadd.f32 %v587, %v731
      %v733 = vpop.f32.mrb[0].mxu0
      %734 = vmatprep.mubr.bf16.mxu0 0
      %735 = vmatmul.mubr.bf16.gmra.mrb[0].mxu0 %v351
      %v736 = vpop.f32.mrb[0].mxu0
      %v737 = vadd.f32 %v592, %v736
      %v738 = vpop.f32.mrb[0].mxu0
      %v739 = vpop.f32.mrb[0].mxu0
      %v740 = vadd.f32 %v595, %v739
      %v741 = vpop.f32.mrb[0].mxu0
      %742 = vmatprep.mubr.bf16.mxu0 0
      %743 = vmatmul.mubr.bf16.gmra.mrb[0].mxu0 %v352
      %v744 = vpop.f32.mrb[0].mxu0
      %v745 = vadd.f32 %v600, %v744
      %v746 = vpop.f32.mrb[0].mxu0
      %v747 = vpop.f32.mrb[0].mxu0
      %v748 = vadd.f32 %v603, %v747
      %v749 = vpop.f32.mrb[0].mxu0
      %750 = vmatprep.mubr.bf16.mxu0 0
      %751 = vmatmul.mubr.bf16.gmra.mrb[0].mxu0 %v353
      %v752 = vpop.f32.mrb[0].mxu0
      %v753 = vadd.f32 %v608, %v752
      %v754 = vpop.f32.mrb[0].mxu0
      %v755 = vpop.f32.mrb[0].mxu0
      %v756 = vadd.f32 %v611, %v755
      %v757 = vpop.f32.mrb[0].mxu0
      %758 = vmatprep.mubr.bf16.mxu0 0
      %759 = vmatmul.mubr.bf16.gmra.mrb[0].mxu0 %v354
      %v760 = vpop.f32.mrb[0].mxu0
      %v761 = vadd.f32 %v616, %v760
      %v762 = vpop.f32.mrb[0].mxu0
      %v763 = vpop.f32.mrb[0].mxu0
      %v764 = vadd.f32 %v619, %v763
      %v765 = vpop.f32.mrb[0].mxu0
      %766 = vmatprep.mubr.bf16.mxu0 0
      %767 = vmatmul.mubr.bf16.gmra.mrb[0].mxu0 %v355
      %v768 = vpop.f32.mrb[0].mxu0
      %v769 = vadd.f32 %v624, %v768
      %v770 = vpop.f32.mrb[0].mxu0
      %v771 = vpop.f32.mrb[0].mxu0
      %v772 = vadd.f32 %v627, %v771
      %v773 = vpop.f32.mrb[0].mxu0
      %774 = vmatprep.mubr.bf16.mxu0 0
      %775 = vmatmul.mubr.bf16.gmra.mrb[0].mxu0 %v356
      %v776 = vpop.f32.mrb[0].mxu0
      %v777 = vadd.f32 %v632, %v776
      %v778 = vpop.f32.mrb[0].mxu0
      %v779 = vpop.f32.mrb[0].mxu0
      %v780 = vadd.f32 %v635, %v779
      %v781 = vpop.f32.mrb[0].mxu0
      %782 = vdwg.mxu0
      %v783 = vld [vmem:[%s4] sm:$0x1]
      %v785 = vlaneseq
      %v786 = vshrl.u32 %v785, 7
      %v787 = vsub.s32 0, %v786
      %v788 = vrot.slane %v783, %v787
      %v790 = vadd.f32 %v721, %v788
      %v791 = vadd.f32 %v724, %v788
      %v792 = vadd.f32 %v729, %v788
      %v793 = vadd.f32 %v732, %v788
      %v794 = vadd.f32 %v737, %v788
      %v795 = vadd.f32 %v740, %v788
      %v796 = vadd.f32 %v745, %v788
      %v797 = vadd.f32 %v748, %v788
      %v798 = vadd.f32 %v753, %v788
      %v799 = vadd.f32 %v756, %v788
      %v800 = vadd.f32 %v761, %v788
      %v801 = vadd.f32 %v764, %v788
      %v802 = vadd.f32 %v769, %v788
      %v803 = vadd.f32 %v772, %v788
      %v804 = vadd.f32 %v777, %v788
      %v805 = vadd.f32 %v780, %v788
      %806 = vst [vmem:[%s248] sm:$0xff] %v790
      %807 = vst [vmem:[%s248 + $0x8] sm:$0xff] %v791
      %808 = vst [vmem:[%s248 + $0x10] sm:$0xff] %v792
      %809 = vst [vmem:[%s248 + $0x18] sm:$0xff] %v793
      %810 = vst [vmem:[%s248 + $0x20] sm:$0xff] %v794
      %811 = vst [vmem:[%s248 + $0x28] sm:$0xff] %v795
      %812 = vst [vmem:[%s248 + $0x30] sm:$0xff] %v796
      %813 = vst [vmem:[%s248 + $0x38] sm:$0xff] %v797
      %814 = vst [vmem:[%s248 + $0x40] sm:$0xff] %v798
      %815 = vst [vmem:[%s248 + $0x48] sm:$0xff] %v799
      %816 = vst [vmem:[%s248 + $0x50] sm:$0xff] %v800
      %817 = vst [vmem:[%s248 + $0x58] sm:$0xff] %v801
      %818 = vst [vmem:[%s248 + $0x60] sm:$0xff] %v802
      %819 = vst [vmem:[%s248 + $0x68] sm:$0xff] %v803
      %820 = vst [vmem:[%s248 + $0x70] sm:$0xff] %v804
      %821 = vst [vmem:[%s248 + $0x78] sm:$0xff] %v805
      %s822 = smul.u32 16, %s16
      %p823 = scmp.lt.s32.totalorder %s822, 31
      %s824 = scalar_select %p823, %s822, 31
      %s825 = smul.addr %s824, 8
      %s826 = scalar_lea.vmem %s5, %s825
      // Predicated region
      $region41: #{_lambda_.7} parent=39 // pred_check
        %p827 = pneg %p149
      $region42: #{_lambda_.7} parent=39 // pred_check_branch
        %829 = sbr.rel (%p827) target = $region44
      $region43: #{_lambda_.7} parent=39 // pred_region
        %s830 = smul.u32 16, %s16
      $region44: #{_lambda_.7} parent=39 // pred_fallthru
        _
    $region40: #{_lambda_.7} parent=5 // pred_fallthru
      _
    %p831 = scmp.le.s32.totalorder 2, %s11
    // Predicated region
    $region45: #{_lambda_.7} parent=5 // pred_check
      %p832 = pneg %p831
    $region46: #{_lambda_.7} parent=5 // pred_check_branch
      %834 = sbr.rel (%p832) target = $region48
    $region47: #{_lambda_.7} parent=5 // pred_region
      %s835 = ssub.s32 %s11, 2
      // Predicated region
      $region49: #{_lambda_.7} parent=47 // pred_check
        %p836 = pneg %p155
      $region50: #{_lambda_.7} parent=47 // pred_check_branch
        %838 = sbr.rel (%p836) target = $region52
      $region51: #{_lambda_.7} parent=47 // pred_region
        %s839 = smul.u32 16, %s17
        %p840 = scmp.lt.s32.totalorder %s839, 31
        %s841 = scalar_select %p840, %s839, 31
        %s842 = smul.addr %s841, 8
        %s843 = scalar_lea.vmem %s5, %s842
      $region52: #{_lambda_.7} parent=47 // pred_fallthru
        _
    $region48: #{_lambda_.7} parent=5 // pred_fallthru
      _
  $region6: #{_lambda_.7} parent=0 // loop_footer
    %s15 = sadd.s32 1, %s11
  $region7: #{_lambda_.7} parent=0 // loop_footer_branch
    %10 = sbr.rel target = $region3
  $region8: #{_lambda_.7} parent=0 // loop_exit
    _

// kernel: _lambda_.4
$region0: #{_lambda_.4}
  #allocation0 [shape = 'u32[]', space=smem, size = 0x4, offset = 0x4, fixed_abs, tag = 'smem constant byte address 0x4 - core index']
  #allocation1 [shape = 'u32[144,128]{1,0:T(1,128)}', space=vmem, size = 0x12000, scoped, tag = 'internal scratch']
  #allocation2 [shape = 'f32[128,128]{1,0:T(8,128)}', space=vmem, size = 0x10000, scoped, tag = 'scratch operand']
  %s0 = inlined_call_operand.vmem [shape: bf16[128,128], index: 0, kind: input, shape index: {}]
  %s1 = inlined_call_operand.vmem [shape: bf16[256,128], index: 1, kind: input, shape index: {}]
  %s2 = inlined_call_operand.vmem [shape: s32[256,1], index: 2, kind: input, shape index: {}]
  %s3 = inlined_call_operand.vmem [shape: s32[1,256], index: 3, kind: input, shape index: {}]
  %s4 = inlined_call_operand.vmem [shape: f32[128,1], index: 4, kind: input, shape index: {}]
  %s5 = inlined_call_operand.vmem [shape: bf16[256,128], index: 5, kind: input, shape index: {}]
  %s6 = inlined_call_operand.vmem [shape: f32[1,128], index: 6, kind: input, shape index: {}]
  %s7 = inlined_call_operand.vmem [shape: bf16[256,128], index: 7, kind: input, shape index: {}]
  %s8 = inlined_call_operand.vmem [shape: f32[1,128], index: 8, kind: input, shape index: {}]
  %s9 = inlined_call_operand.vmem [shape: bf16[128,128], index: 9, kind: output, shape index: {}]
  %s10 = sld [smem:[#allocation0]]
  $region77: #{_lambda_.4} parent=0
    _
  %s12 = ssub.s32 1, %s10
  %s13 = scalar_select 0, %s12, %s10
  loop: start=0, step=1, limit=4
  $region2: #{_lambda_.4} parent=0 // loop_pre_header
    _
  $region3: #{_lambda_.4} parent=0 // loop_header
    %s15 = sphi 0, %s19
    %p16 = scmp.ge.s32.totalorder %s15, 4
    %s23 = sphi 0, %s23
    %s25 = sphi 0, %s23
    %s26 = sphi 0, %s25
    %s40 = sphi 0, %s26
    %s46 = sphi 0, %s48
    %s49 = sphi 0, %s46
    %s50 = sphi 0, %s49
    %s66 = sphi 0, %s50
    %s72 = sphi 0, %s74
    %s75 = sphi 0, %s72
    %s76 = sphi 0, %s75
    %s92 = sphi 0, %s76
    %s98 = sphi 0, %s100
    %s101 = sphi 0, %s98
    %s102 = sphi 0, %s101
    %s118 = sphi 0, %s102
    %s122 = sphi 0, %s122
    %s124 = sphi 0, %s122
    %s125 = sphi 0, %s124
    %s139 = sphi 0, %s125
    %s143 = sphi 0, %s143
    %s145 = sphi 0, %s143
    %s146 = sphi 0, %s145
    %s160 = sphi 0, %s146
    %s164 = sphi 0, %s164
    %s166 = sphi 0, %s164
    %s167 = sphi 0, %s166
    %s181 = sphi 0, %s167
    %s185 = sphi 0, %s185
    %s187 = sphi 0, %s185
    %s188 = sphi 0, %s187
    %s202 = sphi 0, %s188
    %s206 = sphi 0, %s206
    %s208 = sphi 0, %s206
    %s209 = sphi 0, %s208
    %s223 = sphi 0, %s209
    %s227 = sphi 0, %s227
    %s229 = sphi 0, %s227
    %s230 = sphi 0, %s229
    %s244 = sphi 0, %s230
  $region4: #{_lambda_.4} parent=0 // loop_header_branch
    %18 = sbr.rel (%p16) target = $region8
  $region5: #{_lambda_.4} parent=0 // loop_body
    %s20 = ssub.s32 %s15, 1
    %s21 = ssub.s32 %s15, 2
    %s22 = sadd.s32 %s15, 1
    %s24 = sadd.s32 %s23, 1
    %p27 = scmp.eq.s32.totalorder %s15, 1
    %p28 = scmp.ne.s32.totalorder %s23, %s25
    %p29 = scmp.eq.s32.totalorder %s15, 0
    %p30 = por %p28, %p29
    %p31 = scmp.ne.s32.totalorder %s23, %s25
    %p32 = scmp.eq.s32.totalorder %s20, 1
    %p33 = por %p31, %p32
    %p34 = scmp.ne.s32.totalorder %s25, %s26
    %p35 = scmp.eq.s32.totalorder %s20, 0
    %p36 = por %p34, %p35
    %p37 = scmp.ne.s32.totalorder %s25, %s26
    %p38 = scmp.eq.s32.totalorder %s21, 1
    %p39 = por %p37, %p38
    %p41 = scmp.ne.s32.totalorder %s26, %s40
    %p42 = scmp.eq.s32.totalorder %s21, 0
    %p43 = por %p41, %p42
    %s44 = ssub.s32 %s15, %s22
    %p45 = scmp.eq.s32.totalorder %s44, 0
    %s47 = sadd.s32 %s46, 1
    %s48 = scalar_select %p45, %s46, %s47
    %p51 = pneg %p45
    %p52 = scmp.eq.s32.totalorder %s15, 1
    %p53 = por %p51, %p52
    %p54 = scmp.ne.s32.totalorder %s46, %s49
    %p55 = scmp.eq.s32.totalorder %s15, 0
    %p56 = por %p54, %p55
    %p57 = scmp.ne.s32.totalorder %s46, %s49
    %p58 = scmp.eq.s32.totalorder %s20, 1
    %p59 = por %p57, %p58
    %p60 = scmp.ne.s32.totalorder %s49, %s50
    %p61 = scmp.eq.s32.totalorder %s20, 0
    %p62 = por %p60, %p61
    %p63 = scmp.ne.s32.totalorder %s49, %s50
    %p64 = scmp.eq.s32.totalorder %s21, 1
    %p65 = por %p63, %p64
    %p67 = scmp.ne.s32.totalorder %s50, %s66
    %p68 = scmp.eq.s32.totalorder %s21, 0
    %p69 = por %p67, %p68
    %s70 = ssub.s32 %s15, %s22
    %p71 = scmp.eq.s32.totalorder %s70, 0
    %s73 = sadd.s32 %s72, 1
    %s74 = scalar_select %p71, %s72, %s73
    %p77 = pneg %p71
    %p78 = scmp.eq.s32.totalorder %s15, 1
    %p79 = por %p77, %p78
    %p80 = scmp.ne.s32.totalorder %s72, %s75
    %p81 = scmp.eq.s32.totalorder %s15, 0
    %p82 = por %p80, %p81
    %p83 = scmp.ne.s32.totalorder %s72, %s75
    %p84 = scmp.eq.s32.totalorder %s20, 1
    %p85 = por %p83, %p84
    %p86 = scmp.ne.s32.totalorder %s75, %s76
    %p87 = scmp.eq.s32.totalorder %s20, 0
    %p88 = por %p86, %p87
    %p89 = scmp.ne.s32.totalorder %s75, %s76
    %p90 = scmp.eq.s32.totalorder %s21, 1
    %p91 = por %p89, %p90
    %p93 = scmp.ne.s32.totalorder %s76, %s92
    %p94 = scmp.eq.s32.totalorder %s21, 0
    %p95 = por %p93, %p94
    %s96 = ssub.s32 %s15, %s22
    %p97 = scmp.eq.s32.totalorder %s96, 0
    %s99 = sadd.s32 %s98, 1
    %s100 = scalar_select %p97, %s98, %s99
    %p103 = pneg %p97
    %p104 = scmp.eq.s32.totalorder %s15, 1
    %p105 = por %p103, %p104
    %p106 = scmp.ne.s32.totalorder %s98, %s101
    %p107 = scmp.eq.s32.totalorder %s15, 0
    %p108 = por %p106, %p107
    %p109 = scmp.ne.s32.totalorder %s98, %s101
    %p110 = scmp.eq.s32.totalorder %s20, 1
    %p111 = por %p109, %p110
    %p112 = scmp.ne.s32.totalorder %s101, %s102
    %p113 = scmp.eq.s32.totalorder %s20, 0
    %p114 = por %p112, %p113
    %p115 = scmp.ne.s32.totalorder %s101, %s102
    %p116 = scmp.eq.s32.totalorder %s21, 1
    %p117 = por %p115, %p116
    %p119 = scmp.ne.s32.totalorder %s102, %s118
    %p120 = scmp.eq.s32.totalorder %s21, 0
    %p121 = por %p119, %p120
    %s123 = sadd.s32 %s122, 1
    %p126 = scmp.eq.s32.totalorder %s15, 1
    %p127 = scmp.ne.s32.totalorder %s122, %s124
    %p128 = scmp.eq.s32.totalorder %s15, 0
    %p129 = por %p127, %p128
    %p130 = scmp.ne.s32.totalorder %s122, %s124
    %p131 = scmp.eq.s32.totalorder %s20, 1
    %p132 = por %p130, %p131
    %p133 = scmp.ne.s32.totalorder %s124, %s125
    %p134 = scmp.eq.s32.totalorder %s20, 0
    %p135 = por %p133, %p134
    %p136 = scmp.ne.s32.totalorder %s124, %s125
    %p137 = scmp.eq.s32.totalorder %s21, 1
    %p138 = por %p136, %p137
    %p140 = scmp.ne.s32.totalorder %s125, %s139
    %p141 = scmp.eq.s32.totalorder %s21, 0
    %p142 = por %p140, %p141
    %s144 = sadd.s32 %s143, 1
    %p147 = scmp.eq.s32.totalorder %s15, 1
    %p148 = scmp.ne.s32.totalorder %s143, %s145
    %p149 = scmp.eq.s32.totalorder %s15, 0
    %p150 = por %p148, %p149
    %p151 = scmp.ne.s32.totalorder %s143, %s145
    %p152 = scmp.eq.s32.totalorder %s20, 1
    %p153 = por %p151, %p152
    %p154 = scmp.ne.s32.totalorder %s145, %s146
    %p155 = scmp.eq.s32.totalorder %s20, 0
    %p156 = por %p154, %p155
    %p157 = scmp.ne.s32.totalorder %s145, %s146
    %p158 = scmp.eq.s32.totalorder %s21, 1
    %p159 = por %p157, %p158
    %p161 = scmp.ne.s32.totalorder %s146, %s160
    %p162 = scmp.eq.s32.totalorder %s21, 0
    %p163 = por %p161, %p162
    %s165 = sadd.s32 %s164, 1
    %p168 = scmp.eq.s32.totalorder %s15, 1
    %p169 = scmp.ne.s32.totalorder %s164, %s166
    %p170 = scmp.eq.s32.totalorder %s15, 0
    %p171 = por %p169, %p170
    %p172 = scmp.ne.s32.totalorder %s164, %s166
    %p173 = scmp.eq.s32.totalorder %s20, 1
    %p174 = por %p172, %p173
    %p175 = scmp.ne.s32.totalorder %s166, %s167
    %p176 = scmp.eq.s32.totalorder %s20, 0
    %p177 = por %p175, %p176
    %p178 = scmp.ne.s32.totalorder %s166, %s167
    %p179 = scmp.eq.s32.totalorder %s21, 1
    %p180 = por %p178, %p179
    %p182 = scmp.ne.s32.totalorder %s167, %s181
    %p183 = scmp.eq.s32.totalorder %s21, 0
    %p184 = por %p182, %p183
    %s186 = sadd.s32 %s185, 1
    %p189 = scmp.eq.s32.totalorder %s15, 1
    %p190 = scmp.ne.s32.totalorder %s185, %s187
    %p191 = scmp.eq.s32.totalorder %s15, 0
    %p192 = por %p190, %p191
    %p193 = scmp.ne.s32.totalorder %s185, %s187
    %p194 = scmp.eq.s32.totalorder %s20, 1
    %p195 = por %p193, %p194
    %p196 = scmp.ne.s32.totalorder %s187, %s188
    %p197 = scmp.eq.s32.totalorder %s20, 0
    %p198 = por %p196, %p197
    %p199 = scmp.ne.s32.totalorder %s187, %s188
    %p200 = scmp.eq.s32.totalorder %s21, 1
    %p201 = por %p199, %p200
    %p203 = scmp.ne.s32.totalorder %s188, %s202
    %p204 = scmp.eq.s32.totalorder %s21, 0
    %p205 = por %p203, %p204
    %s207 = sadd.s32 %s206, 1
    %p210 = scmp.eq.s32.totalorder %s15, 1
    %p211 = scmp.ne.s32.totalorder %s206, %s208
    %p212 = scmp.eq.s32.totalorder %s15, 0
    %p213 = por %p211, %p212
    %p214 = scmp.ne.s32.totalorder %s206, %s208
    %p215 = scmp.eq.s32.totalorder %s20, 1
    %p216 = por %p214, %p215
    %p217 = scmp.ne.s32.totalorder %s208, %s209
    %p218 = scmp.eq.s32.totalorder %s20, 0
    %p219 = por %p217, %p218
    %p220 = scmp.ne.s32.totalorder %s208, %s209
    %p221 = scmp.eq.s32.totalorder %s21, 1
    %p222 = por %p220, %p221
    %p224 = scmp.ne.s32.totalorder %s209, %s223
    %p225 = scmp.eq.s32.totalorder %s21, 0
    %p226 = por %p224, %p225
    %s228 = sadd.s32 %s227, 1
    %p231 = scmp.eq.s32.totalorder %s15, 1
    %p232 = scmp.ne.s32.totalorder %s227, %s229
    %p233 = scmp.eq.s32.totalorder %s15, 0
    %p234 = por %p232, %p233
    %p235 = scmp.ne.s32.totalorder %s227, %s229
    %p236 = scmp.eq.s32.totalorder %s20, 1
    %p237 = por %p235, %p236
    %p238 = scmp.ne.s32.totalorder %s229, %s230
    %p239 = scmp.eq.s32.totalorder %s20, 0
    %p240 = por %p238, %p239
    %p241 = scmp.ne.s32.totalorder %s229, %s230
    %p242 = scmp.eq.s32.totalorder %s21, 1
    %p243 = por %p241, %p242
    %p245 = scmp.ne.s32.totalorder %s230, %s244
    %p246 = scmp.eq.s32.totalorder %s21, 0
    %p247 = por %p245, %p246
    %p248 = scmp.le.s32.totalorder 1, %s15
    %p249 = scmp.lt.s32.totalorder %s15, 3
    %p250 = pnand %p248, %p249
    %p251 = pneg %p250
    // Predicated region
    $region9: #{_lambda_.4} parent=5 // pred_check
      _
    $region10: #{_lambda_.4} parent=5 // pred_check_branch
      %253 = sbr.rel (%p250) target = $region12
    $region11: #{_lambda_.4} parent=5 // pred_region
      %s254 = ssub.s32 %s15, 1
      // Predicated region
      $region13: #{_lambda_.4} parent=11 // pred_check
        %p255 = pneg %p36
      $region14: #{_lambda_.4} parent=11 // pred_check_branch
        %257 = sbr.rel (%p255) target = $region16
      $region15: #{_lambda_.4} parent=11 // pred_region
        _
      $region16: #{_lambda_.4} parent=11 // pred_fallthru
        _
      // Predicated region
      $region17: #{_lambda_.4} parent=11 // pred_check
        %p258 = pneg %p135
      $region18: #{_lambda_.4} parent=11 // pred_check_branch
        %260 = sbr.rel (%p258) target = $region20
      $region19: #{_lambda_.4} parent=11 // pred_region
        _
      $region20: #{_lambda_.4} parent=11 // pred_fallthru
        _
      // Predicated region
      $region21: #{_lambda_.4} parent=11 // pred_check
        %p261 = pneg %p156
      $region22: #{_lambda_.4} parent=11 // pred_check_branch
        %263 = sbr.rel (%p261) target = $region24
      $region23: #{_lambda_.4} parent=11 // pred_region
        _
      $region24: #{_lambda_.4} parent=11 // pred_fallthru
        _
      // Predicated region
      $region25: #{_lambda_.4} parent=11 // pred_check
        %p264 = pneg %p177
      $region26: #{_lambda_.4} parent=11 // pred_check_branch
        %266 = sbr.rel (%p264) target = $region28
      $region27: #{_lambda_.4} parent=11 // pred_region
        _
      $region28: #{_lambda_.4} parent=11 // pred_fallthru
        _
      // Predicated region
      $region29: #{_lambda_.4} parent=11 // pred_check
        %p267 = pneg %p198
      $region30: #{_lambda_.4} parent=11 // pred_check_branch
        %269 = sbr.rel (%p267) target = $region32
      $region31: #{_lambda_.4} parent=11 // pred_region
        _
      $region32: #{_lambda_.4} parent=11 // pred_fallthru
        _
      // Predicated region
      $region33: #{_lambda_.4} parent=11 // pred_check
        %p270 = pneg %p219
      $region34: #{_lambda_.4} parent=11 // pred_check_branch
        %272 = sbr.rel (%p270) target = $region36
      $region35: #{_lambda_.4} parent=11 // pred_region
        _
      $region36: #{_lambda_.4} parent=11 // pred_fallthru
        _
    $region12: #{_lambda_.4} parent=5 // pred_fallthru
      _
    %p273 = scmp.lt.s32.totalorder %s15, 2
    // Predicated region
    $region37: #{_lambda_.4} parent=5 // pred_check
      %p274 = pneg %p273
    $region38: #{_lambda_.4} parent=5 // pred_check_branch
      %276 = sbr.rel (%p274) target = $region40
    $region39: #{_lambda_.4} parent=5 // pred_region
      // Predicated region
      $region41: #{_lambda_.4} parent=39 // pred_check
        %p277 = pneg %p56
      $region42: #{_lambda_.4} parent=39 // pred_check_branch
        %279 = sbr.rel (%p277) target = $region44
      $region43: #{_lambda_.4} parent=39 // pred_region
        %s280 = smul.u32 16, %s15
        %p281 = scmp.lt.s32.totalorder %s280, 31
        %s282 = scalar_select %p281, %s280, 31
        %s283 = smul.addr %s282, 4
        %s284 = scalar_lea.vmem %s1, %s283
        %s285 = smul.u32 16, %s15
      $region44: #{_lambda_.4} parent=39 // pred_fallthru
        _
      // Predicated region
      $region45: #{_lambda_.4} parent=39 // pred_check
        %p286 = pneg %p82
      $region46: #{_lambda_.4} parent=39 // pred_check_branch
        %288 = sbr.rel (%p286) target = $region48
      $region47: #{_lambda_.4} parent=39 // pred_region
        %s289 = smul.u32 16, %s15
        %p290 = scmp.lt.s32.totalorder %s289, 31
        %s291 = scalar_select %p290, %s289, 31
        %s292 = smul.addr %s291, 8
        %s293 = scalar_lea.vmem %s2, %s292
        %s294 = smul.u32 16, %s15
      $region48: #{_lambda_.4} parent=39 // pred_fallthru
        _
      // Predicated region
      $region49: #{_lambda_.4} parent=39 // pred_check
        %p295 = pneg %p108
      $region50: #{_lambda_.4} parent=39 // pred_check_branch
        %297 = sbr.rel (%p295) target = $region52
      $region51: #{_lambda_.4} parent=39 // pred_region
        %p298 = scmp.lt.s32.totalorder %s15, 1
        %s299 = scalar_select %p298, %s15, 1
        %s300 = scalar_lea.vmem %s3, %s299
      $region52: #{_lambda_.4} parent=39 // pred_fallthru
        _
    $region40: #{_lambda_.4} parent=5 // pred_fallthru
      _
    %p301 = scmp.le.s32.totalorder 1, %s15
    %p302 = scmp.lt.s32.totalorder %s15, 3
    %p303 = pnand %p301, %p302
    %p304 = pneg %p303
    // Predicated region
    $region53: #{_lambda_.4} parent=5 // pred_check
      _
    $region54: #{_lambda_.4} parent=5 // pred_check_branch
      %306 = sbr.rel (%p303) target = $region56
    $region55: #{_lambda_.4} parent=5 // pred_region
      %s307 = ssub.s32 %s15, 1
      %p308 = pneg %p36
      %p309 = pneg %p33
      %s310 = smul.u32 16, %s20
      %p311 = scmp.lt.s32.totalorder %s310, 31
      %s312 = scalar_select %p311, %s310, 31
      %s313 = smul.addr %s312, 4
      %s314 = scalar_lea.vmem %s1, %s313
      %p315 = pneg %p62
      %p316 = pneg %p59
      %s317 = smul.u32 16, %s20
      %p318 = scmp.lt.s32.totalorder %s317, 31
      %s319 = scalar_select %p318, %s317, 31
      %s320 = smul.addr %s319, 8
      %s321 = scalar_lea.vmem %s2, %s320
      %p322 = pneg %p88
      %p323 = pneg %p85
      %p324 = scmp.lt.s32.totalorder %s20, 1
      %s325 = scalar_select %p324, %s20, 1
      %s326 = scalar_lea.vmem %s3, %s325
      %p327 = pneg %p114
      %p328 = pneg %p111
      %p329 = pneg %p135
      %p330 = pneg %p132
      %p331 = pneg %p156
      %p332 = pneg %p153
      %p333 = pneg %p177
      %p334 = pneg %p174
      %p335 = pneg %p198
      %p336 = pneg %p195
      %p337 = pneg %p219
      %p338 = pneg %p216
      %p339 = pneg %p240
      %p340 = pneg %p237
      %s341 = smul.u32 16, %s20
      %p342 = scmp.lt.s32.totalorder %s341, 31
      %s343 = scalar_select %p342, %s341, 31
      %s344 = smul.addr %s343, 4
      %s345 = scalar_lea.vmem %s1, %s344
      %s346 = smul.u32 16, %s20
      %s347 = smul.u32 16, %s20
      %p348 = scmp.lt.s32.totalorder %s347, 31
      %s349 = scalar_select %p348, %s347, 31
      %s350 = smul.addr %s349, 8
      %s351 = scalar_lea.vmem %s2, %s350
      %s352 = smul.u32 16, %s20
      %p353 = scmp.lt.s32.totalorder %s20, 1
      %s354 = scalar_select %p353, %s20, 1
      %s355 = scalar_lea.vmem %s3, %s354
      %p357 = scmp.eq.s32.totalorder %s20, 0
      // Predicated region
      $region57: #{_lambda_.4} parent=55 // pred_check
        %p358 = pneg %p357
      $region58: #{_lambda_.4} parent=55 // pred_check_branch
        %360 = sbr.rel (%p358) target = $region60
      $region59: #{_lambda_.4} parent=55 // pred_region
        %361 = vst [vmem:[#allocation2] sm:$0xff] 0.0
        %362 = vst [vmem:[#allocation2 + $0x8] sm:$0xff] 0.0
        %363 = vst [vmem:[#allocation2 + $0x10] sm:$0xff] 0.0
        %364 = vst [vmem:[#allocation2 + $0x18] sm:$0xff] 0.0
        %365 = vst [vmem:[#allocation2 + $0x20] sm:$0xff] 0.0
        %366 = vst [vmem:[#allocation2 + $0x28] sm:$0xff] 0.0
        %367 = vst [vmem:[#allocation2 + $0x30] sm:$0xff] 0.0
        %368 = vst [vmem:[#allocation2 + $0x38] sm:$0xff] 0.0
        %369 = vst [vmem:[#allocation2 + $0x40] sm:$0xff] 0.0
        %370 = vst [vmem:[#allocation2 + $0x48] sm:$0xff] 0.0
        %371 = vst [vmem:[#allocation2 + $0x50] sm:$0xff] 0.0
        %372 = vst [vmem:[#allocation2 + $0x58] sm:$0xff] 0.0
        %373 = vst [vmem:[#allocation2 + $0x60] sm:$0xff] 0.0
        %374 = vst [vmem:[#allocation2 + $0x68] sm:$0xff] 0.0
        %375 = vst [vmem:[#allocation2 + $0x70] sm:$0xff] 0.0
        %376 = vst [vmem:[#allocation2 + $0x78] sm:$0xff] 0.0
      $region60: #{_lambda_.4} parent=55 // pred_fallthru
        _
      %v377 = vlaneseq
      %v378 = vand.u32 %v377, 127
      %v379 = vld [vmem:[%s351] sm:$0xff]
      %v380 = vld [vmem:[%s351 + $0x8] sm:$0xff]
      %v381 = vld [vmem:[%s351 + $0x10] sm:$0xff]
      %v382 = vld [vmem:[%s351 + $0x18] sm:$0xff]
      %v383 = vld [vmem:[%s351 + $0x20] sm:$0xff]
      %v384 = vld [vmem:[%s351 + $0x28] sm:$0xff]
      %v385 = vld [vmem:[%s351 + $0x30] sm:$0xff]
      %v386 = vld [vmem:[%s351 + $0x38] sm:$0xff]
      %v387 = vld [vmem:[%s351 + $0x40] sm:$0xff]
      %v388 = vld [vmem:[%s351 + $0x48] sm:$0xff]
      %v389 = vld [vmem:[%s351 + $0x50] sm:$0xff]
      %v390 = vld [vmem:[%s351 + $0x58] sm:$0xff]
      %v391 = vld [vmem:[%s351 + $0x60] sm:$0xff]
      %v392 = vld [vmem:[%s351 + $0x68] sm:$0xff]
      %v393 = vld [vmem:[%s351 + $0x70] sm:$0xff]
      %v394 = vld [vmem:[%s351 + $0x78] sm:$0xff]
      %395 = vset.pattern.permute.xlu0 0
      %396 = vperm.xlu0 %395, %v379
      %v397 = vpop.permute.xlu0 %396
      %398 = vset.pattern.permute.xlu0 0
      %399 = vperm.xlu0 %398, %v380
      %v400 = vpop.permute.xlu0 %399
      %401 = vset.pattern.permute.xlu0 0
      %402 = vperm.xlu0 %401, %v381
      %v403 = vpop.permute.xlu0 %402
      %404 = vset.pattern.permute.xlu0 0
      %405 = vperm.xlu0 %404, %v382
      %v406 = vpop.permute.xlu0 %405
      %407 = vset.pattern.permute.xlu0 0
      %408 = vperm.xlu0 %407, %v383
      %v409 = vpop.permute.xlu0 %408
      %410 = vset.pattern.permute.xlu0 0
      %411 = vperm.xlu0 %410, %v384
      %v412 = vpop.permute.xlu0 %411
      %413 = vset.pattern.permute.xlu0 0
      %414 = vperm.xlu0 %413, %v385
      %v415 = vpop.permute.xlu0 %414
      %416 = vset.pattern.permute.xlu0 0
      %417 = vperm.xlu0 %416, %v386
      %v418 = vpop.permute.xlu0 %417
      %419 = vset.pattern.permute.xlu0 0
      %420 = vperm.xlu0 %419, %v387
      %v421 = vpop.permute.xlu0 %420
      %422 = vset.pattern.permute.xlu0 0
      %423 = vperm.xlu0 %422, %v388
      %v424 = vpop.permute.xlu0 %423
      %425 = vset.pattern.permute.xlu0 0
      %426 = vperm.xlu0 %425, %v389
      %v427 = vpop.permute.xlu0 %426
      %428 = vset.pattern.permute.xlu0 0
      %429 = vperm.xlu0 %428, %v390
      %v430 = vpop.permute.xlu0 %429
      %431 = vset.pattern.permute.xlu0 0
      %432 = vperm.xlu0 %431, %v391
      %v433 = vpop.permute.xlu0 %432
      %434 = vset.pattern.permute.xlu0 0
      %435 = vperm.xlu0 %434, %v392
      %v436 = vpop.permute.xlu0 %435
      %437 = vset.pattern.permute.xlu0 0
      %438 = vperm.xlu0 %437, %v393
      %v439 = vpop.permute.xlu0 %438
      %440 = vset.pattern.permute.xlu0 0
      %441 = vperm.xlu0 %440, %v394
      %v442 = vpop.permute.xlu0 %441
      %vm443 = vcmp.eq.s32.totalorder %v397, %v378
      %vm444 = vcmp.eq.s32.totalorder %v400, %v378
      %vm445 = vcmp.eq.s32.totalorder %v403, %v378
      %vm446 = vcmp.eq.s32.totalorder %v406, %v378
      %vm447 = vcmp.eq.s32.totalorder %v409, %v378
      %vm448 = vcmp.eq.s32.totalorder %v412, %v378
      %vm449 = vcmp.eq.s32.totalorder %v415, %v378
      %vm450 = vcmp.eq.s32.totalorder %v418, %v378
      %vm451 = vcmp.eq.s32.totalorder %v421, %v378
      %vm452 = vcmp.eq.s32.totalorder %v424, %v378
      %vm453 = vcmp.eq.s32.totalorder %v427, %v378
      %vm454 = vcmp.eq.s32.totalorder %v430, %v378
      %vm455 = vcmp.eq.s32.totalorder %v433, %v378
      %vm456 = vcmp.eq.s32.totalorder %v436, %v378
      %vm457 = vcmp.eq.s32.totalorder %v439, %v378
      %vm458 = vcmp.eq.s32.totalorder %v442, %v378
      %v459 = vsel %vm443, 1.0, 0.0
      %v460 = vsel %vm444, 1.0, 0.0
      %v461 = vsel %vm445, 1.0, 0.0
      %v462 = vsel %vm446, 1.0, 0.0
      %v463 = vsel %vm447, 1.0, 0.0
      %v464 = vsel %vm448, 1.0, 0.0
      %v465 = vsel %vm449, 1.0, 0.0
      %v466 = vsel %vm450, 1.0, 0.0
      %v467 = vsel %vm451, 1.0, 0.0
      %v468 = vsel %vm452, 1.0, 0.0
      %v469 = vsel %vm453, 1.0, 0.0
      %v470 = vsel %vm454, 1.0, 0.0
      %v471 = vsel %vm455, 1.0, 0.0
      %v472 = vsel %vm456, 1.0, 0.0
      %v473 = vsel %vm457, 1.0, 0.0
      %v474 = vsel %vm458, 1.0, 0.0
      %v475 = vpack.c.bf16 %v460, %v459
      %v476 = vpack.c.bf16 %v462, %v461
      %v477 = vpack.c.bf16 %v464, %v463
      %v478 = vpack.c.bf16 %v466, %v465
      %v479 = vpack.c.bf16 %v468, %v467
      %v480 = vpack.c.bf16 %v470, %v469
      %v481 = vpack.c.bf16 %v472, %v471
      %v482 = vpack.c.bf16 %v474, %v473
      %v483 = vld [vmem:[%s0] sm:$0xf]
      %v484 = vld [vmem:[%s0 + $0x4] sm:$0xf]
      %v485 = vld [vmem:[%s0 + $0x8] sm:$0xf]
      %v486 = vld [vmem:[%s0 + $0xc] sm:$0xf]
      %v487 = vld [vmem:[%s0 + $0x10] sm:$0xf]
      %v488 = vld [vmem:[%s0 + $0x14] sm:$0xf]
      %v489 = vld [vmem:[%s0 + $0x18] sm:$0xf]
      %v490 = vld [vmem:[%s0 + $0x1c] sm:$0xf]
      %v491 = vld [vmem:[%s0 + $0x20] sm:$0xf]
      %v492 = vld [vmem:[%s0 + $0x24] sm:$0xf]
      %v493 = vld [vmem:[%s0 + $0x28] sm:$0xf]
      %v494 = vld [vmem:[%s0 + $0x2c] sm:$0xf]
      %v495 = vld [vmem:[%s0 + $0x30] sm:$0xf]
      %v496 = vld [vmem:[%s0 + $0x34] sm:$0xf]
      %v497 = vld [vmem:[%s0 + $0x38] sm:$0xf]
      %v498 = vld [vmem:[%s0 + $0x3c] sm:$0xf]
      %v515 = vunpack.c.l.b16 %v483
      %v516 = vunpack.c.l.b16 %v484
      %v517 = vunpack.c.l.b16 %v485
      %v518 = vunpack.c.l.b16 %v486
      %v519 = vunpack.c.l.b16 %v487
      %v520 = vunpack.c.l.b16 %v488
      %v521 = vunpack.c.l.b16 %v489
      %v522 = vunpack.c.l.b16 %v490
      %v523 = vunpack.c.l.b16 %v491
      %v524 = vunpack.c.l.b16 %v492
      %v525 = vunpack.c.l.b16 %v493
      %v526 = vunpack.c.l.b16 %v494
      %v527 = vunpack.c.l.b16 %v495
      %v528 = vunpack.c.l.b16 %v496
      %v529 = vunpack.c.l.b16 %v497
      %v530 = vunpack.c.l.b16 %v498
      %v531 = vpack.c.b16 %v516, %v515
      %v532 = vpack.c.b16 %v518, %v517
      %v533 = vpack.c.b16 %v520, %v519
      %v534 = vpack.c.b16 %v522, %v521
      %v535 = vpack.c.b16 %v524, %v523
      %v536 = vpack.c.b16 %v526, %v525
      %v537 = vpack.c.b16 %v528, %v527
      %v538 = vpack.c.b16 %v530, %v529
      %547 = vmatprep.subr.bf16.mxu0 0
      %548 = vmatpush1.bf16.msra.mxu0 %v531
      %549 = vmatprep.subr.bf16.mxu0 0
      %550 = vmatpush1.bf16.msra.mxu0 %v532
      %551 = vmatprep.subr.bf16.mxu0 0
      %552 = vmatpush1.bf16.msra.mxu0 %v533
      %553 = vmatprep.subr.bf16.mxu0 0
      %554 = vmatpush1.bf16.msra.mxu0 %v534
      %555 = vmatprep.subr.bf16.mxu0 0
      %556 = vmatpush1.bf16.msra.mxu0 %v535
      %557 = vmatprep.subr.bf16.mxu0 0
      %558 = vmatpush1.bf16.msra.mxu0 %v536
      %559 = vmatprep.subr.bf16.mxu0 0
      %560 = vmatpush1.bf16.msra.mxu0 %v537
      %561 = vmatprep.subr.bf16.mxu0 0
      %562 = vmatpush1.bf16.msra.mxu0 %v538
      %563 = vmatprep.subr.bf16.mxu0 0
      %564 = vmatpush1.bf16.msra.mxu0 0
      %565 = vmatprep.subr.bf16.mxu0 0
      %566 = vmatpush1.bf16.msra.mxu0 0
      %567 = vmatprep.subr.bf16.mxu0 0
      %568 = vmatpush1.bf16.msra.mxu0 0
      %569 = vmatprep.subr.bf16.mxu0 0
      %570 = vmatpush1.bf16.msra.mxu0 0
      %571 = vmatprep.subr.bf16.mxu0 0
      %572 = vmatpush1.bf16.msra.mxu0 0
      %573 = vmatprep.subr.bf16.mxu0 0
      %574 = vmatpush1.bf16.msra.mxu0 0
      %575 = vmatprep.subr.bf16.mxu0 0
      %576 = vmatpush1.bf16.msra.mxu0 0
      %577 = vmatprep.subr.bf16.mxu0 0
      %578 = vmatpush1.bf16.msra.mxu0 0
      %579 = vmatprep.mubr.bf16.mxu0 0
      %580 = vmatmul.mubr.bf16.gmra.mrb[0].mxu0 %v475
      %v581 = vpop.f32.mrb[0].mxu0
      %v582 = vadd.f32 0.0, %v581
      %v583 = vpop.f32.mrb[0].mxu0
      %v584 = vpop.f32.mrb[0].mxu0
      %v585 = vadd.f32 0.0, %v584
      %v586 = vpop.f32.mrb[0].mxu0
      %587 = vmatprep.mubr.bf16.mxu0 0
      %588 = vmatmul.mubr.bf16.gmra.mrb[0].mxu0 %v476
      %v589 = vpop.f32.mrb[0].mxu0
      %v590 = vadd.f32 0.0, %v589
      %v591 = vpop.f32.mrb[0].mxu0
      %v592 = vpop.f32.mrb[0].mxu0
      %v593 = vadd.f32 0.0, %v592
      %v594 = vpop.f32.mrb[0].mxu0
      %595 = vmatprep.mubr.bf16.mxu0 0
      %596 = vmatmul.mubr.bf16.gmra.mrb[0].mxu0 %v477
      %v597 = vpop.f32.mrb[0].mxu0
      %v598 = vadd.f32 0.0, %v597
      %v599 = vpop.f32.mrb[0].mxu0
      %v600 = vpop.f32.mrb[0].mxu0
      %v601 = vadd.f32 0.0, %v600
      %v602 = vpop.f32.mrb[0].mxu0
      %603 = vmatprep.mubr.bf16.mxu0 0
      %604 = vmatmul.mubr.bf16.gmra.mrb[0].mxu0 %v478
      %v605 = vpop.f32.mrb[0].mxu0
      %v606 = vadd.f32 0.0, %v605
      %v607 = vpop.f32.mrb[0].mxu0
      %v608 = vpop.f32.mrb[0].mxu0
      %v609 = vadd.f32 0.0, %v608
      %v610 = vpop.f32.mrb[0].mxu0
      %611 = vmatprep.mubr.bf16.mxu0 0
      %612 = vmatmul.mubr.bf16.gmra.mrb[0].mxu0 %v479
      %v613 = vpop.f32.mrb[0].mxu0
      %v614 = vadd.f32 0.0, %v613
      %v615 = vpop.f32.mrb[0].mxu0
      %v616 = vpop.f32.mrb[0].mxu0
      %v617 = vadd.f32 0.0, %v616
      %v618 = vpop.f32.mrb[0].mxu0
      %619 = vmatprep.mubr.bf16.mxu0 0
      %620 = vmatmul.mubr.bf16.gmra.mrb[0].mxu0 %v480
      %v621 = vpop.f32.mrb[0].mxu0
      %v622 = vadd.f32 0.0, %v621
      %v623 = vpop.f32.mrb[0].mxu0
      %v624 = vpop.f32.mrb[0].mxu0
      %v625 = vadd.f32 0.0, %v624
      %v626 = vpop.f32.mrb[0].mxu0
      %627 = vmatprep.mubr.bf16.mxu0 0
      %628 = vmatmul.mubr.bf16.gmra.mrb[0].mxu0 %v481
      %v629 = vpop.f32.mrb[0].mxu0
      %v630 = vadd.f32 0.0, %v629
      %v631 = vpop.f32.mrb[0].mxu0
      %v632 = vpop.f32.mrb[0].mxu0
      %v633 = vadd.f32 0.0, %v632
      %v634 = vpop.f32.mrb[0].mxu0
      %635 = vmatprep.mubr.bf16.mxu0 0
      %636 = vmatmul.mubr.bf16.gmra.mrb[0].mxu0 %v482
      %v637 = vpop.f32.mrb[0].mxu0
      %v638 = vadd.f32 0.0, %v637
      %v639 = vpop.f32.mrb[0].mxu0
      %v640 = vpop.f32.mrb[0].mxu0
      %v641 = vadd.f32 0.0, %v640
      %v642 = vpop.f32.mrb[0].mxu0
      %643 = vdwg.mxu0
      %v644 = vpack.c.bf16 %v585, %v582
      %v645 = vpack.c.bf16 %v593, %v590
      %v646 = vpack.c.bf16 %v601, %v598
      %v647 = vpack.c.bf16 %v609, %v606
      %v648 = vpack.c.bf16 %v617, %v614
      %v649 = vpack.c.bf16 %v625, %v622
      %v650 = vpack.c.bf16 %v633, %v630
      %v651 = vpack.c.bf16 %v641, %v638
      %v652 = vld [vmem:[%s5] sm:$0xf]
      %v653 = vld [vmem:[%s5 + $0x4] sm:$0xf]
      %v654 = vld [vmem:[%s5 + $0x8] sm:$0xf]
      %v655 = vld [vmem:[%s5 + $0xc] sm:$0xf]
      %v656 = vld [vmem:[%s5 + $0x10] sm:$0xf]
      %v657 = vld [vmem:[%s5 + $0x14] sm:$0xf]
      %v658 = vld [vmem:[%s5 + $0x18] sm:$0xf]
      %v659 = vld [vmem:[%s5 + $0x1c] sm:$0xf]
      %v660 = vld [vmem:[%s5 + $0x20] sm:$0xf]
      %v661 = vld [vmem:[%s5 + $0x24] sm:$0xf]
      %v662 = vld [vmem:[%s5 + $0x28] sm:$0xf]
      %v663 = vld [vmem:[%s5 + $0x2c] sm:$0xf]
      %v664 = vld [vmem:[%s5 + $0x30] sm:$0xf]
      %v665 = vld [vmem:[%s5 + $0x34] sm:$0xf]
      %v666 = vld [vmem:[%s5 + $0x38] sm:$0xf]
      %v667 = vld [vmem:[%s5 + $0x3c] sm:$0xf]
      %v668 = vld [vmem:[%s345] sm:$0xf]
      %v669 = vld [vmem:[%s345 + $0x4] sm:$0xf]
      %v670 = vld [vmem:[%s345 + $0x8] sm:$0xf]
      %v671 = vld [vmem:[%s345 + $0xc] sm:$0xf]
      %v672 = vld [vmem:[%s345 + $0x10] sm:$0xf]
      %v673 = vld [vmem:[%s345 + $0x14] sm:$0xf]
      %v674 = vld [vmem:[%s345 + $0x18] sm:$0xf]
      %v675 = vld [vmem:[%s345 + $0x1c] sm:$0xf]
      %v676 = vld [vmem:[%s345 + $0x20] sm:$0xf]
      %v677 = vld [vmem:[%s345 + $0x24] sm:$0xf]
      %v678 = vld [vmem:[%s345 + $0x28] sm:$0xf]
      %v679 = vld [vmem:[%s345 + $0x2c] sm:$0xf]
      %v680 = vld [vmem:[%s345 + $0x30] sm:$0xf]
      %v681 = vld [vmem:[%s345 + $0x34] sm:$0xf]
      %v682 = vld [vmem:[%s345 + $0x38] sm:$0xf]
      %v683 = vld [vmem:[%s345 + $0x3c] sm:$0xf]
      %v684 = vld [vmem:[%s5 + $0x40] sm:$0xf]
      %v685 = vld [vmem:[%s5 + $0x44] sm:$0xf]
      %v686 = vld [vmem:[%s5 + $0x48] sm:$0xf]
      %v687 = vld [vmem:[%s5 + $0x4c] sm:$0xf]
      %v688 = vld [vmem:[%s5 + $0x50] sm:$0xf]
      %v689 = vld [vmem:[%s5 + $0x54] sm:$0xf]
      %v690 = vld [vmem:[%s5 + $0x58] sm:$0xf]
      %v691 = vld [vmem:[%s5 + $0x5c] sm:$0xf]
      %v692 = vld [vmem:[%s5 + $0x60] sm:$0xf]
      %v693 = vld [vmem:[%s5 + $0x64] sm:$0xf]
      %v694 = vld [vmem:[%s5 + $0x68] sm:$0xf]
      %v695 = vld [vmem:[%s5 + $0x6c] sm:$0xf]
      %v696 = vld [vmem:[%s5 + $0x70] sm:$0xf]
      %v697 = vld [vmem:[%s5 + $0x74] sm:$0xf]
      %v698 = vld [vmem:[%s5 + $0x78] sm:$0xf]
      %v699 = vld [vmem:[%s5 + $0x7c] sm:$0xf]
      %v716 = vunpack.c.l.b16 %v668
      %v717 = vunpack.c.l.b16 %v669
      %v718 = vunpack.c.l.b16 %v670
      %v719 = vunpack.c.l.b16 %v671
      %v720 = vunpack.c.l.b16 %v672
      %v721 = vunpack.c.l.b16 %v673
      %v722 = vunpack.c.l.b16 %v674
      %v723 = vunpack.c.l.b16 %v675
      %v724 = vunpack.c.l.b16 %v676
      %v725 = vunpack.c.l.b16 %v677
      %v726 = vunpack.c.l.b16 %v678
      %v727 = vunpack.c.l.b16 %v679
      %v728 = vunpack.c.l.b16 %v680
      %v729 = vunpack.c.l.b16 %v681
      %v730 = vunpack.c.l.b16 %v682
      %v731 = vunpack.c.l.b16 %v683
      %v732 = vpack.c.b16 %v717, %v716
      %v733 = vpack.c.b16 %v719, %v718
      %v734 = vpack.c.b16 %v721, %v720
      %v735 = vpack.c.b16 %v723, %v722
      %v736 = vpack.c.b16 %v725, %v724
      %v737 = vpack.c.b16 %v727, %v726
      %v738 = vpack.c.b16 %v729, %v728
      %v739 = vpack.c.b16 %v731, %v730
      %v764 = vunpack.c.l.b16 %v684
      %v765 = vunpack.c.l.b16 %v685
      %v766 = vunpack.c.l.b16 %v686
      %v767 = vunpack.c.l.b16 %v687
      %v768 = vunpack.c.l.b16 %v688
      %v769 = vunpack.c.l.b16 %v689
      %v770 = vunpack.c.l.b16 %v690
      %v771 = vunpack.c.l.b16 %v691
      %v772 = vunpack.c.l.b16 %v692
      %v773 = vunpack.c.l.b16 %v693
      %v774 = vunpack.c.l.b16 %v694
      %v775 = vunpack.c.l.b16 %v695
      %v776 = vunpack.c.l.b16 %v696
      %v777 = vunpack.c.l.b16 %v697
      %v778 = vunpack.c.l.b16 %v698
      %v779 = vunpack.c.l.b16 %v699
      %v780 = vpack.c.b16 %v765, %v764
      %v781 = vpack.c.b16 %v767, %v766
      %v782 = vpack.c.b16 %v769, %v768
      %v783 = vpack.c.b16 %v771, %v770
      %v784 = vpack.c.b16 %v773, %v772
      %v785 = vpack.c.b16 %v775, %v774
      %v786 = vpack.c.b16 %v777, %v776
      %v787 = vpack.c.b16 %v779, %v778
      %796 = vmatprep.subr.bf16.mxu0 0
      %797 = vmatpush1.bf16.msra.mxu0 %v780
      %798 = vmatprep.subr.bf16.mxu0 0
      %799 = vmatpush1.bf16.msra.mxu0 %v781
      %800 = vmatprep.subr.bf16.mxu0 0
      %801 = vmatpush1.bf16.msra.mxu0 %v782
      %802 = vmatprep.subr.bf16.mxu0 0
      %803 = vmatpush1.bf16.msra.mxu0 %v783
      %804 = vmatprep.subr.bf16.mxu0 0
      %805 = vmatpush1.bf16.msra.mxu0 %v784
      %806 = vmatprep.subr.bf16.mxu0 0
      %807 = vmatpush1.bf16.msra.mxu0 %v785
      %808 = vmatprep.subr.bf16.mxu0 0
      %809 = vmatpush1.bf16.msra.mxu0 %v786
      %810 = vmatprep.subr.bf16.mxu0 0
      %811 = vmatpush1.bf16.msra.mxu0 %v787
      %812 = vmatprep.subr.bf16.mxu0 0
      %813 = vmatpush1.bf16.msra.mxu0 0
      %814 = vmatprep.subr.bf16.mxu0 0
      %815 = vmatpush1.bf16.msra.mxu0 0
      %816 = vmatprep.subr.bf16.mxu0 0
      %817 = vmatpush1.bf16.msra.mxu0 0
      %818 = vmatprep.subr.bf16.mxu0 0
      %819 = vmatpush1.bf16.msra.mxu0 0
      %820 = vmatprep.subr.bf16.mxu0 0
      %821 = vmatpush1.bf16.msra.mxu0 0
      %822 = vmatprep.subr.bf16.mxu0 0
      %823 = vmatpush1.bf16.msra.mxu0 0
      %824 = vmatprep.subr.bf16.mxu0 0
      %825 = vmatpush1.bf16.msra.mxu0 0
      %826 = vmatprep.subr.bf16.mxu0 0
      %827 = vmatpush1.bf16.msra.mxu0 0
      %828 = vmatprep.mubr.bf16.mxu0 0
      %829 = vmatmul.mubr.bf16.gmra.mrb[0].mxu0 %v732
      %v830 = vpop.f32.mrb[0].mxu0
      %v831 = vadd.f32 0.0, %v830
      %v832 = vpop.f32.mrb[0].mxu0
      %v833 = vpop.f32.mrb[0].mxu0
      %v834 = vadd.f32 0.0, %v833
      %v835 = vpop.f32.mrb[0].mxu0
      %836 = vmatprep.mubr.bf16.mxu0 0
      %837 = vmatmul.mubr.bf16.gmra.mrb[0].mxu0 %v733
      %v838 = vpop.f32.mrb[0].mxu0
      %v839 = vadd.f32 0.0, %v838
      %v840 = vpop.f32.mrb[0].mxu0
      %v841 = vpop.f32.mrb[0].mxu0
      %v842 = vadd.f32 0.0, %v841
      %v843 = vpop.f32.mrb[0].mxu0
      %844 = vmatprep.mubr.bf16.mxu0 0
      %845 = vmatmul.mubr.bf16.gmra.mrb[0].mxu0 %v734
      %v846 = vpop.f32.mrb[0].mxu0
      %v847 = vadd.f32 0.0, %v846
      %v848 = vpop.f32.mrb[0].mxu0
      %v849 = vpop.f32.mrb[0].mxu0
      %v850 = vadd.f32 0.0, %v849
      %v851 = vpop.f32.mrb[0].mxu0
      %852 = vmatprep.mubr.bf16.mxu0 0
      %853 = vmatmul.mubr.bf16.gmra.mrb[0].mxu0 %v735
      %v854 = vpop.f32.mrb[0].mxu0
      %v855 = vadd.f32 0.0, %v854
      %v856 = vpop.f32.mrb[0].mxu0
      %v857 = vpop.f32.mrb[0].mxu0
      %v858 = vadd.f32 0.0, %v857
      %v859 = vpop.f32.mrb[0].mxu0
      %860 = vmatprep.mubr.bf16.mxu0 0
      %861 = vmatmul.mubr.bf16.gmra.mrb[0].mxu0 %v736
      %v862 = vpop.f32.mrb[0].mxu0
      %v863 = vadd.f32 0.0, %v862
      %v864 = vpop.f32.mrb[0].mxu0
      %v865 = vpop.f32.mrb[0].mxu0
      %v866 = vadd.f32 0.0, %v865
      %v867 = vpop.f32.mrb[0].mxu0
      %868 = vmatprep.mubr.bf16.mxu0 0
      %869 = vmatmul.mubr.bf16.gmra.mrb[0].mxu0 %v737
      %v870 = vpop.f32.mrb[0].mxu0
      %v871 = vadd.f32 0.0, %v870
      %v872 = vpop.f32.mrb[0].mxu0
      %v873 = vpop.f32.mrb[0].mxu0
      %v874 = vadd.f32 0.0, %v873
      %v875 = vpop.f32.mrb[0].mxu0
      %876 = vmatprep.mubr.bf16.mxu0 0
      %877 = vmatmul.mubr.bf16.gmra.mrb[0].mxu0 %v738
      %v878 = vpop.f32.mrb[0].mxu0
      %v879 = vadd.f32 0.0, %v878
      %v880 = vpop.f32.mrb[0].mxu0
      %v881 = vpop.f32.mrb[0].mxu0
      %v882 = vadd.f32 0.0, %v881
      %v883 = vpop.f32.mrb[0].mxu0
      %884 = vmatprep.mubr.bf16.mxu0 0
      %885 = vmatmul.mubr.bf16.gmra.mrb[0].mxu0 %v739
      %v886 = vpop.f32.mrb[0].mxu0
      %v887 = vadd.f32 0.0, %v886
      %v888 = vpop.f32.mrb[0].mxu0
      %v889 = vpop.f32.mrb[0].mxu0
      %v890 = vadd.f32 0.0, %v889
      %v891 = vpop.f32.mrb[0].mxu0
      %892 = vdwg.mxu0
      %v909 = vunpack.c.l.b16 %v652
      %v910 = vunpack.c.l.b16 %v653
      %v911 = vunpack.c.l.b16 %v654
      %v912 = vunpack.c.l.b16 %v655
      %v913 = vunpack.c.l.b16 %v656
      %v914 = vunpack.c.l.b16 %v657
      %v915 = vunpack.c.l.b16 %v658
      %v916 = vunpack.c.l.b16 %v659
      %v917 = vunpack.c.l.b16 %v660
      %v918 = vunpack.c.l.b16 %v661
      %v919 = vunpack.c.l.b16 %v662
      %v920 = vunpack.c.l.b16 %v663
      %v921 = vunpack.c.l.b16 %v664
      %v922 = vunpack.c.l.b16 %v665
      %v923 = vunpack.c.l.b16 %v666
      %v924 = vunpack.c.l.b16 %v667
      %v925 = vpack.c.b16 %v910, %v909
      %v926 = vpack.c.b16 %v912, %v911
      %v927 = vpack.c.b16 %v914, %v913
      %v928 = vpack.c.b16 %v916, %v915
      %v929 = vpack.c.b16 %v918, %v917
      %v930 = vpack.c.b16 %v920, %v919
      %v931 = vpack.c.b16 %v922, %v921
      %v932 = vpack.c.b16 %v924, %v923
      %941 = vmatprep.subr.bf16.mxu0 0
      %942 = vmatpush1.bf16.msra.mxu0 %v925
      %943 = vmatprep.subr.bf16.mxu0 0
      %944 = vmatpush1.bf16.msra.mxu0 %v926
      %945 = vmatprep.subr.bf16.mxu0 0
      %946 = vmatpush1.bf16.msra.mxu0 %v927
      %947 = vmatprep.subr.bf16.mxu0 0
      %948 = vmatpush1.bf16.msra.mxu0 %v928
      %949 = vmatprep.subr.bf16.mxu0 0
      %950 = vmatpush1.bf16.msra.mxu0 %v929
      %951 = vmatprep.subr.bf16.mxu0 0
      %952 = vmatpush1.bf16.msra.mxu0 %v930
      %953 = vmatprep.subr.bf16.mxu0 0
      %954 = vmatpush1.bf16.msra.mxu0 %v931
      %955 = vmatprep.subr.bf16.mxu0 0
      %956 = vmatpush1.bf16.msra.mxu0 %v932
      %957 = vmatprep.subr.bf16.mxu0 0
      %958 = vmatpush1.bf16.msra.mxu0 0
      %959 = vmatprep.subr.bf16.mxu0 0
      %960 = vmatpush1.bf16.msra.mxu0 0
      %961 = vmatprep.subr.bf16.mxu0 0
      %962 = vmatpush1.bf16.msra.mxu0 0
      %963 = vmatprep.subr.bf16.mxu0 0
      %964 = vmatpush1.bf16.msra.mxu0 0
      %965 = vmatprep.subr.bf16.mxu0 0
      %966 = vmatpush1.bf16.msra.mxu0 0
      %967 = vmatprep.subr.bf16.mxu0 0
      %968 = vmatpush1.bf16.msra.mxu0 0
      %969 = vmatprep.subr.bf16.mxu0 0
      %970 = vmatpush1.bf16.msra.mxu0 0
      %971 = vmatprep.subr.bf16.mxu0 0
      %972 = vmatpush1.bf16.msra.mxu0 0
      %973 = vmatprep.mubr.bf16.mxu0 0
      %974 = vmatmul.mubr.bf16.gmra.mrb[0].mxu0 %v644
      %v975 = vpop.f32.mrb[0].mxu0
      %v976 = vadd.f32 %v831, %v975
      %v977 = vpop.f32.mrb[0].mxu0
      %v978 = vpop.f32.mrb[0].mxu0
      %v979 = vadd.f32 %v834, %v978
      %v980 = vpop.f32.mrb[0].mxu0
      %981 = vmatprep.mubr.bf16.mxu0 0
      %982 = vmatmul.mubr.bf16.gmra.mrb[0].mxu0 %v645
      %v983 = vpop.f32.mrb[0].mxu0
      %v984 = vadd.f32 %v839, %v983
      %v985 = vpop.f32.mrb[0].mxu0
      %v986 = vpop.f32.mrb[0].mxu0
      %v987 = vadd.f32 %v842, %v986
      %v988 = vpop.f32.mrb[0].mxu0
      %989 = vmatprep.mubr.bf16.mxu0 0
      %990 = vmatmul.mubr.bf16.gmra.mrb[0].mxu0 %v646
      %v991 = vpop.f32.mrb[0].mxu0
      %v992 = vadd.f32 %v847, %v991
      %v993 = vpop.f32.mrb[0].mxu0
      %v994 = vpop.f32.mrb[0].mxu0
      %v995 = vadd.f32 %v850, %v994
      %v996 = vpop.f32.mrb[0].mxu0
      %997 = vmatprep.mubr.bf16.mxu0 0
      %998 = vmatmul.mubr.bf16.gmra.mrb[0].mxu0 %v647
      %v999 = vpop.f32.mrb[0].mxu0
      %v1000 = vadd.f32 %v855, %v999
      %v1001 = vpop.f32.mrb[0].mxu0
      %v1002 = vpop.f32.mrb[0].mxu0
      %v1003 = vadd.f32 %v858, %v1002
      %v1004 = vpop.f32.mrb[0].mxu0
      %1005 = vmatprep.mubr.bf16.mxu0 0
      %1006 = vmatmul.mubr.bf16.gmra.mrb[0].mxu0 %v648
      %v1007 = vpop.f32.mrb[0].mxu0
      %v1008 = vadd.f32 %v863, %v1007
      %v1009 = vpop.f32.mrb[0].mxu0
      %v1010 = vpop.f32.mrb[0].mxu0
      %v1011 = vadd.f32 %v866, %v1010
      %v1012 = vpop.f32.mrb[0].mxu0
      %1013 = vmatprep.mubr.bf16.mxu0 0
      %1014 = vmatmul.mubr.bf16.gmra.mrb[0].mxu0 %v649
      %v1015 = vpop.f32.mrb[0].mxu0
      %v1016 = vadd.f32 %v871, %v1015
      %v1017 = vpop.f32.mrb[0].mxu0
      %v1018 = vpop.f32.mrb[0].mxu0
      %v1019 = vadd.f32 %v874, %v1018
      %v1020 = vpop.f32.mrb[0].mxu0
      %1021 = vmatprep.mubr.bf16.mxu0 0
      %1022 = vmatmul.mubr.bf16.gmra.mrb[0].mxu0 %v650
      %v1023 = vpop.f32.mrb[0].mxu0
      %v1024 = vadd.f32 %v879, %v1023
      %v1025 = vpop.f32.mrb[0].mxu0
      %v1026 = vpop.f32.mrb[0].mxu0
      %v1027 = vadd.f32 %v882, %v1026
      %v1028 = vpop.f32.mrb[0].mxu0
      %1029 = vmatprep.mubr.bf16.mxu0 0
      %1030 = vmatmul.mubr.bf16.gmra.mrb[0].mxu0 %v651
      %v1031 = vpop.f32.mrb[0].mxu0
      %v1032 = vadd.f32 %v887, %v1031
      %v1033 = vpop.f32.mrb[0].mxu0
      %v1034 = vpop.f32.mrb[0].mxu0
      %v1035 = vadd.f32 %v890, %v1034
      %v1036 = vpop.f32.mrb[0].mxu0
      %1037 = vdwg.mxu0
      %v1038 = vld [vmem:[%s6] sm:$0x1]
      %v1040 = vlaneseq
      %v1041 = vshrl.u32 %v1040, 7
      %v1042 = vsub.s32 0, %v1041
      %v1043 = vrot.slane %v1038, %v1042
      %v1045 = vadd.f32 %v976, %v1043
      %v1046 = vadd.f32 %v979, %v1043
      %v1047 = vadd.f32 %v984, %v1043
      %v1048 = vadd.f32 %v987, %v1043
      %v1049 = vadd.f32 %v992, %v1043
      %v1050 = vadd.f32 %v995, %v1043
      %v1051 = vadd.f32 %v1000, %v1043
      %v1052 = vadd.f32 %v1003, %v1043
      %v1053 = vadd.f32 %v1008, %v1043
      %v1054 = vadd.f32 %v1011, %v1043
      %v1055 = vadd.f32 %v1016, %v1043
      %v1056 = vadd.f32 %v1019, %v1043
      %v1057 = vadd.f32 %v1024, %v1043
      %v1058 = vadd.f32 %v1027, %v1043
      %v1059 = vadd.f32 %v1032, %v1043
      %v1060 = vadd.f32 %v1035, %v1043
      %v1061 = vlaneseq
      %v1062 = vshrl.u32 %v1061, 7
      %v1063 = vadd.s32 %v1062, 8
      %v1064 = vadd.s32 %v1062, 16
      %v1065 = vadd.s32 %v1062, 24
      %v1066 = vadd.s32 %v1062, 32
      %v1067 = vadd.s32 %v1062, 40
      %v1068 = vadd.s32 %v1062, 48
      %v1069 = vadd.s32 %v1062, 56
      %v1070 = vadd.s32 %v1062, 64
      %v1071 = vadd.s32 %v1062, 72
      %v1072 = vadd.s32 %v1062, 80
      %v1073 = vadd.s32 %v1062, 88
      %v1074 = vadd.s32 %v1062, 96
      %v1075 = vadd.s32 %v1062, 104
      %v1076 = vadd.s32 %v1062, 112
      %v1077 = vadd.s32 %v1062, 120
      %v1078 = vld [vmem:[%s355] sm:$0x1]
      %v1079 = vlaneseq
      %v1080 = vshrl.u32 %v1079, 7
      %v1081 = vsub.s32 0, %v1080
      %v1082 = vrot.slane %v1078, %v1081
      %vm1083 = vcmp.eq.s32.totalorder %v1082, %v1062
      %vm1084 = vcmp.eq.s32.totalorder %v1082, %v1063
      %vm1085 = vcmp.eq.s32.totalorder %v1082, %v1064
      %vm1086 = vcmp.eq.s32.totalorder %v1082, %v1065
      %vm1087 = vcmp.eq.s32.totalorder %v1082, %v1066
      %vm1088 = vcmp.eq.s32.totalorder %v1082, %v1067
      %vm1089 = vcmp.eq.s32.totalorder %v1082, %v1068
      %vm1090 = vcmp.eq.s32.totalorder %v1082, %v1069
      %vm1091 = vcmp.eq.s32.totalorder %v1082, %v1070
      %vm1092 = vcmp.eq.s32.totalorder %v1082, %v1071
      %vm1093 = vcmp.eq.s32.totalorder %v1082, %v1072
      %vm1094 = vcmp.eq.s32.totalorder %v1082, %v1073
      %vm1095 = vcmp.eq.s32.totalorder %v1082, %v1074
      %vm1096 = vcmp.eq.s32.totalorder %v1082, %v1075
      %vm1097 = vcmp.eq.s32.totalorder %v1082, %v1076
      %vm1098 = vcmp.eq.s32.totalorder %v1082, %v1077
      %v1099 = vsel %vm1083, 1.0, 0.0
      %v1100 = vsel %vm1084, 1.0, 0.0
      %v1101 = vsel %vm1085, 1.0, 0.0
      %v1102 = vsel %vm1086, 1.0, 0.0
      %v1103 = vsel %vm1087, 1.0, 0.0
      %v1104 = vsel %vm1088, 1.0, 0.0
      %v1105 = vsel %vm1089, 1.0, 0.0
      %v1106 = vsel %vm1090, 1.0, 0.0
      %v1107 = vsel %vm1091, 1.0, 0.0
      %v1108 = vsel %vm1092, 1.0, 0.0
      %v1109 = vsel %vm1093, 1.0, 0.0
      %v1110 = vsel %vm1094, 1.0, 0.0
      %v1111 = vsel %vm1095, 1.0, 0.0
      %v1112 = vsel %vm1096, 1.0, 0.0
      %v1113 = vsel %vm1097, 1.0, 0.0
      %v1114 = vsel %vm1098, 1.0, 0.0
      %v1115 = vpack.c.bf16 %v1100, %v1099
      %v1116 = vpack.c.bf16 %v1102, %v1101
      %v1117 = vpack.c.bf16 %v1104, %v1103
      %v1118 = vpack.c.bf16 %v1106, %v1105
      %v1119 = vpack.c.bf16 %v1108, %v1107
      %v1120 = vpack.c.bf16 %v1110, %v1109
      %v1121 = vpack.c.bf16 %v1112, %v1111
      %v1122 = vpack.c.bf16 %v1114, %v1113
      %v1123 = vld [vmem:[#allocation2] sm:$0xff]
      %v1124 = vld [vmem:[#allocation2 + $0x8] sm:$0xff]
      %v1125 = vld [vmem:[#allocation2 + $0x10] sm:$0xff]
      %v1126 = vld [vmem:[#allocation2 + $0x18] sm:$0xff]
      %v1127 = vld [vmem:[#allocation2 + $0x20] sm:$0xff]
      %v1128 = vld [vmem:[#allocation2 + $0x28] sm:$0xff]
      %v1129 = vld [vmem:[#allocation2 + $0x30] sm:$0xff]
      %v1130 = vld [vmem:[#allocation2 + $0x38] sm:$0xff]
      %v1131 = vld [vmem:[#allocation2 + $0x40] sm:$0xff]
      %v1132 = vld [vmem:[#allocation2 + $0x48] sm:$0xff]
      %v1133 = vld [vmem:[#allocation2 + $0x50] sm:$0xff]
      %v1134 = vld [vmem:[#allocation2 + $0x58] sm:$0xff]
      %v1135 = vld [vmem:[#allocation2 + $0x60] sm:$0xff]
      %v1136 = vld [vmem:[#allocation2 + $0x68] sm:$0xff]
      %v1137 = vld [vmem:[#allocation2 + $0x70] sm:$0xff]
      %v1138 = vld [vmem:[#allocation2 + $0x78] sm:$0xff]
      %v1139 = vpack.c.bf16 %v1046, %v1045
      %v1140 = vpack.c.bf16 %v1048, %v1047
      %v1141 = vpack.c.bf16 %v1050, %v1049
      %v1142 = vpack.c.bf16 %v1052, %v1051
      %v1143 = vpack.c.bf16 %v1054, %v1053
      %v1144 = vpack.c.bf16 %v1056, %v1055
      %v1145 = vpack.c.bf16 %v1058, %v1057
      %v1146 = vpack.c.bf16 %v1060, %v1059
      %1147 = vmatprep.subr.bf16.mxu0 0
      %1148 = vmatpush1.bf16.msra.mxu0 %v1139
      %1149 = vmatprep.subr.bf16.mxu0 0
      %1150 = vmatpush1.bf16.msra.mxu0 %v1140
      %1151 = vmatprep.subr.bf16.mxu0 0
      %1152 = vmatpush1.bf16.msra.mxu0 %v1141
      %1153 = vmatprep.subr.bf16.mxu0 0
      %1154 = vmatpush1.bf16.msra.mxu0 %v1142
      %1155 = vmatprep.subr.bf16.mxu0 0
      %1156 = vmatpush1.bf16.msra.mxu0 %v1143
      %1157 = vmatprep.subr.bf16.mxu0 0
      %1158 = vmatpush1.bf16.msra.mxu0 %v1144
      %1159 = vmatprep.subr.bf16.mxu0 0
      %1160 = vmatpush1.bf16.msra.mxu0 %v1145
      %1161 = vmatprep.subr.bf16.mxu0 0
      %1162 = vmatpush1.bf16.msra.mxu0 %v1146
      %1163 = vmatprep.subr.bf16.mxu0 0
      %1164 = vmatpush1.bf16.msra.mxu0 0
      %1165 = vmatprep.subr.bf16.mxu0 0
      %1166 = vmatpush1.bf16.msra.mxu0 0
      %1167 = vmatprep.subr.bf16.mxu0 0
      %1168 = vmatpush1.bf16.msra.mxu0 0
      %1169 = vmatprep.subr.bf16.mxu0 0
      %1170 = vmatpush1.bf16.msra.mxu0 0
      %1171 = vmatprep.subr.bf16.mxu0 0
      %1172 = vmatpush1.bf16.msra.mxu0 0
      %1173 = vmatprep.subr.bf16.mxu0 0
      %1174 = vmatpush1.bf16.msra.mxu0 0
      %1175 = vmatprep.subr.bf16.mxu0 0
      %1176 = vmatpush1.bf16.msra.mxu0 0
      %1177 = vmatprep.subr.bf16.mxu0 0
      %1178 = vmatpush1.bf16.msra.mxu0 0
      %1179 = vmatprep.mubr.bf16.mxu0 0
      %1180 = vmatmul.mubr.bf16.gmra.mrb[0].mxu0 %v1115
      %v1181 = vpop.f32.mrb[0].mxu0
      %v1182 = vadd.f32 0.0, %v1181
      %v1183 = vpop.f32.mrb[0].mxu0
      %v1184 = vpop.f32.mrb[0].mxu0
      %v1185 = vadd.f32 0.0, %v1184
      %v1186 = vpop.f32.mrb[0].mxu0
      %1187 = vmatprep.mubr.bf16.mxu0 0
      %1188 = vmatmul.mubr.bf16.gmra.mrb[0].mxu0 %v1116
      %v1189 = vpop.f32.mrb[0].mxu0
      %v1190 = vadd.f32 0.0, %v1189
      %v1191 = vpop.f32.mrb[0].mxu0
      %v1192 = vpop.f32.mrb[0].mxu0
      %v1193 = vadd.f32 0.0, %v1192
      %v1194 = vpop.f32.mrb[0].mxu0
      %1195 = vmatprep.mubr.bf16.mxu0 0
      %1196 = vmatmul.mubr.bf16.gmra.mrb[0].mxu0 %v1117
      %v1197 = vpop.f32.mrb[0].mxu0
      %v1198 = vadd.f32 0.0, %v1197
      %v1199 = vpop.f32.mrb[0].mxu0
      %v1200 = vpop.f32.mrb[0].mxu0
      %v1201 = vadd.f32 0.0, %v1200
      %v1202 = vpop.f32.mrb[0].mxu0
      %1203 = vmatprep.mubr.bf16.mxu0 0
      %1204 = vmatmul.mubr.bf16.gmra.mrb[0].mxu0 %v1118
      %v1205 = vpop.f32.mrb[0].mxu0
      %v1206 = vadd.f32 0.0, %v1205
      %v1207 = vpop.f32.mrb[0].mxu0
      %v1208 = vpop.f32.mrb[0].mxu0
      %v1209 = vadd.f32 0.0, %v1208
      %v1210 = vpop.f32.mrb[0].mxu0
      %1211 = vmatprep.mubr.bf16.mxu0 0
      %1212 = vmatmul.mubr.bf16.gmra.mrb[0].mxu0 %v1119
      %v1213 = vpop.f32.mrb[0].mxu0
      %v1214 = vadd.f32 0.0, %v1213
      %v1215 = vpop.f32.mrb[0].mxu0
      %v1216 = vpop.f32.mrb[0].mxu0
      %v1217 = vadd.f32 0.0, %v1216
      %v1218 = vpop.f32.mrb[0].mxu0
      %1219 = vmatprep.mubr.bf16.mxu0 0
      %1220 = vmatmul.mubr.bf16.gmra.mrb[0].mxu0 %v1120
      %v1221 = vpop.f32.mrb[0].mxu0
      %v1222 = vadd.f32 0.0, %v1221
      %v1223 = vpop.f32.mrb[0].mxu0
      %v1224 = vpop.f32.mrb[0].mxu0
      %v1225 = vadd.f32 0.0, %v1224
      %v1226 = vpop.f32.mrb[0].mxu0
      %1227 = vmatprep.mubr.bf16.mxu0 0
      %1228 = vmatmul.mubr.bf16.gmra.mrb[0].mxu0 %v1121
      %v1229 = vpop.f32.mrb[0].mxu0
      %v1230 = vadd.f32 0.0, %v1229
      %v1231 = vpop.f32.mrb[0].mxu0
      %v1232 = vpop.f32.mrb[0].mxu0
      %v1233 = vadd.f32 0.0, %v1232
      %v1234 = vpop.f32.mrb[0].mxu0
      %1235 = vmatprep.mubr.bf16.mxu0 0
      %1236 = vmatmul.mubr.bf16.gmra.mrb[0].mxu0 %v1122
      %v1237 = vpop.f32.mrb[0].mxu0
      %v1238 = vadd.f32 0.0, %v1237
      %v1239 = vpop.f32.mrb[0].mxu0
      %v1240 = vpop.f32.mrb[0].mxu0
      %v1241 = vadd.f32 0.0, %v1240
      %v1242 = vpop.f32.mrb[0].mxu0
      %1243 = vdwg.mxu0
      %v1244 = vadd.f32 %v1123, %v1182
      %v1245 = vadd.f32 %v1124, %v1185
      %v1246 = vadd.f32 %v1125, %v1190
      %v1247 = vadd.f32 %v1126, %v1193
      %v1248 = vadd.f32 %v1127, %v1198
      %v1249 = vadd.f32 %v1128, %v1201
      %v1250 = vadd.f32 %v1129, %v1206
      %v1251 = vadd.f32 %v1130, %v1209
      %v1252 = vadd.f32 %v1131, %v1214
      %v1253 = vadd.f32 %v1132, %v1217
      %v1254 = vadd.f32 %v1133, %v1222
      %v1255 = vadd.f32 %v1134, %v1225
      %v1256 = vadd.f32 %v1135, %v1230
      %v1257 = vadd.f32 %v1136, %v1233
      %v1258 = vadd.f32 %v1137, %v1238
      %v1259 = vadd.f32 %v1138, %v1241
      %1260 = vst [vmem:[#allocation2] sm:$0xff] %v1244
      %1261 = vst [vmem:[#allocation2 + $0x8] sm:$0xff] %v1245
      %1262 = vst [vmem:[#allocation2 + $0x10] sm:$0xff] %v1246
      %1263 = vst [vmem:[#allocation2 + $0x18] sm:$0xff] %v1247
      %1264 = vst [vmem:[#allocation2 + $0x20] sm:$0xff] %v1248
      %1265 = vst [vmem:[#allocation2 + $0x28] sm:$0xff] %v1249
      %1266 = vst [vmem:[#allocation2 + $0x30] sm:$0xff] %v1250
      %1267 = vst [vmem:[#allocation2 + $0x38] sm:$0xff] %v1251
      %1268 = vst [vmem:[#allocation2 + $0x40] sm:$0xff] %v1252
      %1269 = vst [vmem:[#allocation2 + $0x48] sm:$0xff] %v1253
      %1270 = vst [vmem:[#allocation2 + $0x50] sm:$0xff] %v1254
      %1271 = vst [vmem:[#allocation2 + $0x58] sm:$0xff] %v1255
      %1272 = vst [vmem:[#allocation2 + $0x60] sm:$0xff] %v1256
      %1273 = vst [vmem:[#allocation2 + $0x68] sm:$0xff] %v1257
      %1274 = vst [vmem:[#allocation2 + $0x70] sm:$0xff] %v1258
      %1275 = vst [vmem:[#allocation2 + $0x78] sm:$0xff] %v1259
      %p1276 = scmp.eq.s32.totalorder %s20, 1
      // Predicated region
      $region61: #{_lambda_.4} parent=55 // pred_check
        %p1277 = pneg %p1276
      $region62: #{_lambda_.4} parent=55 // pred_check_branch
        %1279 = sbr.rel (%p1277) target = $region64
      $region63: #{_lambda_.4} parent=55 // pred_region
        %v1280 = vld [vmem:[#allocation2] sm:$0xff]
        %v1281 = vld [vmem:[#allocation2 + $0x8] sm:$0xff]
        %v1282 = vld [vmem:[#allocation2 + $0x10] sm:$0xff]
        %v1283 = vld [vmem:[#allocation2 + $0x18] sm:$0xff]
        %v1284 = vld [vmem:[#allocation2 + $0x20] sm:$0xff]
        %v1285 = vld [vmem:[#allocation2 + $0x28] sm:$0xff]
        %v1286 = vld [vmem:[#allocation2 + $0x30] sm:$0xff]
        %v1287 = vld [vmem:[#allocation2 + $0x38] sm:$0xff]
        %v1288 = vld [vmem:[#allocation2 + $0x40] sm:$0xff]
        %v1289 = vld [vmem:[#allocation2 + $0x48] sm:$0xff]
        %v1290 = vld [vmem:[#allocation2 + $0x50] sm:$0xff]
        %v1291 = vld [vmem:[#allocation2 + $0x58] sm:$0xff]
        %v1292 = vld [vmem:[#allocation2 + $0x60] sm:$0xff]
        %v1293 = vld [vmem:[#allocation2 + $0x68] sm:$0xff]
        %v1294 = vld [vmem:[#allocation2 + $0x70] sm:$0xff]
        %v1295 = vld [vmem:[#allocation2 + $0x78] sm:$0xff]
        %v1296 = vld [vmem:[%s4] sm:$0xff]
        %v1297 = vld [vmem:[%s4 + $0x8] sm:$0xff]
        %v1298 = vld [vmem:[%s4 + $0x10] sm:$0xff]
        %v1299 = vld [vmem:[%s4 + $0x18] sm:$0xff]
        %v1300 = vld [vmem:[%s4 + $0x20] sm:$0xff]
        %v1301 = vld [vmem:[%s4 + $0x28] sm:$0xff]
        %v1302 = vld [vmem:[%s4 + $0x30] sm:$0xff]
        %v1303 = vld [vmem:[%s4 + $0x38] sm:$0xff]
        %v1304 = vld [vmem:[%s4 + $0x40] sm:$0xff]
        %v1305 = vld [vmem:[%s4 + $0x48] sm:$0xff]
        %v1306 = vld [vmem:[%s4 + $0x50] sm:$0xff]
        %v1307 = vld [vmem:[%s4 + $0x58] sm:$0xff]
        %v1308 = vld [vmem:[%s4 + $0x60] sm:$0xff]
        %v1309 = vld [vmem:[%s4 + $0x68] sm:$0xff]
        %v1310 = vld [vmem:[%s4 + $0x70] sm:$0xff]
        %v1311 = vld [vmem:[%s4 + $0x78] sm:$0xff]
        %1313 = vset.pattern.permute.xlu0 0
        %1314 = vperm.xlu0 %1313, %v1296
        %v1315 = vpop.permute.xlu0 %1314
        %1318 = vset.pattern.permute.xlu0 0
        %1319 = vperm.xlu0 %1318, %v1297
        %v1320 = vpop.permute.xlu0 %1319
        %1323 = vset.pattern.permute.xlu0 0
        %1324 = vperm.xlu0 %1323, %v1298
        %v1325 = vpop.permute.xlu0 %1324
        %1328 = vset.pattern.permute.xlu0 0
        %1329 = vperm.xlu0 %1328, %v1299
        %v1330 = vpop.permute.xlu0 %1329
        %1333 = vset.pattern.permute.xlu0 0
        %1334 = vperm.xlu0 %1333, %v1300
        %v1335 = vpop.permute.xlu0 %1334
        %1338 = vset.pattern.permute.xlu0 0
        %1339 = vperm.xlu0 %1338, %v1301
        %v1340 = vpop.permute.xlu0 %1339
        %1343 = vset.pattern.permute.xlu0 0
        %1344 = vperm.xlu0 %1343, %v1302
        %v1345 = vpop.permute.xlu0 %1344
        %1348 = vset.pattern.permute.xlu0 0
        %1349 = vperm.xlu0 %1348, %v1303
        %v1350 = vpop.permute.xlu0 %1349
        %1353 = vset.pattern.permute.xlu0 0
        %1354 = vperm.xlu0 %1353, %v1304
        %v1355 = vpop.permute.xlu0 %1354
        %1358 = vset.pattern.permute.xlu0 0
        %1359 = vperm.xlu0 %1358, %v1305
        %v1360 = vpop.permute.xlu0 %1359
        %1363 = vset.pattern.permute.xlu0 0
        %1364 = vperm.xlu0 %1363, %v1306
        %v1365 = vpop.permute.xlu0 %1364
        %1368 = vset.pattern.permute.xlu0 0
        %1369 = vperm.xlu0 %1368, %v1307
        %v1370 = vpop.permute.xlu0 %1369
        %1373 = vset.pattern.permute.xlu0 0
        %1374 = vperm.xlu0 %1373, %v1308
        %v1375 = vpop.permute.xlu0 %1374
        %1378 = vset.pattern.permute.xlu0 0
        %1379 = vperm.xlu0 %1378, %v1309
        %v1380 = vpop.permute.xlu0 %1379
        %1383 = vset.pattern.permute.xlu0 0
        %1384 = vperm.xlu0 %1383, %v1310
        %v1385 = vpop.permute.xlu0 %1384
        %1388 = vset.pattern.permute.xlu0 0
        %1389 = vperm.xlu0 %1388, %v1311
        %v1390 = vpop.permute.xlu0 %1389
        %v1392 = vmul.f32 %v1280, %v1315
        %v1393 = vmul.f32 %v1281, %v1320
        %v1394 = vmul.f32 %v1282, %v1325
        %v1395 = vmul.f32 %v1283, %v1330
        %v1396 = vmul.f32 %v1284, %v1335
        %v1397 = vmul.f32 %v1285, %v1340
        %v1398 = vmul.f32 %v1286, %v1345
        %v1399 = vmul.f32 %v1287, %v1350
        %v1400 = vmul.f32 %v1288, %v1355
        %v1401 = vmul.f32 %v1289, %v1360
        %v1402 = vmul.f32 %v1290, %v1365
        %v1403 = vmul.f32 %v1291, %v1370
        %v1404 = vmul.f32 %v1292, %v1375
        %v1405 = vmul.f32 %v1293, %v1380
        %v1406 = vmul.f32 %v1294, %v1385
        %v1407 = vmul.f32 %v1295, %v1390
        %v1408 = vpack.c.bf16 %v1393, %v1392
        %v1409 = vpack.c.bf16 %v1395, %v1394
        %v1410 = vpack.c.bf16 %v1397, %v1396
        %v1411 = vpack.c.bf16 %v1399, %v1398
        %v1412 = vpack.c.bf16 %v1401, %v1400
        %v1413 = vpack.c.bf16 %v1403, %v1402
        %v1414 = vpack.c.bf16 %v1405, %v1404
        %v1415 = vpack.c.bf16 %v1407, %v1406
        %v1416 = vld [vmem:[%s0] sm:$0xf]
        %v1417 = vld [vmem:[%s0 + $0x4] sm:$0xf]
        %v1418 = vld [vmem:[%s0 + $0x8] sm:$0xf]
        %v1419 = vld [vmem:[%s0 + $0xc] sm:$0xf]
        %v1420 = vld [vmem:[%s0 + $0x10] sm:$0xf]
        %v1421 = vld [vmem:[%s0 + $0x14] sm:$0xf]
        %v1422 = vld [vmem:[%s0 + $0x18] sm:$0xf]
        %v1423 = vld [vmem:[%s0 + $0x1c] sm:$0xf]
        %v1424 = vld [vmem:[%s0 + $0x20] sm:$0xf]
        %v1425 = vld [vmem:[%s0 + $0x24] sm:$0xf]
        %v1426 = vld [vmem:[%s0 + $0x28] sm:$0xf]
        %v1427 = vld [vmem:[%s0 + $0x2c] sm:$0xf]
        %v1428 = vld [vmem:[%s0 + $0x30] sm:$0xf]
        %v1429 = vld [vmem:[%s0 + $0x34] sm:$0xf]
        %v1430 = vld [vmem:[%s0 + $0x38] sm:$0xf]
        %v1431 = vld [vmem:[%s0 + $0x3c] sm:$0xf]
        %v1432 = vld [vmem:[%s7] sm:$0xf]
        %v1433 = vld [vmem:[%s7 + $0x4] sm:$0xf]
        %v1434 = vld [vmem:[%s7 + $0x8] sm:$0xf]
        %v1435 = vld [vmem:[%s7 + $0xc] sm:$0xf]
        %v1436 = vld [vmem:[%s7 + $0x10] sm:$0xf]
        %v1437 = vld [vmem:[%s7 + $0x14] sm:$0xf]
        %v1438 = vld [vmem:[%s7 + $0x18] sm:$0xf]
        %v1439 = vld [vmem:[%s7 + $0x1c] sm:$0xf]
        %v1440 = vld [vmem:[%s7 + $0x20] sm:$0xf]
        %v1441 = vld [vmem:[%s7 + $0x24] sm:$0xf]
        %v1442 = vld [vmem:[%s7 + $0x28] sm:$0xf]
        %v1443 = vld [vmem:[%s7 + $0x2c] sm:$0xf]
        %v1444 = vld [vmem:[%s7 + $0x30] sm:$0xf]
        %v1445 = vld [vmem:[%s7 + $0x34] sm:$0xf]
        %v1446 = vld [vmem:[%s7 + $0x38] sm:$0xf]
        %v1447 = vld [vmem:[%s7 + $0x3c] sm:$0xf]
        %v1448 = vld [vmem:[%s7 + $0x40] sm:$0xf]
        %v1449 = vld [vmem:[%s7 + $0x44] sm:$0xf]
        %v1450 = vld [vmem:[%s7 + $0x48] sm:$0xf]
        %v1451 = vld [vmem:[%s7 + $0x4c] sm:$0xf]
        %v1452 = vld [vmem:[%s7 + $0x50] sm:$0xf]
        %v1453 = vld [vmem:[%s7 + $0x54] sm:$0xf]
        %v1454 = vld [vmem:[%s7 + $0x58] sm:$0xf]
        %v1455 = vld [vmem:[%s7 + $0x5c] sm:$0xf]
        %v1456 = vld [vmem:[%s7 + $0x60] sm:$0xf]
        %v1457 = vld [vmem:[%s7 + $0x64] sm:$0xf]
        %v1458 = vld [vmem:[%s7 + $0x68] sm:$0xf]
        %v1459 = vld [vmem:[%s7 + $0x6c] sm:$0xf]
        %v1460 = vld [vmem:[%s7 + $0x70] sm:$0xf]
        %v1461 = vld [vmem:[%s7 + $0x74] sm:$0xf]
        %v1462 = vld [vmem:[%s7 + $0x78] sm:$0xf]
        %v1463 = vld [vmem:[%s7 + $0x7c] sm:$0xf]
        %v1480 = vunpack.c.l.b16 %v1448
        %v1481 = vunpack.c.l.b16 %v1449
        %v1482 = vunpack.c.l.b16 %v1450
        %v1483 = vunpack.c.l.b16 %v1451
        %v1484 = vunpack.c.l.b16 %v1452
        %v1485 = vunpack.c.l.b16 %v1453
        %v1486 = vunpack.c.l.b16 %v1454
        %v1487 = vunpack.c.l.b16 %v1455
        %v1488 = vunpack.c.l.b16 %v1456
        %v1489 = vunpack.c.l.b16 %v1457
        %v1490 = vunpack.c.l.b16 %v1458
        %v1491 = vunpack.c.l.b16 %v1459
        %v1492 = vunpack.c.l.b16 %v1460
        %v1493 = vunpack.c.l.b16 %v1461
        %v1494 = vunpack.c.l.b16 %v1462
        %v1495 = vunpack.c.l.b16 %v1463
        %v1496 = vpack.c.b16 %v1481, %v1480
        %v1497 = vpack.c.b16 %v1483, %v1482
        %v1498 = vpack.c.b16 %v1485, %v1484
        %v1499 = vpack.c.b16 %v1487, %v1486
        %v1500 = vpack.c.b16 %v1489, %v1488
        %v1501 = vpack.c.b16 %v1491, %v1490
        %v1502 = vpack.c.b16 %v1493, %v1492
        %v1503 = vpack.c.b16 %v1495, %v1494
        %1512 = vmatprep.subr.bf16.mxu0 0
        %1513 = vmatpush1.bf16.msra.mxu0 %v1496
        %1514 = vmatprep.subr.bf16.mxu0 0
        %1515 = vmatpush1.bf16.msra.mxu0 %v1497
        %1516 = vmatprep.subr.bf16.mxu0 0
        %1517 = vmatpush1.bf16.msra.mxu0 %v1498
        %1518 = vmatprep.subr.bf16.mxu0 0
        %1519 = vmatpush1.bf16.msra.mxu0 %v1499
        %1520 = vmatprep.subr.bf16.mxu0 0
        %1521 = vmatpush1.bf16.msra.mxu0 %v1500
        %1522 = vmatprep.subr.bf16.mxu0 0
        %1523 = vmatpush1.bf16.msra.mxu0 %v1501
        %1524 = vmatprep.subr.bf16.mxu0 0
        %1525 = vmatpush1.bf16.msra.mxu0 %v1502
        %1526 = vmatprep.subr.bf16.mxu0 0
        %1527 = vmatpush1.bf16.msra.mxu0 %v1503
        %1528 = vmatprep.subr.bf16.mxu0 0
        %1529 = vmatpush1.bf16.msra.mxu0 0
        %1530 = vmatprep.subr.bf16.mxu0 0
        %1531 = vmatpush1.bf16.msra.mxu0 0
        %1532 = vmatprep.subr.bf16.mxu0 0
        %1533 = vmatpush1.bf16.msra.mxu0 0
        %1534 = vmatprep.subr.bf16.mxu0 0
        %1535 = vmatpush1.bf16.msra.mxu0 0
        %1536 = vmatprep.subr.bf16.mxu0 0
        %1537 = vmatpush1.bf16.msra.mxu0 0
        %1538 = vmatprep.subr.bf16.mxu0 0
        %1539 = vmatpush1.bf16.msra.mxu0 0
        %1540 = vmatprep.subr.bf16.mxu0 0
        %1541 = vmatpush1.bf16.msra.mxu0 0
        %1542 = vmatprep.subr.bf16.mxu0 0
        %1543 = vmatpush1.bf16.msra.mxu0 0
        %1544 = vmatprep.mubr.bf16.mxu0 0
        %1545 = vmatmul.mubr.bf16.gmra.mrb[0].mxu0 %v1408
        %v1546 = vpop.f32.mrb[0].mxu0
        %v1547 = vadd.f32 0.0, %v1546
        %v1548 = vpop.f32.mrb[0].mxu0
        %v1549 = vpop.f32.mrb[0].mxu0
        %v1550 = vadd.f32 0.0, %v1549
        %v1551 = vpop.f32.mrb[0].mxu0
        %1552 = vmatprep.mubr.bf16.mxu0 0
        %1553 = vmatmul.mubr.bf16.gmra.mrb[0].mxu0 %v1409
        %v1554 = vpop.f32.mrb[0].mxu0
        %v1555 = vadd.f32 0.0, %v1554
        %v1556 = vpop.f32.mrb[0].mxu0
        %v1557 = vpop.f32.mrb[0].mxu0
        %v1558 = vadd.f32 0.0, %v1557
        %v1559 = vpop.f32.mrb[0].mxu0
        %1560 = vmatprep.mubr.bf16.mxu0 0
        %1561 = vmatmul.mubr.bf16.gmra.mrb[0].mxu0 %v1410
        %v1562 = vpop.f32.mrb[0].mxu0
        %v1563 = vadd.f32 0.0, %v1562
        %v1564 = vpop.f32.mrb[0].mxu0
        %v1565 = vpop.f32.mrb[0].mxu0
        %v1566 = vadd.f32 0.0, %v1565
        %v1567 = vpop.f32.mrb[0].mxu0
        %1568 = vmatprep.mubr.bf16.mxu0 0
        %1569 = vmatmul.mubr.bf16.gmra.mrb[0].mxu0 %v1411
        %v1570 = vpop.f32.mrb[0].mxu0
        %v1571 = vadd.f32 0.0, %v1570
        %v1572 = vpop.f32.mrb[0].mxu0
        %v1573 = vpop.f32.mrb[0].mxu0
        %v1574 = vadd.f32 0.0, %v1573
        %v1575 = vpop.f32.mrb[0].mxu0
        %1576 = vmatprep.mubr.bf16.mxu0 0
        %1577 = vmatmul.mubr.bf16.gmra.mrb[0].mxu0 %v1412
        %v1578 = vpop.f32.mrb[0].mxu0
        %v1579 = vadd.f32 0.0, %v1578
        %v1580 = vpop.f32.mrb[0].mxu0
        %v1581 = vpop.f32.mrb[0].mxu0
        %v1582 = vadd.f32 0.0, %v1581
        %v1583 = vpop.f32.mrb[0].mxu0
        %1584 = vmatprep.mubr.bf16.mxu0 0
        %1585 = vmatmul.mubr.bf16.gmra.mrb[0].mxu0 %v1413
        %v1586 = vpop.f32.mrb[0].mxu0
        %v1587 = vadd.f32 0.0, %v1586
        %v1588 = vpop.f32.mrb[0].mxu0
        %v1589 = vpop.f32.mrb[0].mxu0
        %v1590 = vadd.f32 0.0, %v1589
        %v1591 = vpop.f32.mrb[0].mxu0
        %1592 = vmatprep.mubr.bf16.mxu0 0
        %1593 = vmatmul.mubr.bf16.gmra.mrb[0].mxu0 %v1414
        %v1594 = vpop.f32.mrb[0].mxu0
        %v1595 = vadd.f32 0.0, %v1594
        %v1596 = vpop.f32.mrb[0].mxu0
        %v1597 = vpop.f32.mrb[0].mxu0
        %v1598 = vadd.f32 0.0, %v1597
        %v1599 = vpop.f32.mrb[0].mxu0
        %1600 = vmatprep.mubr.bf16.mxu0 0
        %1601 = vmatmul.mubr.bf16.gmra.mrb[0].mxu0 %v1415
        %v1602 = vpop.f32.mrb[0].mxu0
        %v1603 = vadd.f32 0.0, %v1602
        %v1604 = vpop.f32.mrb[0].mxu0
        %v1605 = vpop.f32.mrb[0].mxu0
        %v1606 = vadd.f32 0.0, %v1605
        %v1607 = vpop.f32.mrb[0].mxu0
        %1608 = vdwg.mxu0
        %v1625 = vunpack.c.l.b16 %v1416
        %v1626 = vunpack.c.l.b16 %v1417
        %v1627 = vunpack.c.l.b16 %v1418
        %v1628 = vunpack.c.l.b16 %v1419
        %v1629 = vunpack.c.l.b16 %v1420
        %v1630 = vunpack.c.l.b16 %v1421
        %v1631 = vunpack.c.l.b16 %v1422
        %v1632 = vunpack.c.l.b16 %v1423
        %v1633 = vunpack.c.l.b16 %v1424
        %v1634 = vunpack.c.l.b16 %v1425
        %v1635 = vunpack.c.l.b16 %v1426
        %v1636 = vunpack.c.l.b16 %v1427
        %v1637 = vunpack.c.l.b16 %v1428
        %v1638 = vunpack.c.l.b16 %v1429
        %v1639 = vunpack.c.l.b16 %v1430
        %v1640 = vunpack.c.l.b16 %v1431
        %v1641 = vpack.c.b16 %v1626, %v1625
        %v1642 = vpack.c.b16 %v1628, %v1627
        %v1643 = vpack.c.b16 %v1630, %v1629
        %v1644 = vpack.c.b16 %v1632, %v1631
        %v1645 = vpack.c.b16 %v1634, %v1633
        %v1646 = vpack.c.b16 %v1636, %v1635
        %v1647 = vpack.c.b16 %v1638, %v1637
        %v1648 = vpack.c.b16 %v1640, %v1639
        %v1673 = vunpack.c.l.b16 %v1432
        %v1674 = vunpack.c.l.b16 %v1433
        %v1675 = vunpack.c.l.b16 %v1434
        %v1676 = vunpack.c.l.b16 %v1435
        %v1677 = vunpack.c.l.b16 %v1436
        %v1678 = vunpack.c.l.b16 %v1437
        %v1679 = vunpack.c.l.b16 %v1438
        %v1680 = vunpack.c.l.b16 %v1439
        %v1681 = vunpack.c.l.b16 %v1440
        %v1682 = vunpack.c.l.b16 %v1441
        %v1683 = vunpack.c.l.b16 %v1442
        %v1684 = vunpack.c.l.b16 %v1443
        %v1685 = vunpack.c.l.b16 %v1444
        %v1686 = vunpack.c.l.b16 %v1445
        %v1687 = vunpack.c.l.b16 %v1446
        %v1688 = vunpack.c.l.b16 %v1447
        %v1689 = vpack.c.b16 %v1674, %v1673
        %v1690 = vpack.c.b16 %v1676, %v1675
        %v1691 = vpack.c.b16 %v1678, %v1677
        %v1692 = vpack.c.b16 %v1680, %v1679
        %v1693 = vpack.c.b16 %v1682, %v1681
        %v1694 = vpack.c.b16 %v1684, %v1683
        %v1695 = vpack.c.b16 %v1686, %v1685
        %v1696 = vpack.c.b16 %v1688, %v1687
        %1705 = vmatprep.subr.bf16.mxu0 0
        %1706 = vmatpush1.bf16.msra.mxu0 %v1689
        %1707 = vmatprep.subr.bf16.mxu0 0
        %1708 = vmatpush1.bf16.msra.mxu0 %v1690
        %1709 = vmatprep.subr.bf16.mxu0 0
        %1710 = vmatpush1.bf16.msra.mxu0 %v1691
        %1711 = vmatprep.subr.bf16.mxu0 0
        %1712 = vmatpush1.bf16.msra.mxu0 %v1692
        %1713 = vmatprep.subr.bf16.mxu0 0
        %1714 = vmatpush1.bf16.msra.mxu0 %v1693
        %1715 = vmatprep.subr.bf16.mxu0 0
        %1716 = vmatpush1.bf16.msra.mxu0 %v1694
        %1717 = vmatprep.subr.bf16.mxu0 0
        %1718 = vmatpush1.bf16.msra.mxu0 %v1695
        %1719 = vmatprep.subr.bf16.mxu0 0
        %1720 = vmatpush1.bf16.msra.mxu0 %v1696
        %1721 = vmatprep.subr.bf16.mxu0 0
        %1722 = vmatpush1.bf16.msra.mxu0 0
        %1723 = vmatprep.subr.bf16.mxu0 0
        %1724 = vmatpush1.bf16.msra.mxu0 0
        %1725 = vmatprep.subr.bf16.mxu0 0
        %1726 = vmatpush1.bf16.msra.mxu0 0
        %1727 = vmatprep.subr.bf16.mxu0 0
        %1728 = vmatpush1.bf16.msra.mxu0 0
        %1729 = vmatprep.subr.bf16.mxu0 0
        %1730 = vmatpush1.bf16.msra.mxu0 0
        %1731 = vmatprep.subr.bf16.mxu0 0
        %1732 = vmatpush1.bf16.msra.mxu0 0
        %1733 = vmatprep.subr.bf16.mxu0 0
        %1734 = vmatpush1.bf16.msra.mxu0 0
        %1735 = vmatprep.subr.bf16.mxu0 0
        %1736 = vmatpush1.bf16.msra.mxu0 0
        %1737 = vmatprep.mubr.bf16.mxu0 0
        %1738 = vmatmul.mubr.bf16.gmra.mrb[0].mxu0 %v1641
        %v1739 = vpop.f32.mrb[0].mxu0
        %v1740 = vadd.f32 %v1547, %v1739
        %v1741 = vpop.f32.mrb[0].mxu0
        %v1742 = vpop.f32.mrb[0].mxu0
        %v1743 = vadd.f32 %v1550, %v1742
        %v1744 = vpop.f32.mrb[0].mxu0
        %1745 = vmatprep.mubr.bf16.mxu0 0
        %1746 = vmatmul.mubr.bf16.gmra.mrb[0].mxu0 %v1642
        %v1747 = vpop.f32.mrb[0].mxu0
        %v1748 = vadd.f32 %v1555, %v1747
        %v1749 = vpop.f32.mrb[0].mxu0
        %v1750 = vpop.f32.mrb[0].mxu0
        %v1751 = vadd.f32 %v1558, %v1750
        %v1752 = vpop.f32.mrb[0].mxu0
        %1753 = vmatprep.mubr.bf16.mxu0 0
        %1754 = vmatmul.mubr.bf16.gmra.mrb[0].mxu0 %v1643
        %v1755 = vpop.f32.mrb[0].mxu0
        %v1756 = vadd.f32 %v1563, %v1755
        %v1757 = vpop.f32.mrb[0].mxu0
        %v1758 = vpop.f32.mrb[0].mxu0
        %v1759 = vadd.f32 %v1566, %v1758
        %v1760 = vpop.f32.mrb[0].mxu0
        %1761 = vmatprep.mubr.bf16.mxu0 0
        %1762 = vmatmul.mubr.bf16.gmra.mrb[0].mxu0 %v1644
        %v1763 = vpop.f32.mrb[0].mxu0
        %v1764 = vadd.f32 %v1571, %v1763
        %v1765 = vpop.f32.mrb[0].mxu0
        %v1766 = vpop.f32.mrb[0].mxu0
        %v1767 = vadd.f32 %v1574, %v1766
        %v1768 = vpop.f32.mrb[0].mxu0
        %1769 = vmatprep.mubr.bf16.mxu0 0
        %1770 = vmatmul.mubr.bf16.gmra.mrb[0].mxu0 %v1645
        %v1771 = vpop.f32.mrb[0].mxu0
        %v1772 = vadd.f32 %v1579, %v1771
        %v1773 = vpop.f32.mrb[0].mxu0
        %v1774 = vpop.f32.mrb[0].mxu0
        %v1775 = vadd.f32 %v1582, %v1774
        %v1776 = vpop.f32.mrb[0].mxu0
        %1777 = vmatprep.mubr.bf16.mxu0 0
        %1778 = vmatmul.mubr.bf16.gmra.mrb[0].mxu0 %v1646
        %v1779 = vpop.f32.mrb[0].mxu0
        %v1780 = vadd.f32 %v1587, %v1779
        %v1781 = vpop.f32.mrb[0].mxu0
        %v1782 = vpop.f32.mrb[0].mxu0
        %v1783 = vadd.f32 %v1590, %v1782
        %v1784 = vpop.f32.mrb[0].mxu0
        %1785 = vmatprep.mubr.bf16.mxu0 0
        %1786 = vmatmul.mubr.bf16.gmra.mrb[0].mxu0 %v1647
        %v1787 = vpop.f32.mrb[0].mxu0
        %v1788 = vadd.f32 %v1595, %v1787
        %v1789 = vpop.f32.mrb[0].mxu0
        %v1790 = vpop.f32.mrb[0].mxu0
        %v1791 = vadd.f32 %v1598, %v1790
        %v1792 = vpop.f32.mrb[0].mxu0
        %1793 = vmatprep.mubr.bf16.mxu0 0
        %1794 = vmatmul.mubr.bf16.gmra.mrb[0].mxu0 %v1648
        %v1795 = vpop.f32.mrb[0].mxu0
        %v1796 = vadd.f32 %v1603, %v1795
        %v1797 = vpop.f32.mrb[0].mxu0
        %v1798 = vpop.f32.mrb[0].mxu0
        %v1799 = vadd.f32 %v1606, %v1798
        %v1800 = vpop.f32.mrb[0].mxu0
        %1801 = vdwg.mxu0
        %v1802 = vld [vmem:[%s8] sm:$0x1]
        %v1804 = vlaneseq
        %v1805 = vshrl.u32 %v1804, 7
        %v1806 = vsub.s32 0, %v1805
        %v1807 = vrot.slane %v1802, %v1806
        %v1809 = vadd.f32 %v1740, %v1807
        %v1810 = vadd.f32 %v1743, %v1807
        %v1811 = vadd.f32 %v1748, %v1807
        %v1812 = vadd.f32 %v1751, %v1807
        %v1813 = vadd.f32 %v1756, %v1807
        %v1814 = vadd.f32 %v1759, %v1807
        %v1815 = vadd.f32 %v1764, %v1807
        %v1816 = vadd.f32 %v1767, %v1807
        %v1817 = vadd.f32 %v1772, %v1807
        %v1818 = vadd.f32 %v1775, %v1807
        %v1819 = vadd.f32 %v1780, %v1807
        %v1820 = vadd.f32 %v1783, %v1807
        %v1821 = vadd.f32 %v1788, %v1807
        %v1822 = vadd.f32 %v1791, %v1807
        %v1823 = vadd.f32 %v1796, %v1807
        %v1824 = vadd.f32 %v1799, %v1807
        %v1825 = vmax.f32 %v1809, 0.0
        %v1826 = vmax.f32 %v1810, 0.0
        %v1827 = vmax.f32 %v1811, 0.0
        %v1828 = vmax.f32 %v1812, 0.0
        %v1829 = vmax.f32 %v1813, 0.0
        %v1830 = vmax.f32 %v1814, 0.0
        %v1831 = vmax.f32 %v1815, 0.0
        %v1832 = vmax.f32 %v1816, 0.0
        %v1833 = vmax.f32 %v1817, 0.0
        %v1834 = vmax.f32 %v1818, 0.0
        %v1835 = vmax.f32 %v1819, 0.0
        %v1836 = vmax.f32 %v1820, 0.0
        %v1837 = vmax.f32 %v1821, 0.0
        %v1838 = vmax.f32 %v1822, 0.0
        %v1839 = vmax.f32 %v1823, 0.0
        %v1840 = vmax.f32 %v1824, 0.0
        %v1841 = vpack.c.bf16 %v1826, %v1825
        %v1842 = vpack.c.bf16 %v1828, %v1827
        %v1843 = vpack.c.bf16 %v1830, %v1829
        %v1844 = vpack.c.bf16 %v1832, %v1831
        %v1845 = vpack.c.bf16 %v1834, %v1833
        %v1846 = vpack.c.bf16 %v1836, %v1835
        %v1847 = vpack.c.bf16 %v1838, %v1837
        %v1848 = vpack.c.bf16 %v1840, %v1839
        %v1857 = vunpack.c.l.b16 %v1841
        %v1858 = vunpack.c.h.b16 %v1841
        %v1859 = vunpack.c.l.b16 %v1842
        %v1860 = vunpack.c.h.b16 %v1842
        %v1861 = vunpack.c.l.b16 %v1843
        %v1862 = vunpack.c.h.b16 %v1843
        %v1863 = vunpack.c.l.b16 %v1844
        %v1864 = vunpack.c.h.b16 %v1844
        %v1865 = vunpack.c.l.b16 %v1845
        %v1866 = vunpack.c.h.b16 %v1845
        %v1867 = vunpack.c.l.b16 %v1846
        %v1868 = vunpack.c.h.b16 %v1846
        %v1869 = vunpack.c.l.b16 %v1847
        %v1870 = vunpack.c.h.b16 %v1847
        %v1871 = vunpack.c.l.b16 %v1848
        %v1872 = vunpack.c.h.b16 %v1848
        %v1873 = vpack.c.b16 %v1857, %v1857
        %v1874 = vpack.c.b16 %v1858, %v1858
        %v1875 = vpack.c.b16 %v1859, %v1859
        %v1876 = vpack.c.b16 %v1860, %v1860
        %v1877 = vpack.c.b16 %v1861, %v1861
        %v1878 = vpack.c.b16 %v1862, %v1862
        %v1879 = vpack.c.b16 %v1863, %v1863
        %v1880 = vpack.c.b16 %v1864, %v1864
        %v1881 = vpack.c.b16 %v1865, %v1865
        %v1882 = vpack.c.b16 %v1866, %v1866
        %v1883 = vpack.c.b16 %v1867, %v1867
        %v1884 = vpack.c.b16 %v1868, %v1868
        %v1885 = vpack.c.b16 %v1869, %v1869
        %v1886 = vpack.c.b16 %v1870, %v1870
        %v1887 = vpack.c.b16 %v1871, %v1871
        %v1888 = vpack.c.b16 %v1872, %v1872
        %1905 = vst [vmem:[%s9] sm:$0xf] %v1873
        %1906 = vst [vmem:[%s9 + $0x4] sm:$0xf] %v1874
        %1907 = vst [vmem:[%s9 + $0x8] sm:$0xf] %v1875
        %1908 = vst [vmem:[%s9 + $0xc] sm:$0xf] %v1876
        %1909 = vst [vmem:[%s9 + $0x10] sm:$0xf] %v1877
        %1910 = vst [vmem:[%s9 + $0x14] sm:$0xf] %v1878
        %1911 = vst [vmem:[%s9 + $0x18] sm:$0xf] %v1879
        %1912 = vst [vmem:[%s9 + $0x1c] sm:$0xf] %v1880
        %1913 = vst [vmem:[%s9 + $0x20] sm:$0xf] %v1881
        %1914 = vst [vmem:[%s9 + $0x24] sm:$0xf] %v1882
        %1915 = vst [vmem:[%s9 + $0x28] sm:$0xf] %v1883
        %1916 = vst [vmem:[%s9 + $0x2c] sm:$0xf] %v1884
        %1917 = vst [vmem:[%s9 + $0x30] sm:$0xf] %v1885
        %1918 = vst [vmem:[%s9 + $0x34] sm:$0xf] %v1886
        %1919 = vst [vmem:[%s9 + $0x38] sm:$0xf] %v1887
        %1920 = vst [vmem:[%s9 + $0x3c] sm:$0xf] %v1888
      $region64: #{_lambda_.4} parent=55 // pred_fallthru
        _
      // Predicated region
      $region65: #{_lambda_.4} parent=55 // pred_check
        %p1921 = pneg %p237
      $region66: #{_lambda_.4} parent=55 // pred_check_branch
        %1923 = sbr.rel (%p1921) target = $region68
      $region67: #{_lambda_.4} parent=55 // pred_region
        _
      $region68: #{_lambda_.4} parent=55 // pred_fallthru
        _
      // Predicated region
      $region69: #{_lambda_.4} parent=55 // pred_check
        %p1924 = pneg %p237
      $region70: #{_lambda_.4} parent=55 // pred_check_branch
        %1926 = sbr.rel (%p1924) target = $region72
      $region71: #{_lambda_.4} parent=55 // pred_region
        _
      $region72: #{_lambda_.4} parent=55 // pred_fallthru
        _
    $region56: #{_lambda_.4} parent=5 // pred_fallthru
      _
    %p1927 = scmp.le.s32.totalorder 2, %s15
    // Predicated region
    $region73: #{_lambda_.4} parent=5 // pred_check
      %p1928 = pneg %p1927
    $region74: #{_lambda_.4} parent=5 // pred_check_branch
      %1930 = sbr.rel (%p1928) target = $region76
    $region75: #{_lambda_.4} parent=5 // pred_region
      %s1931 = ssub.s32 %s15, 2
    $region76: #{_lambda_.4} parent=5 // pred_fallthru
      _
  $region6: #{_lambda_.4} parent=0 // loop_footer
    %s19 = sadd.s32 1, %s15
  $region7: #{_lambda_.4} parent=0 // loop_footer_branch
    %14 = sbr.rel target = $region3
  $region8: #{_lambda_.4} parent=0 // loop_exit
    _

</llo_original>
